<compile_context>
chip_gen: v6e
topology: v6e:2x2x1
jax: 0.10.0
libtpu: 0.0.40
codegen_flags: <defaults>
</compile_context>

<pallas_src>
import math

import jax
import jax.numpy as jnp
from jax.experimental import pallas as pl
from jax.experimental.pallas import tpu as pltpu


def _layer_norm(x, gamma, beta, eps=1e-5):
    # f32 reductions; rsqrt lands on the EUP.
    mu = jnp.mean(x, axis=-1, keepdims=True)
    var = jnp.mean((x - mu) ** 2, axis=-1, keepdims=True)
    return (x - mu) * jax.lax.rsqrt(var + eps) * gamma + beta


def _make_block_kernel(nhead, emb_head, compute_dtype):
    inv_scale = 1.0 / math.sqrt(emb_head)

    def kernel(xh_ref, yh_ref, y_ref,
               wq_ref, bq_ref, wk_ref, bk_ref, wv_ref, bv_ref,
               wo_ref, bo_ref, g_att_ref, b_att_ref,
               w1_ref, b1_ref, g1_ref, be1_ref,
               w2_ref, b2_ref, g2_ref, be2_ref,
               w3_ref, b3_ref, g_ff_ref, b_ff_ref,
               o_ref):
        xh = xh_ref[0]          # (H, S, dh) compute dtype -- Q/K source (mQ = mK = x)
        yh = yh_ref[0]          # (H, S, dh) compute dtype -- V source   (mV = y)
        y = y_ref[0]            # (S, E)     f32           -- attention residual (+ mV)

        # ---- multi-head Q/K/V projections: one batched einsum each (no head loop) ----
        q = jnp.einsum('hsd,hde->hse', xh, wq_ref[...],
                       preferred_element_type=jnp.float32) + bq_ref[...]
        k = jnp.einsum('hsd,hde->hse', xh, wk_ref[...],
                       preferred_element_type=jnp.float32) + bk_ref[...]
        v = jnp.einsum('hsd,hde->hse', yh, wv_ref[...],
                       preferred_element_type=jnp.float32) + bv_ref[...]

        # ---- scaled dot-product attention, contracting last dims (no explicit .T) ----
        # TODO(synk): for large S, tile the KV axis (online softmax) instead of
        # materializing the full (H, S, S) score tensor.
        s = jnp.einsum('hqd,hkd->hqk',
                       q.astype(compute_dtype), k.astype(compute_dtype),
                       preferred_element_type=jnp.float32) * inv_scale
        s = s - jnp.max(s, axis=-1, keepdims=True)
        e = jnp.exp(s)
        p = e * pl.reciprocal(jnp.sum(e, axis=-1, keepdims=True), approx=True)

        ctx = jnp.einsum('hqk,hkd->hqd',
                         p.astype(compute_dtype), v.astype(compute_dtype),
                         preferred_element_type=jnp.float32)          # (H, S, dh)

        # concat(heads) @ Wo^T  ==  sum_h head_h @ Wo^T[h*dh:(h+1)*dh, :]
        proj = jnp.einsum('hqd,hde->hqe',
                          ctx.astype(compute_dtype), wo_ref[...],
                          preferred_element_type=jnp.float32)         # (H, S, E)
        attn = jnp.sum(proj, axis=0) + bo_ref[...]                    # (S, E)

        a1 = _layer_norm(attn + y, g_att_ref[...], b_att_ref[...])

        # ---- FFN: Linear -> LN -> ReLU -> Linear -> LN -> ReLU -> Linear ----
        # TODO(synk): Dropout(p=1e-7) treated as identity (eval mode).
        h1 = jnp.dot(a1.astype(compute_dtype), w1_ref[...],
                     preferred_element_type=jnp.float32) + b1_ref[...]
        h1 = jnp.maximum(_layer_norm(h1, g1_ref[...], be1_ref[...]), 0.0)
        h2 = jnp.dot(h1.astype(compute_dtype), w2_ref[...],
                     preferred_element_type=jnp.float32) + b2_ref[...]
        h2 = jnp.maximum(_layer_norm(h2, g2_ref[...], be2_ref[...]), 0.0)
        h3 = jnp.dot(h2.astype(compute_dtype), w3_ref[...],
                     preferred_element_type=jnp.float32) + b3_ref[...]

        o_ref[0] = _layer_norm(h3 + a1, g_ff_ref[...], b_ff_ref[...])

    return kernel


_PARAM_ORDER = ("wqT_h", "bq", "wkT_h", "bk", "wvT_h", "bv", "woT_h", "bo",
                "g_att", "b_att",
                "w1T", "b1", "g1", "be1", "w2T", "b2", "g2", "be2", "w3T", "b3",
                "g_ff", "b_ff")
# Parameters that feed the MXU get cast to the compute dtype (bf16); biases /
# LayerNorm params stay f32 so all reductions and accumulations remain f32.
_MATMUL_PARAMS = frozenset({"wqT_h", "wkT_h", "wvT_h", "woT_h", "w1T", "w2T", "w3T"})


def decoder_block_forward(x, y, params, nhead, *, compute_dtype=jnp.bfloat16):
    B, S, E = x.shape
    dh = E // nhead

    # Head split done in the wrapper (cheap XLA reshape/transpose) so the kernel
    # never has to relayout:  (B, S, E) -> (B, H, S, dh).
    xh = jnp.transpose(x.reshape(B, S, nhead, dh), (0, 2, 1, 3)).astype(compute_dtype)
    yh = jnp.transpose(y.reshape(B, S, nhead, dh), (0, 2, 1, 3)).astype(compute_dtype)
    y_f32 = y.astype(jnp.float32)

    flat_params = []
    for name in _PARAM_ORDER:
        a = params[name]
        flat_params.append(a.astype(compute_dtype) if name in _MATMUL_PARAMS
                           else a.astype(jnp.float32))

    def param_spec(a):
        nd = a.ndim
        return pl.BlockSpec(a.shape, lambda b, nd=nd: (0,) * nd)

    in_specs = (
        [pl.BlockSpec((1, nhead, S, dh), lambda b: (b, 0, 0, 0)),
         pl.BlockSpec((1, nhead, S, dh), lambda b: (b, 0, 0, 0)),
         pl.BlockSpec((1, S, E), lambda b: (b, 0, 0))]
        + [param_spec(a) for a in flat_params]
    )

    args = [xh, yh, y_f32] + flat_params
    # VMEM budget: every block is (up to) double-buffered; add headroom and keep
    # the limit below the v7x 64 MiB physical ceiling.
    arg_bytes = sum(int(a.size) * a.dtype.itemsize for a in args)
    vmem_limit = int(min(max(2 * arg_bytes + (4 << 20), 16 << 20), 48 << 20))

    # TODO(synk): for production sizes, pad E / internal to a multiple of 128
    # (256 on v6e/v7x) so the output store is lane-dense and the MXU runs at
    # native width.
    return pl.pallas_call(
        _make_block_kernel(nhead, dh, compute_dtype),
        out_shape=jax.ShapeDtypeStruct((B, S, E), jnp.float32),
        grid=(B,),
        in_specs=in_specs,
        out_specs=pl.BlockSpec((1, S, E), lambda b: (b, 0, 0)),
        compiler_params=pltpu.CompilerParams(
            dimension_semantics=("parallel",),
            vmem_limit_bytes=vmem_limit),
    )(*args)


def decoder_forward(x, y, blocks_params, nhead, *, compute_dtype=jnp.bfloat16):
    # The PyTorch Decoder applies every layer to the SAME (x, x, y) and overwrites
    # `output` each iteration, so only the last layer's output is observable.
    # Earlier layers are dead compute; skipping them is semantics-preserving and
    # removes L-1 redundant kernel launches + weight DMAs.
    return decoder_block_forward(x, y, blocks_params[-1], nhead,
                                 compute_dtype=compute_dtype)


def init_block_params(key, E, nhead, internal):
    dh = E // nhead
    ks = jax.random.split(key, 12)
    f32 = jnp.float32

    def n(k, shape, std):
        return (std * jax.random.normal(k, shape)).astype(f32)

    # attention weights ~ N(0, 1) per torch.nn.init.normal_; the (dh, dh) Q/K/V
    # Linear is shared across heads (as in the PyTorch module), so pre-transpose
    # and replicate per head for the batched einsum.
    wq, wk, wv = n(ks[0], (dh, dh), 1.0), n(ks[1], (dh, dh), 1.0), n(ks[2], (dh, dh), 1.0)
    wo = n(ks[3], (E, E), 1.0)

    p = {}
    p["wqT_h"] = jnp.tile(wq.T[None], (nhead, 1, 1))          # (H, dh, dh)
    p["wkT_h"] = jnp.tile(wk.T[None], (nhead, 1, 1))
    p["wvT_h"] = jnp.tile(wv.T[None], (nhead, 1, 1))
    p["woT_h"] = wo.T.reshape(nhead, dh, E)                   # rows grouped by head
    p["bq"] = n(ks[4], (1, dh), 0.1)
    p["bk"] = n(ks[5], (1, dh), 0.1)
    p["bv"] = n(ks[6], (1, dh), 0.1)
    p["bo"] = n(ks[7], (1, E), 0.1)
    p["g_att"] = jnp.ones((1, E), f32)
    p["b_att"] = jnp.zeros((1, E), f32)
    # feed-forward: default-style init (1/sqrt(fan_in)); pre-transposed for x @ W^T
    p["w1T"] = n(ks[8], (internal, E), 1.0 / math.sqrt(E)).T
    p["b1"] = jnp.zeros((1, internal), f32)
    p["g1"] = jnp.ones((1, internal), f32)
    p["be1"] = jnp.zeros((1, internal), f32)
    p["w2T"] = n(ks[9], (internal, internal), 1.0 / math.sqrt(internal)).T
    p["b2"] = jnp.zeros((1, internal), f32)
    p["g2"] = jnp.ones((1, internal), f32)
    p["be2"] = jnp.zeros((1, internal), f32)
    p["w3T"] = n(ks[10], (E, internal), 1.0 / math.sqrt(internal)).T
    p["b3"] = jnp.zeros((1, E), f32)
    p["g_ff"] = jnp.ones((1, E), f32)
    p["b_ff"] = jnp.zeros((1, E), f32)
    return p


if __name__ == "__main__":
    # small shapes consistent with the module: embedding divisible by nhead
    B, S, E = 2, 8, 32
    NHEAD = 4
    INTERNAL = 64
    LAYERS = 2

    key = jax.random.PRNGKey(0)
    kx, ky, kp = jax.random.split(key, 3)
    x = jax.random.normal(kx, (B, S, E), dtype=jnp.float32)
    y = jax.random.normal(ky, (B, S, E), dtype=jnp.float32)

    block_keys = jax.random.split(kp, LAYERS)
    blocks_params = [init_block_params(k, E, NHEAD, INTERNAL) for k in block_keys]

    out = decoder_forward(x, y, blocks_params, NHEAD)
    out = jax.block_until_ready(out)
    assert out.shape == (B, S, E)
    assert bool(jnp.all(jnp.isfinite(out)))
    print("KERNEL_OK")
</pallas_src>

<mosaic_0001>
module attributes {stable_mosaic.version = 11 : i64} {
  func.func @kernel(%arg0: i32, %arg1: memref<1x4x8x8xbf16, #tpu.memory_space<vmem>>, %arg2: memref<1x4x8x8xbf16, #tpu.memory_space<vmem>>, %arg3: memref<1x8x32xf32, #tpu.memory_space<vmem>>, %arg4: memref<4x8x8xbf16, #tpu.memory_space<vmem>>, %arg5: memref<1x8xf32, #tpu.memory_space<vmem>>, %arg6: memref<4x8x8xbf16, #tpu.memory_space<vmem>>, %arg7: memref<1x8xf32, #tpu.memory_space<vmem>>, %arg8: memref<4x8x8xbf16, #tpu.memory_space<vmem>>, %arg9: memref<1x8xf32, #tpu.memory_space<vmem>>, %arg10: memref<4x8x32xbf16, #tpu.memory_space<vmem>>, %arg11: memref<1x32xf32, #tpu.memory_space<vmem>>, %arg12: memref<1x32xf32, #tpu.memory_space<vmem>>, %arg13: memref<1x32xf32, #tpu.memory_space<vmem>>, %arg14: memref<32x64xbf16, #tpu.memory_space<vmem>>, %arg15: memref<1x64xf32, #tpu.memory_space<vmem>>, %arg16: memref<1x64xf32, #tpu.memory_space<vmem>>, %arg17: memref<1x64xf32, #tpu.memory_space<vmem>>, %arg18: memref<64x64xbf16, #tpu.memory_space<vmem>>, %arg19: memref<1x64xf32, #tpu.memory_space<vmem>>, %arg20: memref<1x64xf32, #tpu.memory_space<vmem>>, %arg21: memref<1x64xf32, #tpu.memory_space<vmem>>, %arg22: memref<64x32xbf16, #tpu.memory_space<vmem>>, %arg23: memref<1x32xf32, #tpu.memory_space<vmem>>, %arg24: memref<1x32xf32, #tpu.memory_space<vmem>>, %arg25: memref<1x32xf32, #tpu.memory_space<vmem>>, %arg26: memref<1x8x32xf32, #tpu.memory_space<vmem>>) attributes {dimension_semantics = [#tpu.dimension_semantics<parallel>], iteration_bounds = array<i64: 2>, scalar_prefetch = 0 : i64, scratch_operands = 0 : i64, tpu.core_type = #tpu.core_type<tc>, window_params = [{transform_indices = @transform_0, window_bounds = array<i64: 1, 4, 8, 8>}, {transform_indices = @transform_1, window_bounds = array<i64: 1, 4, 8, 8>}, {transform_indices = @transform_2, window_bounds = array<i64: 1, 8, 32>}, {pipeline_mode = #tpu.pipeline_mode<synchronous>, transform_indices = @transform_3, window_bounds = array<i64: 4, 8, 8>}, {pipeline_mode = #tpu.pipeline_mode<synchronous>, transform_indices = @transform_4, window_bounds = array<i64: 1, 8>}, {pipeline_mode = #tpu.pipeline_mode<synchronous>, transform_indices = @transform_5, window_bounds = array<i64: 4, 8, 8>}, {pipeline_mode = #tpu.pipeline_mode<synchronous>, transform_indices = @transform_6, window_bounds = array<i64: 1, 8>}, {pipeline_mode = #tpu.pipeline_mode<synchronous>, transform_indices = @transform_7, window_bounds = array<i64: 4, 8, 8>}, {pipeline_mode = #tpu.pipeline_mode<synchronous>, transform_indices = @transform_8, window_bounds = array<i64: 1, 8>}, {pipeline_mode = #tpu.pipeline_mode<synchronous>, transform_indices = @transform_9, window_bounds = array<i64: 4, 8, 32>}, {pipeline_mode = #tpu.pipeline_mode<synchronous>, transform_indices = @transform_10, window_bounds = array<i64: 1, 32>}, {pipeline_mode = #tpu.pipeline_mode<synchronous>, transform_indices = @transform_11, window_bounds = array<i64: 1, 32>}, {pipeline_mode = #tpu.pipeline_mode<synchronous>, transform_indices = @transform_12, window_bounds = array<i64: 1, 32>}, {pipeline_mode = #tpu.pipeline_mode<synchronous>, transform_indices = @transform_13, window_bounds = array<i64: 32, 64>}, {pipeline_mode = #tpu.pipeline_mode<synchronous>, transform_indices = @transform_14, window_bounds = array<i64: 1, 64>}, {pipeline_mode = #tpu.pipeline_mode<synchronous>, transform_indices = @transform_15, window_bounds = array<i64: 1, 64>}, {pipeline_mode = #tpu.pipeline_mode<synchronous>, transform_indices = @transform_16, window_bounds = array<i64: 1, 64>}, {pipeline_mode = #tpu.pipeline_mode<synchronous>, transform_indices = @transform_17, window_bounds = array<i64: 64, 64>}, {pipeline_mode = #tpu.pipeline_mode<synchronous>, transform_indices = @transform_18, window_bounds = array<i64: 1, 64>}, {pipeline_mode = #tpu.pipeline_mode<synchronous>, transform_indices = @transform_19, window_bounds = array<i64: 1, 64>}, {pipeline_mode = #tpu.pipeline_mode<synchronous>, transform_indices = @transform_20, window_bounds = array<i64: 1, 64>}, {pipeline_mode = #tpu.pipeline_mode<synchronous>, transform_indices = @transform_21, window_bounds = array<i64: 64, 32>}, {pipeline_mode = #tpu.pipeline_mode<synchronous>, transform_indices = @transform_22, window_bounds = array<i64: 1, 32>}, {pipeline_mode = #tpu.pipeline_mode<synchronous>, transform_indices = @transform_23, window_bounds = array<i64: 1, 32>}, {pipeline_mode = #tpu.pipeline_mode<synchronous>, transform_indices = @transform_24, window_bounds = array<i64: 1, 32>}, {transform_indices = @transform_25, window_bounds = array<i64: 1, 8, 32>}]} {
    %c0 = arith.constant 0 : index
    %c0_0 = arith.constant 0 : index
    %c0_1 = arith.constant 0 : index
    %c0_2 = arith.constant 0 : index
    %0 = vector.load %arg1[%c0, %c0_0, %c0_1, %c0_2] : memref<1x4x8x8xbf16, #tpu.memory_space<vmem>>, vector<1x4x8x8xbf16>
    %1 = vector.shape_cast %0 : vector<1x4x8x8xbf16> to vector<4x8x8xbf16>
    %c0_3 = arith.constant 0 : index
    %c0_4 = arith.constant 0 : index
    %c0_5 = arith.constant 0 : index
    %c0_6 = arith.constant 0 : index
    %2 = vector.load %arg2[%c0_3, %c0_4, %c0_5, %c0_6] : memref<1x4x8x8xbf16, #tpu.memory_space<vmem>>, vector<1x4x8x8xbf16>
    %3 = vector.shape_cast %2 : vector<1x4x8x8xbf16> to vector<4x8x8xbf16>
    %c0_7 = arith.constant 0 : index
    %c0_8 = arith.constant 0 : index
    %c0_9 = arith.constant 0 : index
    %4 = vector.load %arg3[%c0_7, %c0_8, %c0_9] : memref<1x8x32xf32, #tpu.memory_space<vmem>>, vector<1x8x32xf32>
    %5 = vector.shape_cast %4 : vector<1x8x32xf32> to vector<8x32xf32>
    %c0_10 = arith.constant 0 : index
    %c0_11 = arith.constant 0 : index
    %c0_12 = arith.constant 0 : index
    %6 = vector.load %arg4[%c0_10, %c0_11, %c0_12] : memref<4x8x8xbf16, #tpu.memory_space<vmem>>, vector<4x8x8xbf16>
    "tpu.trace_start"() <{level = 10 : i32, message = "hsd,hde->hse"}> : () -> ()
    %cst = arith.constant dense<0.000000e+00> : vector<4x8x8xf32>
    %7 = tpu.matmul %1, %6, %cst {dimension_numbers = #tpu.dot_dimension_numbers<[2], [1], [1], [2], [0, 0, 0, 1, 1, 2], [0], [0]>} : vector<4x8x8xbf16>, vector<4x8x8xbf16>, vector<4x8x8xf32> -> vector<4x8x8xf32>
    "tpu.trace_stop"() : () -> ()
    %c0_13 = arith.constant 0 : index
    %c0_14 = arith.constant 0 : index
    %8 = vector.load %arg5[%c0_13, %c0_14] : memref<1x8xf32, #tpu.memory_space<vmem>>, vector<1x8xf32>
    %9 = vector.shape_cast %8 : vector<1x8xf32> to vector<1x1x8xf32>
    %10 = vector.broadcast %9 : vector<1x1x8xf32> to vector<4x8x8xf32>
    %11 = arith.addf %7, %10 : vector<4x8x8xf32>
    %c0_15 = arith.constant 0 : index
    %c0_16 = arith.constant 0 : index
    %c0_17 = arith.constant 0 : index
    %12 = vector.load %arg6[%c0_15, %c0_16, %c0_17] : memref<4x8x8xbf16, #tpu.memory_space<vmem>>, vector<4x8x8xbf16>
    "tpu.trace_start"() <{level = 10 : i32, message = "hsd,hde->hse"}> : () -> ()
    %cst_18 = arith.constant dense<0.000000e+00> : vector<4x8x8xf32>
    %13 = tpu.matmul %1, %12, %cst_18 {dimension_numbers = #tpu.dot_dimension_numbers<[2], [1], [1], [2], [0, 0, 0, 1, 1, 2], [0], [0]>} : vector<4x8x8xbf16>, vector<4x8x8xbf16>, vector<4x8x8xf32> -> vector<4x8x8xf32>
    "tpu.trace_stop"() : () -> ()
    %c0_19 = arith.constant 0 : index
    %c0_20 = arith.constant 0 : index
    %14 = vector.load %arg7[%c0_19, %c0_20] : memref<1x8xf32, #tpu.memory_space<vmem>>, vector<1x8xf32>
    %15 = vector.shape_cast %14 : vector<1x8xf32> to vector<1x1x8xf32>
    %16 = vector.broadcast %15 : vector<1x1x8xf32> to vector<4x8x8xf32>
    %17 = arith.addf %13, %16 : vector<4x8x8xf32>
    %c0_21 = arith.constant 0 : index
    %c0_22 = arith.constant 0 : index
    %c0_23 = arith.constant 0 : index
    %18 = vector.load %arg8[%c0_21, %c0_22, %c0_23] : memref<4x8x8xbf16, #tpu.memory_space<vmem>>, vector<4x8x8xbf16>
    "tpu.trace_start"() <{level = 10 : i32, message = "hsd,hde->hse"}> : () -> ()
    %cst_24 = arith.constant dense<0.000000e+00> : vector<4x8x8xf32>
    %19 = tpu.matmul %3, %18, %cst_24 {dimension_numbers = #tpu.dot_dimension_numbers<[2], [1], [1], [2], [0, 0, 0, 1, 1, 2], [0], [0]>} : vector<4x8x8xbf16>, vector<4x8x8xbf16>, vector<4x8x8xf32> -> vector<4x8x8xf32>
    "tpu.trace_stop"() : () -> ()
    %c0_25 = arith.constant 0 : index
    %c0_26 = arith.constant 0 : index
    %20 = vector.load %arg9[%c0_25, %c0_26] : memref<1x8xf32, #tpu.memory_space<vmem>>, vector<1x8xf32>
    %21 = vector.shape_cast %20 : vector<1x8xf32> to vector<1x1x8xf32>
    %22 = vector.broadcast %21 : vector<1x1x8xf32> to vector<4x8x8xf32>
    %23 = arith.addf %19, %22 : vector<4x8x8xf32>
    %24 = arith.truncf %11 : vector<4x8x8xf32> to vector<4x8x8xbf16>
    %25 = arith.truncf %17 : vector<4x8x8xf32> to vector<4x8x8xbf16>
    "tpu.trace_start"() <{level = 10 : i32, message = "hqd,hkd->hqk"}> : () -> ()
    %cst_27 = arith.constant dense<0.000000e+00> : vector<4x8x8xf32>
    %26 = tpu.matmul %24, %25, %cst_27 {dimension_numbers = #tpu.dot_dimension_numbers<[2], [2], [1], [1], [0, 0, 0, 1, 1, 1], [0], [0]>} : vector<4x8x8xbf16>, vector<4x8x8xbf16>, vector<4x8x8xf32> -> vector<4x8x8xf32>
    "tpu.trace_stop"() : () -> ()
    %cst_28 = arith.constant 0.353553385 : f32
    %27 = vector.broadcast %cst_28 : f32 to vector<4x8x8xf32>
    %28 = arith.mulf %26, %27 : vector<4x8x8xf32>
    %cst_29 = arith.constant dense<0xFF800000> : vector<4x8xf32>
    %29 = vector.multi_reduction <maximumf>, %28, %cst_29 [2] : vector<4x8x8xf32> to vector<4x8xf32>
    %30 = vector.shape_cast %29 : vector<4x8xf32> to vector<4x8x1xf32>
    %31 = vector.broadcast %30 : vector<4x8x1xf32> to vector<4x8x8xf32>
    %32 = arith.subf %28, %31 : vector<4x8x8xf32>
    %33 = math.exp %32 : vector<4x8x8xf32>
    %cst_30 = arith.constant dense<0.000000e+00> : vector<4x8xf32>
    %34 = vector.multi_reduction <add>, %33, %cst_30 [2] : vector<4x8x8xf32> to vector<4x8xf32>
    %35 = vector.shape_cast %34 : vector<4x8xf32> to vector<4x8x1xf32>
    %36 = tpu.reciprocal %35 {approx = true} : vector<4x8x1xf32> -> vector<4x8x1xf32>
    %37 = vector.broadcast %36 : vector<4x8x1xf32> to vector<4x8x8xf32>
    %38 = arith.mulf %33, %37 : vector<4x8x8xf32>
    %39 = arith.truncf %38 : vector<4x8x8xf32> to vector<4x8x8xbf16>
    %40 = arith.truncf %23 : vector<4x8x8xf32> to vector<4x8x8xbf16>
    "tpu.trace_start"() <{level = 10 : i32, message = "hqk,hkd->hqd"}> : () -> ()
    %cst_31 = arith.constant dense<0.000000e+00> : vector<4x8x8xf32>
    %41 = tpu.matmul %39, %40, %cst_31 {dimension_numbers = #tpu.dot_dimension_numbers<[2], [1], [1], [2], [0, 0, 0, 1, 1, 2], [0], [0]>} : vector<4x8x8xbf16>, vector<4x8x8xbf16>, vector<4x8x8xf32> -> vector<4x8x8xf32>
    "tpu.trace_stop"() : () -> ()
    %42 = arith.truncf %41 : vector<4x8x8xf32> to vector<4x8x8xbf16>
    %c0_32 = arith.constant 0 : index
    %c0_33 = arith.constant 0 : index
    %c0_34 = arith.constant 0 : index
    %43 = vector.load %arg10[%c0_32, %c0_33, %c0_34] : memref<4x8x32xbf16, #tpu.memory_space<vmem>>, vector<4x8x32xbf16>
    "tpu.trace_start"() <{level = 10 : i32, message = "hqd,hde->hqe"}> : () -> ()
    %cst_35 = arith.constant dense<0.000000e+00> : vector<4x8x32xf32>
    %44 = tpu.matmul %42, %43, %cst_35 {dimension_numbers = #tpu.dot_dimension_numbers<[2], [1], [1], [2], [0, 0, 0, 1, 1, 2], [0], [0]>} : vector<4x8x8xbf16>, vector<4x8x32xbf16>, vector<4x8x32xf32> -> vector<4x8x32xf32>
    "tpu.trace_stop"() : () -> ()
    %cst_36 = arith.constant dense<0.000000e+00> : vector<8x32xf32>
    %45 = vector.multi_reduction <add>, %44, %cst_36 [0] : vector<4x8x32xf32> to vector<8x32xf32>
    %c0_37 = arith.constant 0 : index
    %c0_38 = arith.constant 0 : index
    %46 = vector.load %arg11[%c0_37, %c0_38] : memref<1x32xf32, #tpu.memory_space<vmem>>, vector<1x32xf32>
    %47 = vector.broadcast %46 : vector<1x32xf32> to vector<8x32xf32>
    %48 = arith.addf %45, %47 : vector<8x32xf32>
    %49 = arith.addf %48, %5 : vector<8x32xf32>
    %c0_39 = arith.constant 0 : index
    %c0_40 = arith.constant 0 : index
    %50 = vector.load %arg12[%c0_39, %c0_40] : memref<1x32xf32, #tpu.memory_space<vmem>>, vector<1x32xf32>
    %c0_41 = arith.constant 0 : index
    %c0_42 = arith.constant 0 : index
    %51 = vector.load %arg13[%c0_41, %c0_42] : memref<1x32xf32, #tpu.memory_space<vmem>>, vector<1x32xf32>
    %cst_43 = arith.constant dense<0.000000e+00> : vector<8xf32>
    %52 = vector.multi_reduction <add>, %49, %cst_43 [1] : vector<8x32xf32> to vector<8xf32>
    %53 = vector.shape_cast %52 : vector<8xf32> to vector<8x1xf32>
    %cst_44 = arith.constant 3.200000e+01 : f32
    %54 = vector.broadcast %cst_44 : f32 to vector<8x1xf32>
    %55 = arith.divf %53, %54 : vector<8x1xf32>
    %56 = vector.broadcast %55 : vector<8x1xf32> to vector<8x32xf32>
    %57 = arith.subf %49, %56 : vector<8x32xf32>
    %58 = arith.mulf %57, %57 : vector<8x32xf32>
    %cst_45 = arith.constant dense<0.000000e+00> : vector<8xf32>
    %59 = vector.multi_reduction <add>, %58, %cst_45 [1] : vector<8x32xf32> to vector<8xf32>
    %60 = vector.shape_cast %59 : vector<8xf32> to vector<8x1xf32>
    %cst_46 = arith.constant 3.200000e+01 : f32
    %61 = vector.broadcast %cst_46 : f32 to vector<8x1xf32>
    %62 = arith.divf %60, %61 : vector<8x1xf32>
    %63 = vector.broadcast %55 : vector<8x1xf32> to vector<8x32xf32>
    %64 = arith.subf %49, %63 : vector<8x32xf32>
    %cst_47 = arith.constant 9.99999974E-6 : f32
    %65 = vector.broadcast %cst_47 : f32 to vector<8x1xf32>
    %66 = arith.addf %62, %65 : vector<8x1xf32>
    %67 = math.rsqrt %66 : vector<8x1xf32>
    %68 = vector.broadcast %67 : vector<8x1xf32> to vector<8x32xf32>
    %69 = arith.mulf %64, %68 : vector<8x32xf32>
    %70 = vector.broadcast %50 : vector<1x32xf32> to vector<8x32xf32>
    %71 = arith.mulf %69, %70 : vector<8x32xf32>
    %72 = vector.broadcast %51 : vector<1x32xf32> to vector<8x32xf32>
    %73 = arith.addf %71, %72 : vector<8x32xf32>
    %74 = arith.truncf %73 : vector<8x32xf32> to vector<8x32xbf16>
    %c0_48 = arith.constant 0 : index
    %c0_49 = arith.constant 0 : index
    %75 = vector.load %arg14[%c0_48, %c0_49] : memref<32x64xbf16, #tpu.memory_space<vmem>>, vector<32x64xbf16>
    %cst_50 = arith.constant dense<0.000000e+00> : vector<8x64xf32>
    %76 = tpu.matmul %74, %75, %cst_50 {dimension_numbers = #tpu.dot_dimension_numbers<[1], [0], [0], [1], [0, 0, 1, 1], [], []>} : vector<8x32xbf16>, vector<32x64xbf16>, vector<8x64xf32> -> vector<8x64xf32>
    %c0_51 = arith.constant 0 : index
    %c0_52 = arith.constant 0 : index
    %77 = vector.load %arg15[%c0_51, %c0_52] : memref<1x64xf32, #tpu.memory_space<vmem>>, vector<1x64xf32>
    %78 = vector.broadcast %77 : vector<1x64xf32> to vector<8x64xf32>
    %79 = arith.addf %76, %78 : vector<8x64xf32>
    %c0_53 = arith.constant 0 : index
    %c0_54 = arith.constant 0 : index
    %80 = vector.load %arg16[%c0_53, %c0_54] : memref<1x64xf32, #tpu.memory_space<vmem>>, vector<1x64xf32>
    %c0_55 = arith.constant 0 : index
    %c0_56 = arith.constant 0 : index
    %81 = vector.load %arg17[%c0_55, %c0_56] : memref<1x64xf32, #tpu.memory_space<vmem>>, vector<1x64xf32>
    %cst_57 = arith.constant dense<0.000000e+00> : vector<8xf32>
    %82 = vector.multi_reduction <add>, %79, %cst_57 [1] : vector<8x64xf32> to vector<8xf32>
    %83 = vector.shape_cast %82 : vector<8xf32> to vector<8x1xf32>
    %cst_58 = arith.constant 6.400000e+01 : f32
    %84 = vector.broadcast %cst_58 : f32 to vector<8x1xf32>
    %85 = arith.divf %83, %84 : vector<8x1xf32>
    %86 = vector.broadcast %85 : vector<8x1xf32> to vector<8x64xf32>
    %87 = arith.subf %79, %86 : vector<8x64xf32>
    %88 = arith.mulf %87, %87 : vector<8x64xf32>
    %cst_59 = arith.constant dense<0.000000e+00> : vector<8xf32>
    %89 = vector.multi_reduction <add>, %88, %cst_59 [1] : vector<8x64xf32> to vector<8xf32>
    %90 = vector.shape_cast %89 : vector<8xf32> to vector<8x1xf32>
    %cst_60 = arith.constant 6.400000e+01 : f32
    %91 = vector.broadcast %cst_60 : f32 to vector<8x1xf32>
    %92 = arith.divf %90, %91 : vector<8x1xf32>
    %93 = vector.broadcast %85 : vector<8x1xf32> to vector<8x64xf32>
    %94 = arith.subf %79, %93 : vector<8x64xf32>
    %cst_61 = arith.constant 9.99999974E-6 : f32
    %95 = vector.broadcast %cst_61 : f32 to vector<8x1xf32>
    %96 = arith.addf %92, %95 : vector<8x1xf32>
    %97 = math.rsqrt %96 : vector<8x1xf32>
    %98 = vector.broadcast %97 : vector<8x1xf32> to vector<8x64xf32>
    %99 = arith.mulf %94, %98 : vector<8x64xf32>
    %100 = vector.broadcast %80 : vector<1x64xf32> to vector<8x64xf32>
    %101 = arith.mulf %99, %100 : vector<8x64xf32>
    %102 = vector.broadcast %81 : vector<1x64xf32> to vector<8x64xf32>
    %103 = arith.addf %101, %102 : vector<8x64xf32>
    %cst_62 = arith.constant 0.000000e+00 : f32
    %104 = vector.broadcast %cst_62 : f32 to vector<8x64xf32>
    %105 = arith.maximumf %103, %104 : vector<8x64xf32>
    %106 = arith.truncf %105 : vector<8x64xf32> to vector<8x64xbf16>
    %c0_63 = arith.constant 0 : index
    %c0_64 = arith.constant 0 : index
    %107 = vector.load %arg18[%c0_63, %c0_64] : memref<64x64xbf16, #tpu.memory_space<vmem>>, vector<64x64xbf16>
    %cst_65 = arith.constant dense<0.000000e+00> : vector<8x64xf32>
    %108 = tpu.matmul %106, %107, %cst_65 {dimension_numbers = #tpu.dot_dimension_numbers<[1], [0], [0], [1], [0, 0, 1, 1], [], []>} : vector<8x64xbf16>, vector<64x64xbf16>, vector<8x64xf32> -> vector<8x64xf32>
    %c0_66 = arith.constant 0 : index
    %c0_67 = arith.constant 0 : index
    %109 = vector.load %arg19[%c0_66, %c0_67] : memref<1x64xf32, #tpu.memory_space<vmem>>, vector<1x64xf32>
    %110 = vector.broadcast %109 : vector<1x64xf32> to vector<8x64xf32>
    %111 = arith.addf %108, %110 : vector<8x64xf32>
    %c0_68 = arith.constant 0 : index
    %c0_69 = arith.constant 0 : index
    %112 = vector.load %arg20[%c0_68, %c0_69] : memref<1x64xf32, #tpu.memory_space<vmem>>, vector<1x64xf32>
    %c0_70 = arith.constant 0 : index
    %c0_71 = arith.constant 0 : index
    %113 = vector.load %arg21[%c0_70, %c0_71] : memref<1x64xf32, #tpu.memory_space<vmem>>, vector<1x64xf32>
    %cst_72 = arith.constant dense<0.000000e+00> : vector<8xf32>
    %114 = vector.multi_reduction <add>, %111, %cst_72 [1] : vector<8x64xf32> to vector<8xf32>
    %115 = vector.shape_cast %114 : vector<8xf32> to vector<8x1xf32>
    %cst_73 = arith.constant 6.400000e+01 : f32
    %116 = vector.broadcast %cst_73 : f32 to vector<8x1xf32>
    %117 = arith.divf %115, %116 : vector<8x1xf32>
    %118 = vector.broadcast %117 : vector<8x1xf32> to vector<8x64xf32>
    %119 = arith.subf %111, %118 : vector<8x64xf32>
    %120 = arith.mulf %119, %119 : vector<8x64xf32>
    %cst_74 = arith.constant dense<0.000000e+00> : vector<8xf32>
    %121 = vector.multi_reduction <add>, %120, %cst_74 [1] : vector<8x64xf32> to vector<8xf32>
    %122 = vector.shape_cast %121 : vector<8xf32> to vector<8x1xf32>
    %cst_75 = arith.constant 6.400000e+01 : f32
    %123 = vector.broadcast %cst_75 : f32 to vector<8x1xf32>
    %124 = arith.divf %122, %123 : vector<8x1xf32>
    %125 = vector.broadcast %117 : vector<8x1xf32> to vector<8x64xf32>
    %126 = arith.subf %111, %125 : vector<8x64xf32>
    %cst_76 = arith.constant 9.99999974E-6 : f32
    %127 = vector.broadcast %cst_76 : f32 to vector<8x1xf32>
    %128 = arith.addf %124, %127 : vector<8x1xf32>
    %129 = math.rsqrt %128 : vector<8x1xf32>
    %130 = vector.broadcast %129 : vector<8x1xf32> to vector<8x64xf32>
    %131 = arith.mulf %126, %130 : vector<8x64xf32>
    %132 = vector.broadcast %112 : vector<1x64xf32> to vector<8x64xf32>
    %133 = arith.mulf %131, %132 : vector<8x64xf32>
    %134 = vector.broadcast %113 : vector<1x64xf32> to vector<8x64xf32>
    %135 = arith.addf %133, %134 : vector<8x64xf32>
    %cst_77 = arith.constant 0.000000e+00 : f32
    %136 = vector.broadcast %cst_77 : f32 to vector<8x64xf32>
    %137 = arith.maximumf %135, %136 : vector<8x64xf32>
    %138 = arith.truncf %137 : vector<8x64xf32> to vector<8x64xbf16>
    %c0_78 = arith.constant 0 : index
    %c0_79 = arith.constant 0 : index
    %139 = vector.load %arg22[%c0_78, %c0_79] : memref<64x32xbf16, #tpu.memory_space<vmem>>, vector<64x32xbf16>
    %cst_80 = arith.constant dense<0.000000e+00> : vector<8x32xf32>
    %140 = tpu.matmul %138, %139, %cst_80 {dimension_numbers = #tpu.dot_dimension_numbers<[1], [0], [0], [1], [0, 0, 1, 1], [], []>} : vector<8x64xbf16>, vector<64x32xbf16>, vector<8x32xf32> -> vector<8x32xf32>
    %c0_81 = arith.constant 0 : index
    %c0_82 = arith.constant 0 : index
    %141 = vector.load %arg23[%c0_81, %c0_82] : memref<1x32xf32, #tpu.memory_space<vmem>>, vector<1x32xf32>
    %142 = vector.broadcast %141 : vector<1x32xf32> to vector<8x32xf32>
    %143 = arith.addf %140, %142 : vector<8x32xf32>
    %144 = arith.addf %143, %73 : vector<8x32xf32>
    %c0_83 = arith.constant 0 : index
    %c0_84 = arith.constant 0 : index
    %145 = vector.load %arg24[%c0_83, %c0_84] : memref<1x32xf32, #tpu.memory_space<vmem>>, vector<1x32xf32>
    %c0_85 = arith.constant 0 : index
    %c0_86 = arith.constant 0 : index
    %146 = vector.load %arg25[%c0_85, %c0_86] : memref<1x32xf32, #tpu.memory_space<vmem>>, vector<1x32xf32>
    %cst_87 = arith.constant dense<0.000000e+00> : vector<8xf32>
    %147 = vector.multi_reduction <add>, %144, %cst_87 [1] : vector<8x32xf32> to vector<8xf32>
    %148 = vector.shape_cast %147 : vector<8xf32> to vector<8x1xf32>
    %cst_88 = arith.constant 3.200000e+01 : f32
    %149 = vector.broadcast %cst_88 : f32 to vector<8x1xf32>
    %150 = arith.divf %148, %149 : vector<8x1xf32>
    %151 = vector.broadcast %150 : vector<8x1xf32> to vector<8x32xf32>
    %152 = arith.subf %144, %151 : vector<8x32xf32>
    %153 = arith.mulf %152, %152 : vector<8x32xf32>
    %cst_89 = arith.constant dense<0.000000e+00> : vector<8xf32>
    %154 = vector.multi_reduction <add>, %153, %cst_89 [1] : vector<8x32xf32> to vector<8xf32>
    %155 = vector.shape_cast %154 : vector<8xf32> to vector<8x1xf32>
    %cst_90 = arith.constant 3.200000e+01 : f32
    %156 = vector.broadcast %cst_90 : f32 to vector<8x1xf32>
    %157 = arith.divf %155, %156 : vector<8x1xf32>
    %158 = vector.broadcast %150 : vector<8x1xf32> to vector<8x32xf32>
    %159 = arith.subf %144, %158 : vector<8x32xf32>
    %cst_91 = arith.constant 9.99999974E-6 : f32
    %160 = vector.broadcast %cst_91 : f32 to vector<8x1xf32>
    %161 = arith.addf %157, %160 : vector<8x1xf32>
    %162 = math.rsqrt %161 : vector<8x1xf32>
    %163 = vector.broadcast %162 : vector<8x1xf32> to vector<8x32xf32>
    %164 = arith.mulf %159, %163 : vector<8x32xf32>
    %165 = vector.broadcast %145 : vector<1x32xf32> to vector<8x32xf32>
    %166 = arith.mulf %164, %165 : vector<8x32xf32>
    %167 = vector.broadcast %146 : vector<1x32xf32> to vector<8x32xf32>
    %168 = arith.addf %166, %167 : vector<8x32xf32>
    %c0_92 = arith.constant 0 : index
    %c0_93 = arith.constant 0 : index
    %c0_94 = arith.constant 0 : index
    %169 = vector.load %arg26[%c0_92, %c0_93, %c0_94] : memref<1x8x32xf32, #tpu.memory_space<vmem>>, vector<1x8x32xf32>
    %170 = vector.shape_cast %169 : vector<1x8x32xf32> to vector<8x32xf32>
    %171 = vector.shape_cast %168 : vector<8x32xf32> to vector<1x8x32xf32>
    tpu.vector_store %arg26[%c0_92, %c0_93, %c0_94], %171 {strides = array<i32>} : memref<1x8x32xf32, #tpu.memory_space<vmem>>, vector<1x8x32xf32>,
    return
  }
  func.func @transform_0(%arg0: i32) -> (i32, i32, i32, i32) {
    %c0_i32 = arith.constant 0 : i32
    %c0_i32_0 = arith.constant 0 : i32
    %c0_i32_1 = arith.constant 0 : i32
    %c0_i32_2 = arith.constant 0 : i32
    return %arg0, %c0_i32, %c0_i32_0, %c0_i32_1 : i32, i32, i32, i32
  }
  func.func @transform_1(%arg0: i32) -> (i32, i32, i32, i32) {
    %c0_i32 = arith.constant 0 : i32
    %c0_i32_0 = arith.constant 0 : i32
    %c0_i32_1 = arith.constant 0 : i32
    %c0_i32_2 = arith.constant 0 : i32
    return %arg0, %c0_i32, %c0_i32_0, %c0_i32_1 : i32, i32, i32, i32
  }
  func.func @transform_2(%arg0: i32) -> (i32, i32, i32) {
    %c0_i32 = arith.constant 0 : i32
    %c0_i32_0 = arith.constant 0 : i32
    %c0_i32_1 = arith.constant 0 : i32
    return %arg0, %c0_i32, %c0_i32_0 : i32, i32, i32
  }
  func.func @transform_3(%arg0: i32) -> (i32, i32, i32) {
    %c0_i32 = arith.constant 0 : i32
    %c0_i32_0 = arith.constant 0 : i32
    %c0_i32_1 = arith.constant 0 : i32
    %c0_i32_2 = arith.constant 0 : i32
    return %c0_i32, %c0_i32_0, %c0_i32_1 : i32, i32, i32
  }
  func.func @transform_4(%arg0: i32) -> (i32, i32) {
    %c0_i32 = arith.constant 0 : i32
    %c0_i32_0 = arith.constant 0 : i32
    %c0_i32_1 = arith.constant 0 : i32
    return %c0_i32, %c0_i32_0 : i32, i32
  }
  func.func @transform_5(%arg0: i32) -> (i32, i32, i32) {
    %c0_i32 = arith.constant 0 : i32
    %c0_i32_0 = arith.constant 0 : i32
    %c0_i32_1 = arith.constant 0 : i32
    %c0_i32_2 = arith.constant 0 : i32
    return %c0_i32, %c0_i32_0, %c0_i32_1 : i32, i32, i32
  }
  func.func @transform_6(%arg0: i32) -> (i32, i32) {
    %c0_i32 = arith.constant 0 : i32
    %c0_i32_0 = arith.constant 0 : i32
    %c0_i32_1 = arith.constant 0 : i32
    return %c0_i32, %c0_i32_0 : i32, i32
  }
  func.func @transform_7(%arg0: i32) -> (i32, i32, i32) {
    %c0_i32 = arith.constant 0 : i32
    %c0_i32_0 = arith.constant 0 : i32
    %c0_i32_1 = arith.constant 0 : i32
    %c0_i32_2 = arith.constant 0 : i32
    return %c0_i32, %c0_i32_0, %c0_i32_1 : i32, i32, i32
  }
  func.func @transform_8(%arg0: i32) -> (i32, i32) {
    %c0_i32 = arith.constant 0 : i32
    %c0_i32_0 = arith.constant 0 : i32
    %c0_i32_1 = arith.constant 0 : i32
    return %c0_i32, %c0_i32_0 : i32, i32
  }
  func.func @transform_9(%arg0: i32) -> (i32, i32, i32) {
    %c0_i32 = arith.constant 0 : i32
    %c0_i32_0 = arith.constant 0 : i32
    %c0_i32_1 = arith.constant 0 : i32
    %c0_i32_2 = arith.constant 0 : i32
    return %c0_i32, %c0_i32_0, %c0_i32_1 : i32, i32, i32
  }
  func.func @transform_10(%arg0: i32) -> (i32, i32) {
    %c0_i32 = arith.constant 0 : i32
    %c0_i32_0 = arith.constant 0 : i32
    %c0_i32_1 = arith.constant 0 : i32
    return %c0_i32, %c0_i32_0 : i32, i32
  }
  func.func @transform_11(%arg0: i32) -> (i32, i32) {
    %c0_i32 = arith.constant 0 : i32
    %c0_i32_0 = arith.constant 0 : i32
    %c0_i32_1 = arith.constant 0 : i32
    return %c0_i32, %c0_i32_0 : i32, i32
  }
  func.func @transform_12(%arg0: i32) -> (i32, i32) {
    %c0_i32 = arith.constant 0 : i32
    %c0_i32_0 = arith.constant 0 : i32
    %c0_i32_1 = arith.constant 0 : i32
    return %c0_i32, %c0_i32_0 : i32, i32
  }
  func.func @transform_13(%arg0: i32) -> (i32, i32) {
    %c0_i32 = arith.constant 0 : i32
    %c0_i32_0 = arith.constant 0 : i32
    %c0_i32_1 = arith.constant 0 : i32
    return %c0_i32, %c0_i32_0 : i32, i32
  }
  func.func @transform_14(%arg0: i32) -> (i32, i32) {
    %c0_i32 = arith.constant 0 : i32
    %c0_i32_0 = arith.constant 0 : i32
    %c0_i32_1 = arith.constant 0 : i32
    return %c0_i32, %c0_i32_0 : i32, i32
  }
  func.func @transform_15(%arg0: i32) -> (i32, i32) {
    %c0_i32 = arith.constant 0 : i32
    %c0_i32_0 = arith.constant 0 : i32
    %c0_i32_1 = arith.constant 0 : i32
    return %c0_i32, %c0_i32_0 : i32, i32
  }
  func.func @transform_16(%arg0: i32) -> (i32, i32) {
    %c0_i32 = arith.constant 0 : i32
    %c0_i32_0 = arith.constant 0 : i32
    %c0_i32_1 = arith.constant 0 : i32
    return %c0_i32, %c0_i32_0 : i32, i32
  }
  func.func @transform_17(%arg0: i32) -> (i32, i32) {
    %c0_i32 = arith.constant 0 : i32
    %c0_i32_0 = arith.constant 0 : i32
    %c0_i32_1 = arith.constant 0 : i32
    return %c0_i32, %c0_i32_0 : i32, i32
  }
  func.func @transform_18(%arg0: i32) -> (i32, i32) {
    %c0_i32 = arith.constant 0 : i32
    %c0_i32_0 = arith.constant 0 : i32
    %c0_i32_1 = arith.constant 0 : i32
    return %c0_i32, %c0_i32_0 : i32, i32
  }
  func.func @transform_19(%arg0: i32) -> (i32, i32) {
    %c0_i32 = arith.constant 0 : i32
    %c0_i32_0 = arith.constant 0 : i32
    %c0_i32_1 = arith.constant 0 : i32
    return %c0_i32, %c0_i32_0 : i32, i32
  }
  func.func @transform_20(%arg0: i32) -> (i32, i32) {
    %c0_i32 = arith.constant 0 : i32
    %c0_i32_0 = arith.constant 0 : i32
    %c0_i32_1 = arith.constant 0 : i32
    return %c0_i32, %c0_i32_0 : i32, i32
  }
  func.func @transform_21(%arg0: i32) -> (i32, i32) {
    %c0_i32 = arith.constant 0 : i32
    %c0_i32_0 = arith.constant 0 : i32
    %c0_i32_1 = arith.constant 0 : i32
    return %c0_i32, %c0_i32_0 : i32, i32
  }
  func.func @transform_22(%arg0: i32) -> (i32, i32) {
    %c0_i32 = arith.constant 0 : i32
    %c0_i32_0 = arith.constant 0 : i32
    %c0_i32_1 = arith.constant 0 : i32
    return %c0_i32, %c0_i32_0 : i32, i32
  }
  func.func @transform_23(%arg0: i32) -> (i32, i32) {
    %c0_i32 = arith.constant 0 : i32
    %c0_i32_0 = arith.constant 0 : i32
    %c0_i32_1 = arith.constant 0 : i32
    return %c0_i32, %c0_i32_0 : i32, i32
  }
  func.func @transform_24(%arg0: i32) -> (i32, i32) {
    %c0_i32 = arith.constant 0 : i32
    %c0_i32_0 = arith.constant 0 : i32
    %c0_i32_1 = arith.constant 0 : i32
    return %c0_i32, %c0_i32_0 : i32, i32
  }
  func.func @transform_25(%arg0: i32) -> (i32, i32, i32) {
    %c0_i32 = arith.constant 0 : i32
    %c0_i32_0 = arith.constant 0 : i32
    %c0_i32_1 = arith.constant 0 : i32
    return %arg0, %c0_i32, %c0_i32_0 : i32, i32, i32
  }
}

</mosaic_0001>

<llo_original>
// kernel: tpu_custom_call.1
$region0: #{tpu_custom_call.1}
  #allocation0 [shape = 'u32[]', space=smem, size = 0x4, offset = 0x4, fixed_abs, tag = 'smem constant byte address 0x4 - core index']
  #allocation1 [shape = 'u32[144,128]{1,0:T(1,128)}', space=vmem, size = 0x12000, scoped, tag = 'internal scratch']
  %s0 = inlined_call_operand.vmem [shape: bf16[2,4,8,8], index: 0, kind: input, shape index: {}]
  %s1 = inlined_call_operand.hbm [shape: bf16[2,4,8,8], index: 1, kind: input, shape index: {}]
  %s2 = inlined_call_operand.hbm [shape: f32[2,8,32], index: 2, kind: input, shape index: {}]
  %s3 = inlined_call_operand.hbm [shape: bf16[4,8,8], index: 3, kind: input, shape index: {}]
  %s4 = inlined_call_operand.hbm [shape: f32[1,8], index: 4, kind: input, shape index: {}]
  %s5 = inlined_call_operand.hbm [shape: bf16[4,8,8], index: 5, kind: input, shape index: {}]
  %s6 = inlined_call_operand.hbm [shape: f32[1,8], index: 6, kind: input, shape index: {}]
  %s7 = inlined_call_operand.hbm [shape: bf16[4,8,8], index: 7, kind: input, shape index: {}]
  %s8 = inlined_call_operand.hbm [shape: f32[1,8], index: 8, kind: input, shape index: {}]
  %s9 = inlined_call_operand.hbm [shape: bf16[4,8,32], index: 9, kind: input, shape index: {}]
  %s10 = inlined_call_operand.hbm [shape: f32[1,32], index: 10, kind: input, shape index: {}]
  %s11 = inlined_call_operand.hbm [shape: f32[1,32], index: 11, kind: input, shape index: {}]
  %s12 = inlined_call_operand.hbm [shape: f32[1,32], index: 12, kind: input, shape index: {}]
  %s13 = inlined_call_operand.hbm [shape: bf16[32,64], index: 13, kind: input, shape index: {}]
  %s14 = inlined_call_operand.hbm [shape: f32[1,64], index: 14, kind: input, shape index: {}]
  %s15 = inlined_call_operand.hbm [shape: f32[1,64], index: 15, kind: input, shape index: {}]
  %s16 = inlined_call_operand.hbm [shape: f32[1,64], index: 16, kind: input, shape index: {}]
  %s17 = inlined_call_operand.vmem [shape: bf16[64,64], index: 17, kind: input, shape index: {}]
  %s18 = inlined_call_operand.hbm [shape: f32[1,64], index: 18, kind: input, shape index: {}]
  %s19 = inlined_call_operand.vmem [shape: f32[1,64], index: 19, kind: input, shape index: {}]
  %s20 = inlined_call_operand.vmem [shape: f32[1,64], index: 20, kind: input, shape index: {}]
  %s21 = inlined_call_operand.vmem [shape: bf16[64,32], index: 21, kind: input, shape index: {}]
  %s22 = inlined_call_operand.vmem [shape: f32[1,32], index: 22, kind: input, shape index: {}]
  %s23 = inlined_call_operand.vmem [shape: f32[1,32], index: 23, kind: input, shape index: {}]
  %s24 = inlined_call_operand.vmem [shape: f32[1,32], index: 24, kind: input, shape index: {}]
  %s25 = inlined_call_operand.hbm [shape: f32[2,8,32], index: 25, kind: output, shape index: {}]
  %s26 = sld [smem:[#allocation0]]
  $region201: #{tpu_custom_call.1} parent=0
    _
  %s28 = ssub.s32 1, %s26
  %s29 = scalar_select 0, %s28, %s26
  $region1: #{tpu_custom_call.1} parent=0
    #allocation2 [shape = 'u8[16384]{0}', space=vmem, size = 0x4000, scoped, tag = 'input window, operand 1']
    #allocation3 [shape = 's32[2]{0}', space=sflag, size = 0x8, scoped, tag = 'scoped memory for tpu_custom_call.1']
    #allocation4 [shape = 's32[2]{0}', space=sflag, size = 0x8, scoped, tag = 'scoped memory for tpu_custom_call.1']
    #allocation5 [shape = 'u8[8192]{0}', space=vmem, size = 0x2000, scoped, tag = 'input window, operand 2']
    #allocation6 [shape = 's32[2]{0}', space=sflag, size = 0x8, scoped, tag = 'scoped memory for tpu_custom_call.1']
    #allocation7 [shape = 'u8[8192]{0}', space=vmem, size = 0x2000, scoped, tag = 'input window, operand 3, single buffered']
    #allocation8 [shape = 'u8[512]{0}', space=vmem, size = 0x400, scoped, tag = 'input window, operand 4, single buffered']
    #allocation9 [shape = 's32[1]{0}', space=sflag, size = 0x4, scoped, tag = 'scoped memory for tpu_custom_call.1']
    #allocation10 [shape = 'u8[8192]{0}', space=vmem, size = 0x2000, scoped, tag = 'input window, operand 5, single buffered']
    #allocation11 [shape = 'u8[512]{0}', space=vmem, size = 0x400, scoped, tag = 'input window, operand 6, single buffered']
    #allocation12 [shape = 's32[1]{0}', space=sflag, size = 0x4, scoped, tag = 'scoped memory for tpu_custom_call.1']
    #allocation13 [shape = 'u8[8192]{0}', space=vmem, size = 0x2000, scoped, tag = 'input window, operand 7, single buffered']
    #allocation14 [shape = 'u8[512]{0}', space=vmem, size = 0x400, scoped, tag = 'input window, operand 8, single buffered']
    #allocation15 [shape = 's32[1]{0}', space=sflag, size = 0x4, scoped, tag = 'scoped memory for tpu_custom_call.1']
    #allocation16 [shape = 'u8[8192]{0}', space=vmem, size = 0x2000, scoped, tag = 'input window, operand 9, single buffered']
    #allocation17 [shape = 'u8[512]{0}', space=vmem, size = 0x400, scoped, tag = 'input window, operand 10, single buffered']
    #allocation18 [shape = 's32[1]{0}', space=sflag, size = 0x4, scoped, tag = 'scoped memory for tpu_custom_call.1']
    #allocation19 [shape = 'u8[512]{0}', space=vmem, size = 0x400, scoped, tag = 'input window, operand 11, single buffered']
    #allocation20 [shape = 'u8[512]{0}', space=vmem, size = 0x400, scoped, tag = 'input window, operand 12, single buffered']
    #allocation21 [shape = 's32[1]{0}', space=sflag, size = 0x4, scoped, tag = 'scoped memory for tpu_custom_call.1']
    #allocation22 [shape = 'u8[8192]{0}', space=vmem, size = 0x2000, scoped, tag = 'input window, operand 13, single buffered']
    #allocation23 [shape = 'u8[512]{0}', space=vmem, size = 0x400, scoped, tag = 'input window, operand 14, single buffered']
    #allocation24 [shape = 's32[1]{0}', space=sflag, size = 0x4, scoped, tag = 'scoped memory for tpu_custom_call.1']
    #allocation25 [shape = 'u8[512]{0}', space=vmem, size = 0x400, scoped, tag = 'input window, operand 15, single buffered']
    #allocation26 [shape = 'u8[512]{0}', space=vmem, size = 0x400, scoped, tag = 'input window, operand 16, single buffered']
    #allocation27 [shape = 's32[1]{0}', space=sflag, size = 0x4, scoped, tag = 'scoped memory for tpu_custom_call.1']
    #allocation28 [shape = 'u8[512]{0}', space=vmem, size = 0x400, scoped, tag = 'input window, operand 18, single buffered']
    #allocation29 [shape = 'u8[8192]{0}', space=vmem, size = 0x2000, scoped, tag = 'output window, operand 0']
    %30 = vsyncpa [#allocation3], 0
    %s31 = scalar_lea.sflag [#allocation3], 1
    %32 = vsyncpa %s31, 0
    %33 = vsyncpa [#allocation6], 0
    %s34 = scalar_lea.sflag [#allocation6], 1
    %35 = vsyncpa %s34, 0
    %36 = vsyncpa [#allocation9], 0
    %37 = vsyncpa [#allocation12], 0
    %38 = vsyncpa [#allocation15], 0
    %39 = vsyncpa [#allocation18], 0
    %40 = vsyncpa [#allocation21], 0
    %41 = vsyncpa [#allocation24], 0
    %42 = vsyncpa [#allocation27], 0
    %43 = vsyncpa [#allocation4], 0
    %s44 = scalar_lea.sflag [#allocation4], 1
    %45 = vsyncpa %s44, 0
    loop: start=0, step=1, limit=4
    $region2: #{tpu_custom_call.1} parent=1 // loop_pre_header
      _
    $region3: #{tpu_custom_call.1} parent=1 // loop_header
      %s47 = sphi 0, %s51
      %p48 = scmp.ge.s32.totalorder %s47, 4
      %s57 = sphi 0, %s59
      %s60 = sphi 0, %s57
      %s61 = sphi 0, %s60
      %s77 = sphi 0, %s61
      %s83 = sphi 0, %s85
      %s86 = sphi 0, %s83
      %s87 = sphi 0, %s86
      %s103 = sphi 0, %s87
      %s109 = sphi 0, %s111
      %s112 = sphi 0, %s109
      %s113 = sphi 0, %s112
      %s129 = sphi 0, %s113
      %s133 = sphi 0, %s133
      %s135 = sphi 0, %s133
      %s136 = sphi 0, %s135
      %s150 = sphi 0, %s136
      %s154 = sphi 0, %s154
      %s156 = sphi 0, %s154
      %s157 = sphi 0, %s156
      %s171 = sphi 0, %s157
      %s175 = sphi 0, %s175
      %s177 = sphi 0, %s175
      %s178 = sphi 0, %s177
      %s192 = sphi 0, %s178
      %s196 = sphi 0, %s196
      %s198 = sphi 0, %s196
      %s199 = sphi 0, %s198
      %s213 = sphi 0, %s199
      %s217 = sphi 0, %s217
      %s219 = sphi 0, %s217
      %s220 = sphi 0, %s219
      %s234 = sphi 0, %s220
      %s238 = sphi 0, %s238
      %s240 = sphi 0, %s238
      %s241 = sphi 0, %s240
      %s255 = sphi 0, %s241
      %s259 = sphi 0, %s259
      %s261 = sphi 0, %s259
      %s262 = sphi 0, %s261
      %s276 = sphi 0, %s262
      %s280 = sphi 0, %s280
      %s282 = sphi 0, %s280
      %s283 = sphi 0, %s282
      %s297 = sphi 0, %s283
      %s301 = sphi 0, %s301
      %s303 = sphi 0, %s301
      %s304 = sphi 0, %s303
      %s318 = sphi 0, %s304
      %s322 = sphi 0, %s322
      %s324 = sphi 0, %s322
      %s325 = sphi 0, %s324
      %s339 = sphi 0, %s325
      %s343 = sphi 0, %s343
      %s345 = sphi 0, %s343
      %s346 = sphi 0, %s345
      %s360 = sphi 0, %s346
      %s364 = sphi 0, %s364
      %s366 = sphi 0, %s364
      %s367 = sphi 0, %s366
      %s381 = sphi 0, %s367
      %s385 = sphi 0, %s385
      %s387 = sphi 0, %s385
      %s388 = sphi 0, %s387
      %s402 = sphi 0, %s388
      %s406 = sphi 0, %s406
      %s408 = sphi 0, %s406
      %s409 = sphi 0, %s408
      %s423 = sphi 0, %s409
      %s427 = sphi 0, %s427
      %s429 = sphi 0, %s427
      %s430 = sphi 0, %s429
      %s444 = sphi 0, %s430
      %s448 = sphi 0, %s448
      %s450 = sphi 0, %s448
      %s451 = sphi 0, %s450
      %s465 = sphi 0, %s451
      %s469 = sphi 0, %s469
      %s471 = sphi 0, %s469
      %s472 = sphi 0, %s471
      %s486 = sphi 0, %s472
      %s490 = sphi 0, %s490
      %s492 = sphi 0, %s490
      %s493 = sphi 0, %s492
      %s507 = sphi 0, %s493
      %s511 = sphi 0, %s511
      %s513 = sphi 0, %s511
      %s514 = sphi 0, %s513
      %s528 = sphi 0, %s514
      %s532 = sphi 0, %s532
      %s534 = sphi 0, %s532
      %s535 = sphi 0, %s534
      %s549 = sphi 0, %s535
      %s553 = sphi 0, %s553
      %s555 = sphi 0, %s553
      %s556 = sphi 0, %s555
      %s570 = sphi 0, %s556
      %s574 = sphi 0, %s574
      %s576 = sphi 0, %s574
      %s577 = sphi 0, %s576
      %s591 = sphi 0, %s577
      %s597 = sphi 0, %s599
      %s600 = sphi 0, %s597
      %s601 = sphi 0, %s600
      %s617 = sphi 0, %s601
    $region4: #{tpu_custom_call.1} parent=1 // loop_header_branch
      %50 = sbr.rel (%p48) target = $region8
    $region5: #{tpu_custom_call.1} parent=1 // loop_body
      %s52 = ssub.s32 %s47, 1
      %s53 = ssub.s32 %s47, 2
      %s54 = sadd.s32 %s47, 1
      %s55 = ssub.s32 %s47, %s54
      %p56 = scmp.eq.s32.totalorder %s55, 0
      %s58 = sadd.s32 %s57, 1
      %s59 = scalar_select %p56, %s57, %s58
      %p62 = pneg %p56
      %p63 = scmp.eq.s32.totalorder %s47, 1
      %p64 = por %p62, %p63
      %p65 = scmp.ne.s32.totalorder %s57, %s60
      %p66 = scmp.eq.s32.totalorder %s47, 0
      %p67 = por %p65, %p66
      %p68 = scmp.ne.s32.totalorder %s57, %s60
      %p69 = scmp.eq.s32.totalorder %s52, 1
      %p70 = por %p68, %p69
      %p71 = scmp.ne.s32.totalorder %s60, %s61
      %p72 = scmp.eq.s32.totalorder %s52, 0
      %p73 = por %p71, %p72
      %p74 = scmp.ne.s32.totalorder %s60, %s61
      %p75 = scmp.eq.s32.totalorder %s53, 1
      %p76 = por %p74, %p75
      %p78 = scmp.ne.s32.totalorder %s61, %s77
      %p79 = scmp.eq.s32.totalorder %s53, 0
      %p80 = por %p78, %p79
      %s81 = ssub.s32 %s47, %s54
      %p82 = scmp.eq.s32.totalorder %s81, 0
      %s84 = sadd.s32 %s83, 1
      %s85 = scalar_select %p82, %s83, %s84
      %p88 = pneg %p82
      %p89 = scmp.eq.s32.totalorder %s47, 1
      %p90 = por %p88, %p89
      %p91 = scmp.ne.s32.totalorder %s83, %s86
      %p92 = scmp.eq.s32.totalorder %s47, 0
      %p93 = por %p91, %p92
      %p94 = scmp.ne.s32.totalorder %s83, %s86
      %p95 = scmp.eq.s32.totalorder %s52, 1
      %p96 = por %p94, %p95
      %p97 = scmp.ne.s32.totalorder %s86, %s87
      %p98 = scmp.eq.s32.totalorder %s52, 0
      %p99 = por %p97, %p98
      %p100 = scmp.ne.s32.totalorder %s86, %s87
      %p101 = scmp.eq.s32.totalorder %s53, 1
      %p102 = por %p100, %p101
      %p104 = scmp.ne.s32.totalorder %s87, %s103
      %p105 = scmp.eq.s32.totalorder %s53, 0
      %p106 = por %p104, %p105
      %s107 = ssub.s32 %s47, %s54
      %p108 = scmp.eq.s32.totalorder %s107, 0
      %s110 = sadd.s32 %s109, 1
      %s111 = scalar_select %p108, %s109, %s110
      %p114 = pneg %p108
      %p115 = scmp.eq.s32.totalorder %s47, 1
      %p116 = por %p114, %p115
      %p117 = scmp.ne.s32.totalorder %s109, %s112
      %p118 = scmp.eq.s32.totalorder %s47, 0
      %p119 = por %p117, %p118
      %p120 = scmp.ne.s32.totalorder %s109, %s112
      %p121 = scmp.eq.s32.totalorder %s52, 1
      %p122 = por %p120, %p121
      %p123 = scmp.ne.s32.totalorder %s112, %s113
      %p124 = scmp.eq.s32.totalorder %s52, 0
      %p125 = por %p123, %p124
      %p126 = scmp.ne.s32.totalorder %s112, %s113
      %p127 = scmp.eq.s32.totalorder %s53, 1
      %p128 = por %p126, %p127
      %p130 = scmp.ne.s32.totalorder %s113, %s129
      %p131 = scmp.eq.s32.totalorder %s53, 0
      %p132 = por %p130, %p131
      %s134 = sadd.s32 %s133, 1
      %p137 = scmp.eq.s32.totalorder %s47, 1
      %p138 = scmp.ne.s32.totalorder %s133, %s135
      %p139 = scmp.eq.s32.totalorder %s47, 0
      %p140 = por %p138, %p139
      %p141 = scmp.ne.s32.totalorder %s133, %s135
      %p142 = scmp.eq.s32.totalorder %s52, 1
      %p143 = por %p141, %p142
      %p144 = scmp.ne.s32.totalorder %s135, %s136
      %p145 = scmp.eq.s32.totalorder %s52, 0
      %p146 = por %p144, %p145
      %p147 = scmp.ne.s32.totalorder %s135, %s136
      %p148 = scmp.eq.s32.totalorder %s53, 1
      %p149 = por %p147, %p148
      %p151 = scmp.ne.s32.totalorder %s136, %s150
      %p152 = scmp.eq.s32.totalorder %s53, 0
      %p153 = por %p151, %p152
      %s155 = sadd.s32 %s154, 1
      %p158 = scmp.eq.s32.totalorder %s47, 1
      %p159 = scmp.ne.s32.totalorder %s154, %s156
      %p160 = scmp.eq.s32.totalorder %s47, 0
      %p161 = por %p159, %p160
      %p162 = scmp.ne.s32.totalorder %s154, %s156
      %p163 = scmp.eq.s32.totalorder %s52, 1
      %p164 = por %p162, %p163
      %p165 = scmp.ne.s32.totalorder %s156, %s157
      %p166 = scmp.eq.s32.totalorder %s52, 0
      %p167 = por %p165, %p166
      %p168 = scmp.ne.s32.totalorder %s156, %s157
      %p169 = scmp.eq.s32.totalorder %s53, 1
      %p170 = por %p168, %p169
      %p172 = scmp.ne.s32.totalorder %s157, %s171
      %p173 = scmp.eq.s32.totalorder %s53, 0
      %p174 = por %p172, %p173
      %s176 = sadd.s32 %s175, 1
      %p179 = scmp.eq.s32.totalorder %s47, 1
      %p180 = scmp.ne.s32.totalorder %s175, %s177
      %p181 = scmp.eq.s32.totalorder %s47, 0
      %p182 = por %p180, %p181
      %p183 = scmp.ne.s32.totalorder %s175, %s177
      %p184 = scmp.eq.s32.totalorder %s52, 1
      %p185 = por %p183, %p184
      %p186 = scmp.ne.s32.totalorder %s177, %s178
      %p187 = scmp.eq.s32.totalorder %s52, 0
      %p188 = por %p186, %p187
      %p189 = scmp.ne.s32.totalorder %s177, %s178
      %p190 = scmp.eq.s32.totalorder %s53, 1
      %p191 = por %p189, %p190
      %p193 = scmp.ne.s32.totalorder %s178, %s192
      %p194 = scmp.eq.s32.totalorder %s53, 0
      %p195 = por %p193, %p194
      %s197 = sadd.s32 %s196, 1
      %p200 = scmp.eq.s32.totalorder %s47, 1
      %p201 = scmp.ne.s32.totalorder %s196, %s198
      %p202 = scmp.eq.s32.totalorder %s47, 0
      %p203 = por %p201, %p202
      %p204 = scmp.ne.s32.totalorder %s196, %s198
      %p205 = scmp.eq.s32.totalorder %s52, 1
      %p206 = por %p204, %p205
      %p207 = scmp.ne.s32.totalorder %s198, %s199
      %p208 = scmp.eq.s32.totalorder %s52, 0
      %p209 = por %p207, %p208
      %p210 = scmp.ne.s32.totalorder %s198, %s199
      %p211 = scmp.eq.s32.totalorder %s53, 1
      %p212 = por %p210, %p211
      %p214 = scmp.ne.s32.totalorder %s199, %s213
      %p215 = scmp.eq.s32.totalorder %s53, 0
      %p216 = por %p214, %p215
      %s218 = sadd.s32 %s217, 1
      %p221 = scmp.eq.s32.totalorder %s47, 1
      %p222 = scmp.ne.s32.totalorder %s217, %s219
      %p223 = scmp.eq.s32.totalorder %s47, 0
      %p224 = por %p222, %p223
      %p225 = scmp.ne.s32.totalorder %s217, %s219
      %p226 = scmp.eq.s32.totalorder %s52, 1
      %p227 = por %p225, %p226
      %p228 = scmp.ne.s32.totalorder %s219, %s220
      %p229 = scmp.eq.s32.totalorder %s52, 0
      %p230 = por %p228, %p229
      %p231 = scmp.ne.s32.totalorder %s219, %s220
      %p232 = scmp.eq.s32.totalorder %s53, 1
      %p233 = por %p231, %p232
      %p235 = scmp.ne.s32.totalorder %s220, %s234
      %p236 = scmp.eq.s32.totalorder %s53, 0
      %p237 = por %p235, %p236
      %s239 = sadd.s32 %s238, 1
      %p242 = scmp.eq.s32.totalorder %s47, 1
      %p243 = scmp.ne.s32.totalorder %s238, %s240
      %p244 = scmp.eq.s32.totalorder %s47, 0
      %p245 = por %p243, %p244
      %p246 = scmp.ne.s32.totalorder %s238, %s240
      %p247 = scmp.eq.s32.totalorder %s52, 1
      %p248 = por %p246, %p247
      %p249 = scmp.ne.s32.totalorder %s240, %s241
      %p250 = scmp.eq.s32.totalorder %s52, 0
      %p251 = por %p249, %p250
      %p252 = scmp.ne.s32.totalorder %s240, %s241
      %p253 = scmp.eq.s32.totalorder %s53, 1
      %p254 = por %p252, %p253
      %p256 = scmp.ne.s32.totalorder %s241, %s255
      %p257 = scmp.eq.s32.totalorder %s53, 0
      %p258 = por %p256, %p257
      %s260 = sadd.s32 %s259, 1
      %p263 = scmp.eq.s32.totalorder %s47, 1
      %p264 = scmp.ne.s32.totalorder %s259, %s261
      %p265 = scmp.eq.s32.totalorder %s47, 0
      %p266 = por %p264, %p265
      %p267 = scmp.ne.s32.totalorder %s259, %s261
      %p268 = scmp.eq.s32.totalorder %s52, 1
      %p269 = por %p267, %p268
      %p270 = scmp.ne.s32.totalorder %s261, %s262
      %p271 = scmp.eq.s32.totalorder %s52, 0
      %p272 = por %p270, %p271
      %p273 = scmp.ne.s32.totalorder %s261, %s262
      %p274 = scmp.eq.s32.totalorder %s53, 1
      %p275 = por %p273, %p274
      %p277 = scmp.ne.s32.totalorder %s262, %s276
      %p278 = scmp.eq.s32.totalorder %s53, 0
      %p279 = por %p277, %p278
      %s281 = sadd.s32 %s280, 1
      %p284 = scmp.eq.s32.totalorder %s47, 1
      %p285 = scmp.ne.s32.totalorder %s280, %s282
      %p286 = scmp.eq.s32.totalorder %s47, 0
      %p287 = por %p285, %p286
      %p288 = scmp.ne.s32.totalorder %s280, %s282
      %p289 = scmp.eq.s32.totalorder %s52, 1
      %p290 = por %p288, %p289
      %p291 = scmp.ne.s32.totalorder %s282, %s283
      %p292 = scmp.eq.s32.totalorder %s52, 0
      %p293 = por %p291, %p292
      %p294 = scmp.ne.s32.totalorder %s282, %s283
      %p295 = scmp.eq.s32.totalorder %s53, 1
      %p296 = por %p294, %p295
      %p298 = scmp.ne.s32.totalorder %s283, %s297
      %p299 = scmp.eq.s32.totalorder %s53, 0
      %p300 = por %p298, %p299
      %s302 = sadd.s32 %s301, 1
      %p305 = scmp.eq.s32.totalorder %s47, 1
      %p306 = scmp.ne.s32.totalorder %s301, %s303
      %p307 = scmp.eq.s32.totalorder %s47, 0
      %p308 = por %p306, %p307
      %p309 = scmp.ne.s32.totalorder %s301, %s303
      %p310 = scmp.eq.s32.totalorder %s52, 1
      %p311 = por %p309, %p310
      %p312 = scmp.ne.s32.totalorder %s303, %s304
      %p313 = scmp.eq.s32.totalorder %s52, 0
      %p314 = por %p312, %p313
      %p315 = scmp.ne.s32.totalorder %s303, %s304
      %p316 = scmp.eq.s32.totalorder %s53, 1
      %p317 = por %p315, %p316
      %p319 = scmp.ne.s32.totalorder %s304, %s318
      %p320 = scmp.eq.s32.totalorder %s53, 0
      %p321 = por %p319, %p320
      %s323 = sadd.s32 %s322, 1
      %p326 = scmp.eq.s32.totalorder %s47, 1
      %p327 = scmp.ne.s32.totalorder %s322, %s324
      %p328 = scmp.eq.s32.totalorder %s47, 0
      %p329 = por %p327, %p328
      %p330 = scmp.ne.s32.totalorder %s322, %s324
      %p331 = scmp.eq.s32.totalorder %s52, 1
      %p332 = por %p330, %p331
      %p333 = scmp.ne.s32.totalorder %s324, %s325
      %p334 = scmp.eq.s32.totalorder %s52, 0
      %p335 = por %p333, %p334
      %p336 = scmp.ne.s32.totalorder %s324, %s325
      %p337 = scmp.eq.s32.totalorder %s53, 1
      %p338 = por %p336, %p337
      %p340 = scmp.ne.s32.totalorder %s325, %s339
      %p341 = scmp.eq.s32.totalorder %s53, 0
      %p342 = por %p340, %p341
      %s344 = sadd.s32 %s343, 1
      %p347 = scmp.eq.s32.totalorder %s47, 1
      %p348 = scmp.ne.s32.totalorder %s343, %s345
      %p349 = scmp.eq.s32.totalorder %s47, 0
      %p350 = por %p348, %p349
      %p351 = scmp.ne.s32.totalorder %s343, %s345
      %p352 = scmp.eq.s32.totalorder %s52, 1
      %p353 = por %p351, %p352
      %p354 = scmp.ne.s32.totalorder %s345, %s346
      %p355 = scmp.eq.s32.totalorder %s52, 0
      %p356 = por %p354, %p355
      %p357 = scmp.ne.s32.totalorder %s345, %s346
      %p358 = scmp.eq.s32.totalorder %s53, 1
      %p359 = por %p357, %p358
      %p361 = scmp.ne.s32.totalorder %s346, %s360
      %p362 = scmp.eq.s32.totalorder %s53, 0
      %p363 = por %p361, %p362
      %s365 = sadd.s32 %s364, 1
      %p368 = scmp.eq.s32.totalorder %s47, 1
      %p369 = scmp.ne.s32.totalorder %s364, %s366
      %p370 = scmp.eq.s32.totalorder %s47, 0
      %p371 = por %p369, %p370
      %p372 = scmp.ne.s32.totalorder %s364, %s366
      %p373 = scmp.eq.s32.totalorder %s52, 1
      %p374 = por %p372, %p373
      %p375 = scmp.ne.s32.totalorder %s366, %s367
      %p376 = scmp.eq.s32.totalorder %s52, 0
      %p377 = por %p375, %p376
      %p378 = scmp.ne.s32.totalorder %s366, %s367
      %p379 = scmp.eq.s32.totalorder %s53, 1
      %p380 = por %p378, %p379
      %p382 = scmp.ne.s32.totalorder %s367, %s381
      %p383 = scmp.eq.s32.totalorder %s53, 0
      %p384 = por %p382, %p383
      %s386 = sadd.s32 %s385, 1
      %p389 = scmp.eq.s32.totalorder %s47, 1
      %p390 = scmp.ne.s32.totalorder %s385, %s387
      %p391 = scmp.eq.s32.totalorder %s47, 0
      %p392 = por %p390, %p391
      %p393 = scmp.ne.s32.totalorder %s385, %s387
      %p394 = scmp.eq.s32.totalorder %s52, 1
      %p395 = por %p393, %p394
      %p396 = scmp.ne.s32.totalorder %s387, %s388
      %p397 = scmp.eq.s32.totalorder %s52, 0
      %p398 = por %p396, %p397
      %p399 = scmp.ne.s32.totalorder %s387, %s388
      %p400 = scmp.eq.s32.totalorder %s53, 1
      %p401 = por %p399, %p400
      %p403 = scmp.ne.s32.totalorder %s388, %s402
      %p404 = scmp.eq.s32.totalorder %s53, 0
      %p405 = por %p403, %p404
      %s407 = sadd.s32 %s406, 1
      %p410 = scmp.eq.s32.totalorder %s47, 1
      %p411 = scmp.ne.s32.totalorder %s406, %s408
      %p412 = scmp.eq.s32.totalorder %s47, 0
      %p413 = por %p411, %p412
      %p414 = scmp.ne.s32.totalorder %s406, %s408
      %p415 = scmp.eq.s32.totalorder %s52, 1
      %p416 = por %p414, %p415
      %p417 = scmp.ne.s32.totalorder %s408, %s409
      %p418 = scmp.eq.s32.totalorder %s52, 0
      %p419 = por %p417, %p418
      %p420 = scmp.ne.s32.totalorder %s408, %s409
      %p421 = scmp.eq.s32.totalorder %s53, 1
      %p422 = por %p420, %p421
      %p424 = scmp.ne.s32.totalorder %s409, %s423
      %p425 = scmp.eq.s32.totalorder %s53, 0
      %p426 = por %p424, %p425
      %s428 = sadd.s32 %s427, 1
      %p431 = scmp.eq.s32.totalorder %s47, 1
      %p432 = scmp.ne.s32.totalorder %s427, %s429
      %p433 = scmp.eq.s32.totalorder %s47, 0
      %p434 = por %p432, %p433
      %p435 = scmp.ne.s32.totalorder %s427, %s429
      %p436 = scmp.eq.s32.totalorder %s52, 1
      %p437 = por %p435, %p436
      %p438 = scmp.ne.s32.totalorder %s429, %s430
      %p439 = scmp.eq.s32.totalorder %s52, 0
      %p440 = por %p438, %p439
      %p441 = scmp.ne.s32.totalorder %s429, %s430
      %p442 = scmp.eq.s32.totalorder %s53, 1
      %p443 = por %p441, %p442
      %p445 = scmp.ne.s32.totalorder %s430, %s444
      %p446 = scmp.eq.s32.totalorder %s53, 0
      %p447 = por %p445, %p446
      %s449 = sadd.s32 %s448, 1
      %p452 = scmp.eq.s32.totalorder %s47, 1
      %p453 = scmp.ne.s32.totalorder %s448, %s450
      %p454 = scmp.eq.s32.totalorder %s47, 0
      %p455 = por %p453, %p454
      %p456 = scmp.ne.s32.totalorder %s448, %s450
      %p457 = scmp.eq.s32.totalorder %s52, 1
      %p458 = por %p456, %p457
      %p459 = scmp.ne.s32.totalorder %s450, %s451
      %p460 = scmp.eq.s32.totalorder %s52, 0
      %p461 = por %p459, %p460
      %p462 = scmp.ne.s32.totalorder %s450, %s451
      %p463 = scmp.eq.s32.totalorder %s53, 1
      %p464 = por %p462, %p463
      %p466 = scmp.ne.s32.totalorder %s451, %s465
      %p467 = scmp.eq.s32.totalorder %s53, 0
      %p468 = por %p466, %p467
      %s470 = sadd.s32 %s469, 1
      %p473 = scmp.eq.s32.totalorder %s47, 1
      %p474 = scmp.ne.s32.totalorder %s469, %s471
      %p475 = scmp.eq.s32.totalorder %s47, 0
      %p476 = por %p474, %p475
      %p477 = scmp.ne.s32.totalorder %s469, %s471
      %p478 = scmp.eq.s32.totalorder %s52, 1
      %p479 = por %p477, %p478
      %p480 = scmp.ne.s32.totalorder %s471, %s472
      %p481 = scmp.eq.s32.totalorder %s52, 0
      %p482 = por %p480, %p481
      %p483 = scmp.ne.s32.totalorder %s471, %s472
      %p484 = scmp.eq.s32.totalorder %s53, 1
      %p485 = por %p483, %p484
      %p487 = scmp.ne.s32.totalorder %s472, %s486
      %p488 = scmp.eq.s32.totalorder %s53, 0
      %p489 = por %p487, %p488
      %s491 = sadd.s32 %s490, 1
      %p494 = scmp.eq.s32.totalorder %s47, 1
      %p495 = scmp.ne.s32.totalorder %s490, %s492
      %p496 = scmp.eq.s32.totalorder %s47, 0
      %p497 = por %p495, %p496
      %p498 = scmp.ne.s32.totalorder %s490, %s492
      %p499 = scmp.eq.s32.totalorder %s52, 1
      %p500 = por %p498, %p499
      %p501 = scmp.ne.s32.totalorder %s492, %s493
      %p502 = scmp.eq.s32.totalorder %s52, 0
      %p503 = por %p501, %p502
      %p504 = scmp.ne.s32.totalorder %s492, %s493
      %p505 = scmp.eq.s32.totalorder %s53, 1
      %p506 = por %p504, %p505
      %p508 = scmp.ne.s32.totalorder %s493, %s507
      %p509 = scmp.eq.s32.totalorder %s53, 0
      %p510 = por %p508, %p509
      %s512 = sadd.s32 %s511, 1
      %p515 = scmp.eq.s32.totalorder %s47, 1
      %p516 = scmp.ne.s32.totalorder %s511, %s513
      %p517 = scmp.eq.s32.totalorder %s47, 0
      %p518 = por %p516, %p517
      %p519 = scmp.ne.s32.totalorder %s511, %s513
      %p520 = scmp.eq.s32.totalorder %s52, 1
      %p521 = por %p519, %p520
      %p522 = scmp.ne.s32.totalorder %s513, %s514
      %p523 = scmp.eq.s32.totalorder %s52, 0
      %p524 = por %p522, %p523
      %p525 = scmp.ne.s32.totalorder %s513, %s514
      %p526 = scmp.eq.s32.totalorder %s53, 1
      %p527 = por %p525, %p526
      %p529 = scmp.ne.s32.totalorder %s514, %s528
      %p530 = scmp.eq.s32.totalorder %s53, 0
      %p531 = por %p529, %p530
      %s533 = sadd.s32 %s532, 1
      %p536 = scmp.eq.s32.totalorder %s47, 1
      %p537 = scmp.ne.s32.totalorder %s532, %s534
      %p538 = scmp.eq.s32.totalorder %s47, 0
      %p539 = por %p537, %p538
      %p540 = scmp.ne.s32.totalorder %s532, %s534
      %p541 = scmp.eq.s32.totalorder %s52, 1
      %p542 = por %p540, %p541
      %p543 = scmp.ne.s32.totalorder %s534, %s535
      %p544 = scmp.eq.s32.totalorder %s52, 0
      %p545 = por %p543, %p544
      %p546 = scmp.ne.s32.totalorder %s534, %s535
      %p547 = scmp.eq.s32.totalorder %s53, 1
      %p548 = por %p546, %p547
      %p550 = scmp.ne.s32.totalorder %s535, %s549
      %p551 = scmp.eq.s32.totalorder %s53, 0
      %p552 = por %p550, %p551
      %s554 = sadd.s32 %s553, 1
      %p557 = scmp.eq.s32.totalorder %s47, 1
      %p558 = scmp.ne.s32.totalorder %s553, %s555
      %p559 = scmp.eq.s32.totalorder %s47, 0
      %p560 = por %p558, %p559
      %p561 = scmp.ne.s32.totalorder %s553, %s555
      %p562 = scmp.eq.s32.totalorder %s52, 1
      %p563 = por %p561, %p562
      %p564 = scmp.ne.s32.totalorder %s555, %s556
      %p565 = scmp.eq.s32.totalorder %s52, 0
      %p566 = por %p564, %p565
      %p567 = scmp.ne.s32.totalorder %s555, %s556
      %p568 = scmp.eq.s32.totalorder %s53, 1
      %p569 = por %p567, %p568
      %p571 = scmp.ne.s32.totalorder %s556, %s570
      %p572 = scmp.eq.s32.totalorder %s53, 0
      %p573 = por %p571, %p572
      %s575 = sadd.s32 %s574, 1
      %p578 = scmp.eq.s32.totalorder %s47, 1
      %p579 = scmp.ne.s32.totalorder %s574, %s576
      %p580 = scmp.eq.s32.totalorder %s47, 0
      %p581 = por %p579, %p580
      %p582 = scmp.ne.s32.totalorder %s574, %s576
      %p583 = scmp.eq.s32.totalorder %s52, 1
      %p584 = por %p582, %p583
      %p585 = scmp.ne.s32.totalorder %s576, %s577
      %p586 = scmp.eq.s32.totalorder %s52, 0
      %p587 = por %p585, %p586
      %p588 = scmp.ne.s32.totalorder %s576, %s577
      %p589 = scmp.eq.s32.totalorder %s53, 1
      %p590 = por %p588, %p589
      %p592 = scmp.ne.s32.totalorder %s577, %s591
      %p593 = scmp.eq.s32.totalorder %s53, 0
      %p594 = por %p592, %p593
      %s595 = ssub.s32 %s47, %s54
      %p596 = scmp.eq.s32.totalorder %s595, 0
      %s598 = sadd.s32 %s597, 1
      %s599 = scalar_select %p596, %s597, %s598
      %p602 = pneg %p596
      %p603 = scmp.eq.s32.totalorder %s47, 1
      %p604 = por %p602, %p603
      %p605 = scmp.ne.s32.totalorder %s597, %s600
      %p606 = scmp.eq.s32.totalorder %s47, 0
      %p607 = por %p605, %p606
      %p608 = scmp.ne.s32.totalorder %s597, %s600
      %p609 = scmp.eq.s32.totalorder %s52, 1
      %p610 = por %p608, %p609
      %p611 = scmp.ne.s32.totalorder %s600, %s601
      %p612 = scmp.eq.s32.totalorder %s52, 0
      %p613 = por %p611, %p612
      %p614 = scmp.ne.s32.totalorder %s600, %s601
      %p615 = scmp.eq.s32.totalorder %s53, 1
      %p616 = por %p614, %p615
      %p618 = scmp.ne.s32.totalorder %s601, %s617
      %p619 = scmp.eq.s32.totalorder %s53, 0
      %p620 = por %p618, %p619
      %p621 = scmp.le.s32.totalorder 1, %s47
      %p622 = scmp.lt.s32.totalorder %s47, 3
      %p623 = pnand %p621, %p622
      %p624 = pneg %p623
      // Predicated region
      $region9: #{tpu_custom_call.1} parent=5 // pred_check
        _
      $region10: #{tpu_custom_call.1} parent=5 // pred_check_branch
        %626 = sbr.rel (%p623) target = $region12
      $region11: #{tpu_custom_call.1} parent=5 // pred_region
        %s627 = ssub.s32 %s47, 1
        // Predicated region
        $region13: #{tpu_custom_call.1} parent=11 // pred_check
          %p628 = pneg %p146
        $region14: #{tpu_custom_call.1} parent=11 // pred_check_branch
          %630 = sbr.rel (%p628) target = $region16
        $region15: #{tpu_custom_call.1} parent=11 // pred_region
          %s632 = ssub.s32 256, 256
          %633 = vsyncadd [#allocation6], %s632
          %s634 = sshll.u32 [#allocation7], 4
          %s635 = int_to_ptr.vmem [resolvable:$true] %s634
          %640 = dma.hbm_to_vmem [thread:$0]  %s3, 256, %s635, [#allocation6], 64, 64, 4
        $region16: #{tpu_custom_call.1} parent=11 // pred_fallthru
          _
        // Predicated region
        $region17: #{tpu_custom_call.1} parent=11 // pred_check
          %p641 = pneg %p167
        $region18: #{tpu_custom_call.1} parent=11 // pred_check_branch
          %643 = sbr.rel (%p641) target = $region20
        $region19: #{tpu_custom_call.1} parent=11 // pred_region
          %s645 = ssub.s32 16, 16
          %646 = vsyncadd [#allocation9], %s645
          %s648 = sshll.u32 [#allocation8], 4
          %s649 = int_to_ptr.vmem [resolvable:$true] %s648
          %651 = dma.hbm_to_vmem [thread:$0]  %s4, 16, %s649, [#allocation9]
        $region20: #{tpu_custom_call.1} parent=11 // pred_fallthru
          _
        // Predicated region
        $region21: #{tpu_custom_call.1} parent=11 // pred_check
          %p652 = pneg %p188
        $region22: #{tpu_custom_call.1} parent=11 // pred_check_branch
          %654 = sbr.rel (%p652) target = $region24
        $region23: #{tpu_custom_call.1} parent=11 // pred_region
          %s656 = ssub.s32 256, 256
          %657 = vsyncadd [#allocation9], %s656
          %s658 = sshll.u32 [#allocation10], 4
          %s659 = int_to_ptr.vmem [resolvable:$true] %s658
          %664 = dma.hbm_to_vmem [thread:$0]  %s5, 256, %s659, [#allocation9], 64, 64, 4
        $region24: #{tpu_custom_call.1} parent=11 // pred_fallthru
          _
        // Predicated region
        $region25: #{tpu_custom_call.1} parent=11 // pred_check
          %p665 = pneg %p209
        $region26: #{tpu_custom_call.1} parent=11 // pred_check_branch
          %667 = sbr.rel (%p665) target = $region28
        $region27: #{tpu_custom_call.1} parent=11 // pred_region
          %s669 = ssub.s32 16, 16
          %670 = vsyncadd [#allocation12], %s669
          %s672 = sshll.u32 [#allocation11], 4
          %s673 = int_to_ptr.vmem [resolvable:$true] %s672
          %675 = dma.hbm_to_vmem [thread:$0]  %s6, 16, %s673, [#allocation12]
        $region28: #{tpu_custom_call.1} parent=11 // pred_fallthru
          _
        // Predicated region
        $region29: #{tpu_custom_call.1} parent=11 // pred_check
          %p676 = pneg %p230
        $region30: #{tpu_custom_call.1} parent=11 // pred_check_branch
          %678 = sbr.rel (%p676) target = $region32
        $region31: #{tpu_custom_call.1} parent=11 // pred_region
          %s680 = ssub.s32 256, 256
          %681 = vsyncadd [#allocation12], %s680
          %s682 = sshll.u32 [#allocation13], 4
          %s683 = int_to_ptr.vmem [resolvable:$true] %s682
          %688 = dma.hbm_to_vmem [thread:$0]  %s7, 256, %s683, [#allocation12], 64, 64, 4
        $region32: #{tpu_custom_call.1} parent=11 // pred_fallthru
          _
        // Predicated region
        $region33: #{tpu_custom_call.1} parent=11 // pred_check
          %p689 = pneg %p251
        $region34: #{tpu_custom_call.1} parent=11 // pred_check_branch
          %691 = sbr.rel (%p689) target = $region36
        $region35: #{tpu_custom_call.1} parent=11 // pred_region
          %s693 = ssub.s32 16, 16
          %694 = vsyncadd [#allocation15], %s693
          %s696 = sshll.u32 [#allocation14], 4
          %s697 = int_to_ptr.vmem [resolvable:$true] %s696
          %699 = dma.hbm_to_vmem [thread:$0]  %s8, 16, %s697, [#allocation15]
        $region36: #{tpu_custom_call.1} parent=11 // pred_fallthru
          _
        // Predicated region
        $region37: #{tpu_custom_call.1} parent=11 // pred_check
          %p700 = pneg %p272
        $region38: #{tpu_custom_call.1} parent=11 // pred_check_branch
          %702 = sbr.rel (%p700) target = $region40
        $region39: #{tpu_custom_call.1} parent=11 // pred_region
          %s704 = ssub.s32 256, 256
          %705 = vsyncadd [#allocation15], %s704
          %s706 = sshll.u32 [#allocation16], 4
          %s707 = int_to_ptr.vmem [resolvable:$true] %s706
          %712 = dma.hbm_to_vmem [thread:$0]  %s9, 256, %s707, [#allocation15], 64, 64, 4
        $region40: #{tpu_custom_call.1} parent=11 // pred_fallthru
          _
        // Predicated region
        $region41: #{tpu_custom_call.1} parent=11 // pred_check
          %p713 = pneg %p293
        $region42: #{tpu_custom_call.1} parent=11 // pred_check_branch
          %715 = sbr.rel (%p713) target = $region44
        $region43: #{tpu_custom_call.1} parent=11 // pred_region
          %s717 = ssub.s32 16, 16
          %718 = vsyncadd [#allocation18], %s717
          %s720 = sshll.u32 [#allocation17], 4
          %s721 = int_to_ptr.vmem [resolvable:$true] %s720
          %723 = dma.hbm_to_vmem [thread:$0]  %s10, 16, %s721, [#allocation18]
        $region44: #{tpu_custom_call.1} parent=11 // pred_fallthru
          _
        // Predicated region
        $region45: #{tpu_custom_call.1} parent=11 // pred_check
          %p724 = pneg %p314
        $region46: #{tpu_custom_call.1} parent=11 // pred_check_branch
          %726 = sbr.rel (%p724) target = $region48
        $region47: #{tpu_custom_call.1} parent=11 // pred_region
          %s728 = ssub.s32 16, 16
          %729 = vsyncadd [#allocation18], %s728
          %s731 = sshll.u32 [#allocation19], 4
          %s732 = int_to_ptr.vmem [resolvable:$true] %s731
          %734 = dma.hbm_to_vmem [thread:$0]  %s11, 16, %s732, [#allocation18]
        $region48: #{tpu_custom_call.1} parent=11 // pred_fallthru
          _
        // Predicated region
        $region49: #{tpu_custom_call.1} parent=11 // pred_check
          %p735 = pneg %p335
        $region50: #{tpu_custom_call.1} parent=11 // pred_check_branch
          %737 = sbr.rel (%p735) target = $region52
        $region51: #{tpu_custom_call.1} parent=11 // pred_region
          %s739 = ssub.s32 16, 16
          %740 = vsyncadd [#allocation21], %s739
          %s742 = sshll.u32 [#allocation20], 4
          %s743 = int_to_ptr.vmem [resolvable:$true] %s742
          %745 = dma.hbm_to_vmem [thread:$0]  %s12, 16, %s743, [#allocation21]
        $region52: #{tpu_custom_call.1} parent=11 // pred_fallthru
          _
        // Predicated region
        $region53: #{tpu_custom_call.1} parent=11 // pred_check
          %p746 = pneg %p356
        $region54: #{tpu_custom_call.1} parent=11 // pred_check_branch
          %748 = sbr.rel (%p746) target = $region56
        $region55: #{tpu_custom_call.1} parent=11 // pred_region
          %s750 = ssub.s32 256, 256
          %751 = vsyncadd [#allocation21], %s750
          %s752 = sshll.u32 [#allocation22], 4
          %s753 = int_to_ptr.vmem [resolvable:$true] %s752
          %758 = dma.hbm_to_vmem [thread:$0]  %s13, 256, %s753, [#allocation21], 64, 64, 4
        $region56: #{tpu_custom_call.1} parent=11 // pred_fallthru
          _
        // Predicated region
        $region57: #{tpu_custom_call.1} parent=11 // pred_check
          %p759 = pneg %p377
        $region58: #{tpu_custom_call.1} parent=11 // pred_check_branch
          %761 = sbr.rel (%p759) target = $region60
        $region59: #{tpu_custom_call.1} parent=11 // pred_region
          %s763 = ssub.s32 16, 16
          %764 = vsyncadd [#allocation24], %s763
          %s766 = sshll.u32 [#allocation23], 4
          %s767 = int_to_ptr.vmem [resolvable:$true] %s766
          %769 = dma.hbm_to_vmem [thread:$0]  %s14, 16, %s767, [#allocation24]
        $region60: #{tpu_custom_call.1} parent=11 // pred_fallthru
          _
        // Predicated region
        $region61: #{tpu_custom_call.1} parent=11 // pred_check
          %p770 = pneg %p398
        $region62: #{tpu_custom_call.1} parent=11 // pred_check_branch
          %772 = sbr.rel (%p770) target = $region64
        $region63: #{tpu_custom_call.1} parent=11 // pred_region
          %s774 = ssub.s32 16, 16
          %775 = vsyncadd [#allocation24], %s774
          %s777 = sshll.u32 [#allocation25], 4
          %s778 = int_to_ptr.vmem [resolvable:$true] %s777
          %780 = dma.hbm_to_vmem [thread:$0]  %s15, 16, %s778, [#allocation24]
        $region64: #{tpu_custom_call.1} parent=11 // pred_fallthru
          _
        // Predicated region
        $region65: #{tpu_custom_call.1} parent=11 // pred_check
          %p781 = pneg %p419
        $region66: #{tpu_custom_call.1} parent=11 // pred_check_branch
          %783 = sbr.rel (%p781) target = $region68
        $region67: #{tpu_custom_call.1} parent=11 // pred_region
          %s785 = ssub.s32 16, 16
          %786 = vsyncadd [#allocation27], %s785
          %s788 = sshll.u32 [#allocation26], 4
          %s789 = int_to_ptr.vmem [resolvable:$true] %s788
          %791 = dma.hbm_to_vmem [thread:$0]  %s16, 16, %s789, [#allocation27]
        $region68: #{tpu_custom_call.1} parent=11 // pred_fallthru
          _
        // Predicated region
        $region69: #{tpu_custom_call.1} parent=11 // pred_check
          %p792 = pneg %p440
        $region70: #{tpu_custom_call.1} parent=11 // pred_check_branch
          %794 = sbr.rel (%p792) target = $region72
        $region71: #{tpu_custom_call.1} parent=11 // pred_region
          _
        $region72: #{tpu_custom_call.1} parent=11 // pred_fallthru
          _
        // Predicated region
        $region73: #{tpu_custom_call.1} parent=11 // pred_check
          %p795 = pneg %p461
        $region74: #{tpu_custom_call.1} parent=11 // pred_check_branch
          %797 = sbr.rel (%p795) target = $region76
        $region75: #{tpu_custom_call.1} parent=11 // pred_region
          %s799 = ssub.s32 16, 16
          %800 = vsyncadd [#allocation27], %s799
          %s802 = sshll.u32 [#allocation28], 4
          %s803 = int_to_ptr.vmem [resolvable:$true] %s802
          %805 = dma.hbm_to_vmem [thread:$0]  %s18, 16, %s803, [#allocation27]
        $region76: #{tpu_custom_call.1} parent=11 // pred_fallthru
          _
        // Predicated region
        $region77: #{tpu_custom_call.1} parent=11 // pred_check
          %p806 = pneg %p482
        $region78: #{tpu_custom_call.1} parent=11 // pred_check_branch
          %808 = sbr.rel (%p806) target = $region80
        $region79: #{tpu_custom_call.1} parent=11 // pred_region
          _
        $region80: #{tpu_custom_call.1} parent=11 // pred_fallthru
          _
        // Predicated region
        $region81: #{tpu_custom_call.1} parent=11 // pred_check
          %p809 = pneg %p503
        $region82: #{tpu_custom_call.1} parent=11 // pred_check_branch
          %811 = sbr.rel (%p809) target = $region84
        $region83: #{tpu_custom_call.1} parent=11 // pred_region
          _
        $region84: #{tpu_custom_call.1} parent=11 // pred_fallthru
          _
        // Predicated region
        $region85: #{tpu_custom_call.1} parent=11 // pred_check
          %p812 = pneg %p524
        $region86: #{tpu_custom_call.1} parent=11 // pred_check_branch
          %814 = sbr.rel (%p812) target = $region88
        $region87: #{tpu_custom_call.1} parent=11 // pred_region
          _
        $region88: #{tpu_custom_call.1} parent=11 // pred_fallthru
          _
        // Predicated region
        $region89: #{tpu_custom_call.1} parent=11 // pred_check
          %p815 = pneg %p545
        $region90: #{tpu_custom_call.1} parent=11 // pred_check_branch
          %817 = sbr.rel (%p815) target = $region92
        $region91: #{tpu_custom_call.1} parent=11 // pred_region
          _
        $region92: #{tpu_custom_call.1} parent=11 // pred_fallthru
          _
        // Predicated region
        $region93: #{tpu_custom_call.1} parent=11 // pred_check
          %p818 = pneg %p566
        $region94: #{tpu_custom_call.1} parent=11 // pred_check_branch
          %820 = sbr.rel (%p818) target = $region96
        $region95: #{tpu_custom_call.1} parent=11 // pred_region
          _
        $region96: #{tpu_custom_call.1} parent=11 // pred_fallthru
          _
        // Predicated region
        $region97: #{tpu_custom_call.1} parent=11 // pred_check
          %p821 = pneg %p587
        $region98: #{tpu_custom_call.1} parent=11 // pred_check_branch
          %823 = sbr.rel (%p821) target = $region100
        $region99: #{tpu_custom_call.1} parent=11 // pred_region
          _
        $region100: #{tpu_custom_call.1} parent=11 // pred_fallthru
          _
      $region12: #{tpu_custom_call.1} parent=5 // pred_fallthru
        _
      %p824 = scmp.lt.s32.totalorder %s47, 2
      // Predicated region
      $region101: #{tpu_custom_call.1} parent=5 // pred_check
        %p825 = pneg %p824
      $region102: #{tpu_custom_call.1} parent=5 // pred_check_branch
        %827 = sbr.rel (%p825) target = $region104
      $region103: #{tpu_custom_call.1} parent=5 // pred_region
        // Predicated region
        $region105: #{tpu_custom_call.1} parent=103 // pred_check
          %p828 = pneg %p67
        $region106: #{tpu_custom_call.1} parent=103 // pred_check_branch
          %830 = sbr.rel (%p828) target = $region108
        $region107: #{tpu_custom_call.1} parent=103 // pred_region
          %p831 = scmp.lt.s32.totalorder %s47, 1
          %s832 = scalar_select %p831, %s47, 1
          %s833 = smul.addr %s832, 4
          %s834 = smul.addr %s833, 4
          %s835 = scalar_lea.vmem %s0, %s834
        $region108: #{tpu_custom_call.1} parent=103 // pred_fallthru
          _
        // Predicated region
        $region109: #{tpu_custom_call.1} parent=103 // pred_check
          %p836 = pneg %p93
        $region110: #{tpu_custom_call.1} parent=103 // pred_check_branch
          %838 = sbr.rel (%p836) target = $region112
        $region111: #{tpu_custom_call.1} parent=103 // pred_region
          %s839 = sand.u32 %s83, 1
          %s840 = scalar_lea.sflag [#allocation3], %s839
          %s841 = sand.u32 %s83, 1
          %s842 = smul.addr %s841, 16
          %s843 = scalar_lea.vmem [#allocation2], %s842
          %s845 = ssub.s32 256, 256
          %846 = vsyncadd %s840, %s845
          %s847 = smul.addr %s47, 4
          %s848 = smul.addr %s847, 64
          %s849 = scalar_lea.hbm %s1, %s848
          %s850 = sshll.u32 %s843, 4
          %s851 = int_to_ptr.vmem [resolvable:$true] %s850
          %856 = dma.hbm_to_vmem [thread:$0]  %s849, 256, %s851, %s840, 64, 64, 4
        $region112: #{tpu_custom_call.1} parent=103 // pred_fallthru
          _
        // Predicated region
        $region113: #{tpu_custom_call.1} parent=103 // pred_check
          %p857 = pneg %p119
        $region114: #{tpu_custom_call.1} parent=103 // pred_check_branch
          %859 = sbr.rel (%p857) target = $region116
        $region115: #{tpu_custom_call.1} parent=103 // pred_region
          %s860 = sand.u32 %s47, 1
          %s861 = scalar_lea.sflag [#allocation6], %s860
          %s862 = sand.u32 %s109, 1
          %s863 = smul.addr %s862, 8
          %s864 = scalar_lea.vmem [#allocation5], %s863
          %s866 = ssub.s32 128, 128
          %867 = vsyncadd %s861, %s866
          %s868 = smul.addr %s47, 128
          %s869 = scalar_lea.hbm %s2, %s868
          %s871 = sshll.u32 %s864, 4
          %s872 = int_to_ptr.vmem [resolvable:$true] %s871
          %874 = dma.hbm_to_vmem [thread:$0]  %s869, 128, %s872, %s861
        $region116: #{tpu_custom_call.1} parent=103 // pred_fallthru
          _
      $region104: #{tpu_custom_call.1} parent=5 // pred_fallthru
        _
      %p875 = scmp.le.s32.totalorder 1, %s47
      %p876 = scmp.lt.s32.totalorder %s47, 3
      %p877 = pnand %p875, %p876
      %p878 = pneg %p877
      // Predicated region
      $region117: #{tpu_custom_call.1} parent=5 // pred_check
        _
      $region118: #{tpu_custom_call.1} parent=5 // pred_check_branch
        %880 = sbr.rel (%p877) target = $region120
      $region119: #{tpu_custom_call.1} parent=5 // pred_region
        %s881 = ssub.s32 %s47, 1
        %s882 = sand.u32 %s86, 1
        %s883 = scalar_lea.sflag [#allocation3], %s882
        %s884 = sand.u32 %s86, 1
        %s885 = smul.addr %s884, 16
        %s886 = scalar_lea.vmem [#allocation2], %s885
        // Predicated region
        $region121: #{tpu_custom_call.1} parent=119 // pred_check
          %p887 = pneg %p99
        $region122: #{tpu_custom_call.1} parent=119 // pred_check_branch
          %889 = sbr.rel (%p887) target = $region124
        $region123: #{tpu_custom_call.1} parent=119 // pred_region
          %890 = dma.done %s883, 256
        $region124: #{tpu_custom_call.1} parent=119 // pred_fallthru
          _
        %s891 = sand.u32 %s52, 1
        %s892 = scalar_lea.sflag [#allocation6], %s891
        %s893 = sand.u32 %s112, 1
        %s894 = smul.addr %s893, 8
        %s895 = scalar_lea.vmem [#allocation5], %s894
        // Predicated region
        $region125: #{tpu_custom_call.1} parent=119 // pred_check
          %p896 = pneg %p125
        $region126: #{tpu_custom_call.1} parent=119 // pred_check_branch
          %898 = sbr.rel (%p896) target = $region128
        $region127: #{tpu_custom_call.1} parent=119 // pred_region
          %899 = dma.done %s892, 128
        $region128: #{tpu_custom_call.1} parent=119 // pred_fallthru
          _
        // Predicated region
        $region129: #{tpu_custom_call.1} parent=119 // pred_check
          %p900 = pneg %p146
        $region130: #{tpu_custom_call.1} parent=119 // pred_check_branch
          %902 = sbr.rel (%p900) target = $region132
        $region131: #{tpu_custom_call.1} parent=119 // pred_region
          %903 = dma.done [#allocation6], 256
        $region132: #{tpu_custom_call.1} parent=119 // pred_fallthru
          _
        // Predicated region
        $region133: #{tpu_custom_call.1} parent=119 // pred_check
          %p904 = pneg %p167
        $region134: #{tpu_custom_call.1} parent=119 // pred_check_branch
          %906 = sbr.rel (%p904) target = $region136
        $region135: #{tpu_custom_call.1} parent=119 // pred_region
          %907 = dma.done [#allocation9], 16
        $region136: #{tpu_custom_call.1} parent=119 // pred_fallthru
          _
        // Predicated region
        $region137: #{tpu_custom_call.1} parent=119 // pred_check
          %p908 = pneg %p188
        $region138: #{tpu_custom_call.1} parent=119 // pred_check_branch
          %910 = sbr.rel (%p908) target = $region140
        $region139: #{tpu_custom_call.1} parent=119 // pred_region
          %911 = dma.done [#allocation9], 256
        $region140: #{tpu_custom_call.1} parent=119 // pred_fallthru
          _
        // Predicated region
        $region141: #{tpu_custom_call.1} parent=119 // pred_check
          %p912 = pneg %p209
        $region142: #{tpu_custom_call.1} parent=119 // pred_check_branch
          %914 = sbr.rel (%p912) target = $region144
        $region143: #{tpu_custom_call.1} parent=119 // pred_region
          %915 = dma.done [#allocation12], 16
        $region144: #{tpu_custom_call.1} parent=119 // pred_fallthru
          _
        // Predicated region
        $region145: #{tpu_custom_call.1} parent=119 // pred_check
          %p916 = pneg %p230
        $region146: #{tpu_custom_call.1} parent=119 // pred_check_branch
          %918 = sbr.rel (%p916) target = $region148
        $region147: #{tpu_custom_call.1} parent=119 // pred_region
          %919 = dma.done [#allocation12], 256
        $region148: #{tpu_custom_call.1} parent=119 // pred_fallthru
          _
        // Predicated region
        $region149: #{tpu_custom_call.1} parent=119 // pred_check
          %p920 = pneg %p251
        $region150: #{tpu_custom_call.1} parent=119 // pred_check_branch
          %922 = sbr.rel (%p920) target = $region152
        $region151: #{tpu_custom_call.1} parent=119 // pred_region
          %923 = dma.done [#allocation15], 16
        $region152: #{tpu_custom_call.1} parent=119 // pred_fallthru
          _
        // Predicated region
        $region153: #{tpu_custom_call.1} parent=119 // pred_check
          %p924 = pneg %p272
        $region154: #{tpu_custom_call.1} parent=119 // pred_check_branch
          %926 = sbr.rel (%p924) target = $region156
        $region155: #{tpu_custom_call.1} parent=119 // pred_region
          %927 = dma.done [#allocation15], 256
        $region156: #{tpu_custom_call.1} parent=119 // pred_fallthru
          _
        // Predicated region
        $region157: #{tpu_custom_call.1} parent=119 // pred_check
          %p928 = pneg %p293
        $region158: #{tpu_custom_call.1} parent=119 // pred_check_branch
          %930 = sbr.rel (%p928) target = $region160
        $region159: #{tpu_custom_call.1} parent=119 // pred_region
          %931 = dma.done [#allocation18], 16
        $region160: #{tpu_custom_call.1} parent=119 // pred_fallthru
          _
        // Predicated region
        $region161: #{tpu_custom_call.1} parent=119 // pred_check
          %p932 = pneg %p314
        $region162: #{tpu_custom_call.1} parent=119 // pred_check_branch
          %934 = sbr.rel (%p932) target = $region164
        $region163: #{tpu_custom_call.1} parent=119 // pred_region
          %935 = dma.done [#allocation18], 16
        $region164: #{tpu_custom_call.1} parent=119 // pred_fallthru
          _
        // Predicated region
        $region165: #{tpu_custom_call.1} parent=119 // pred_check
          %p936 = pneg %p335
        $region166: #{tpu_custom_call.1} parent=119 // pred_check_branch
          %938 = sbr.rel (%p936) target = $region168
        $region167: #{tpu_custom_call.1} parent=119 // pred_region
          %939 = dma.done [#allocation21], 16
        $region168: #{tpu_custom_call.1} parent=119 // pred_fallthru
          _
        // Predicated region
        $region169: #{tpu_custom_call.1} parent=119 // pred_check
          %p940 = pneg %p356
        $region170: #{tpu_custom_call.1} parent=119 // pred_check_branch
          %942 = sbr.rel (%p940) target = $region172
        $region171: #{tpu_custom_call.1} parent=119 // pred_region
          %943 = dma.done [#allocation21], 256
        $region172: #{tpu_custom_call.1} parent=119 // pred_fallthru
          _
        // Predicated region
        $region173: #{tpu_custom_call.1} parent=119 // pred_check
          %p944 = pneg %p377
        $region174: #{tpu_custom_call.1} parent=119 // pred_check_branch
          %946 = sbr.rel (%p944) target = $region176
        $region175: #{tpu_custom_call.1} parent=119 // pred_region
          %947 = dma.done [#allocation24], 16
        $region176: #{tpu_custom_call.1} parent=119 // pred_fallthru
          _
        // Predicated region
        $region177: #{tpu_custom_call.1} parent=119 // pred_check
          %p948 = pneg %p398
        $region178: #{tpu_custom_call.1} parent=119 // pred_check_branch
          %950 = sbr.rel (%p948) target = $region180
        $region179: #{tpu_custom_call.1} parent=119 // pred_region
          %951 = dma.done [#allocation24], 16
        $region180: #{tpu_custom_call.1} parent=119 // pred_fallthru
          _
        // Predicated region
        $region181: #{tpu_custom_call.1} parent=119 // pred_check
          %p952 = pneg %p419
        $region182: #{tpu_custom_call.1} parent=119 // pred_check_branch
          %954 = sbr.rel (%p952) target = $region184
        $region183: #{tpu_custom_call.1} parent=119 // pred_region
          %955 = dma.done [#allocation27], 16
        $region184: #{tpu_custom_call.1} parent=119 // pred_fallthru
          _
        // Predicated region
        $region185: #{tpu_custom_call.1} parent=119 // pred_check
          %p956 = pneg %p461
        $region186: #{tpu_custom_call.1} parent=119 // pred_check_branch
          %958 = sbr.rel (%p956) target = $region188
        $region187: #{tpu_custom_call.1} parent=119 // pred_region
          %959 = dma.done [#allocation27], 16
        $region188: #{tpu_custom_call.1} parent=119 // pred_fallthru
          _
        %p960 = scmp.lt.s32.totalorder %s52, 1
        %s961 = scalar_select %p960, %s52, 1
        %s962 = smul.addr %s961, 4
        %s963 = smul.addr %s962, 4
        %s964 = scalar_lea.vmem %s0, %s963
        %p965 = pneg %p73
        %p966 = pneg %p70
        %s967 = sand.u32 %s86, 1
        %s968 = scalar_lea.sflag [#allocation3], %s967
        %s969 = sand.u32 %s86, 1
        %s970 = smul.addr %s969, 16
        %s971 = scalar_lea.vmem [#allocation2], %s970
        %p972 = pneg %p99
        %p973 = pneg %p96
        %s974 = sand.u32 %s52, 1
        %s975 = scalar_lea.sflag [#allocation6], %s974
        %s976 = sand.u32 %s112, 1
        %s977 = smul.addr %s976, 8
        %s978 = scalar_lea.vmem [#allocation5], %s977
        %p979 = pneg %p125
        %p980 = pneg %p122
        %p981 = pneg %p146
        %p982 = pneg %p143
        %p983 = pneg %p167
        %p984 = pneg %p164
        %p985 = pneg %p188
        %p986 = pneg %p185
        %p987 = pneg %p209
        %p988 = pneg %p206
        %p989 = pneg %p230
        %p990 = pneg %p227
        %p991 = pneg %p251
        %p992 = pneg %p248
        %p993 = pneg %p272
        %p994 = pneg %p269
        %p995 = pneg %p293
        %p996 = pneg %p290
        %p997 = pneg %p314
        %p998 = pneg %p311
        %p999 = pneg %p335
        %p1000 = pneg %p332
        %p1001 = pneg %p356
        %p1002 = pneg %p353
        %p1003 = pneg %p377
        %p1004 = pneg %p374
        %p1005 = pneg %p398
        %p1006 = pneg %p395
        %p1007 = pneg %p419
        %p1008 = pneg %p416
        %p1009 = pneg %p440
        %p1010 = pneg %p437
        %p1011 = pneg %p461
        %p1012 = pneg %p458
        %p1013 = pneg %p482
        %p1014 = pneg %p479
        %p1015 = pneg %p503
        %p1016 = pneg %p500
        %p1017 = pneg %p524
        %p1018 = pneg %p521
        %p1019 = pneg %p545
        %p1020 = pneg %p542
        %p1021 = pneg %p566
        %p1022 = pneg %p563
        %p1023 = pneg %p587
        %p1024 = pneg %p584
        %p1025 = pneg %p613
        %p1026 = pneg %p610
        %s1027 = sand.u32 %s600, 1
        %s1028 = scalar_lea.sflag [#allocation4], %s1027
        %s1029 = sand.u32 %s600, 1
        %s1030 = smul.addr %s1029, 8
        %s1031 = scalar_lea.vmem [#allocation29], %s1030
        %p1032 = scmp.lt.s32.totalorder %s52, 1
        %s1033 = scalar_select %p1032, %s52, 1
        %s1034 = smul.addr %s1033, 4
        %s1035 = smul.addr %s1034, 4
        %s1036 = scalar_lea.vmem %s0, %s1035
        %v1038 = vld [vmem:[%s1036] sm:$0xf]
        %v1039 = vld [vmem:[%s1036 + $0x4] sm:$0xf]
        %v1040 = vld [vmem:[%s1036 + $0x8] sm:$0xf]
        %v1041 = vld [vmem:[%s1036 + $0xc] sm:$0xf]
        %v1042 = vld [vmem:[%s886] sm:$0xf]
        %v1043 = vld [vmem:[%s886 + $0x4] sm:$0xf]
        %v1044 = vld [vmem:[%s886 + $0x8] sm:$0xf]
        %v1045 = vld [vmem:[%s886 + $0xc] sm:$0xf]
        %v1046 = vld [vmem:[%s895] sm:$0xff]
        %v1047 = vld [vmem:[#allocation7] sm:$0xf]
        %v1048 = vld [vmem:[#allocation7 + $0x4] sm:$0xf]
        %v1049 = vld [vmem:[#allocation7 + $0x8] sm:$0xf]
        %v1050 = vld [vmem:[#allocation7 + $0xc] sm:$0xf]
        %v1051 = vld [vmem:[#allocation8] sm:$0x1]
        %v1053 = vlaneseq
        %v1054 = vshrl.u32 %v1053, 7
        %v1055 = vsub.s32 0, %v1054
        %v1056 = vrot.slane %v1051, %v1055
        %vm1058 = vcmask 64512
        %v1060 = vsel %vm1058, %v1038, 0
        %vm1062 = vcmask 1043456
        %v1064 = vsel %vm1062, %v1047, 0
        %1066 = vmatprep.subr.bf16.mxu0 0
        %1067 = vmatpush1.bf16.msra.mxu0 0
        %1068 = vmatprep.subr.bf16.mxu0 0
        %1069 = vmatpush1.bf16.msra.mxu0 0
        %1070 = vmatprep.subr.bf16.mxu0 0
        %1071 = vmatpush1.bf16.msra.mxu0 0
        %1072 = vmatprep.subr.bf16.mxu0 0
        %1073 = vmatpush1.bf16.msra.mxu0 0
        %1074 = vmatprep.subr.bf16.mxu0 0
        %1075 = vmatpush1.bf16.msra.mxu0 0
        %1076 = vmatprep.subr.bf16.mxu0 0
        %1077 = vmatpush1.bf16.msra.mxu0 0
        %1078 = vmatprep.subr.bf16.mxu0 0
        %1079 = vmatpush1.bf16.msra.mxu0 0
        %1080 = vmatprep.subr.bf16.mxu0 0
        %1081 = vmatpush1.bf16.msra.mxu0 %v1064
        %1082 = vmatprep.subr.bf16.mxu0 0
        %1083 = vmatpush2.bf16.msra.mxu0 0
        %1084 = vmatprep.subr.bf16.mxu0 0
        %1085 = vmatpush2.bf16.msra.mxu0 0
        %1086 = vmatprep.subr.bf16.mxu0 0
        %1087 = vmatpush2.bf16.msra.mxu0 0
        %1088 = vmatprep.subr.bf16.mxu0 0
        %1089 = vmatpush2.bf16.msra.mxu0 0
        %1090 = vmatprep.subr.bf16.mxu0 0
        %1091 = vmatpush2.bf16.msra.mxu0 0
        %1092 = vmatprep.subr.bf16.mxu0 0
        %1093 = vmatpush2.bf16.msra.mxu0 0
        %1094 = vmatprep.subr.bf16.mxu0 0
        %1095 = vmatpush2.bf16.msra.mxu0 0
        %1096 = vmatprep.subr.bf16.mxu0 0
        %1097 = vmatpush2.bf16.msra.mxu0 0
        %1098 = vmatprep.mubr.bf16.mxu0 0
        %1099 = vmatmul.mubr.bf16.gmra.mxu0 %v1060
        %v1100 = vpop.f32.mrf.mxu0
        %v1101 = vadd.f32 %v1056, %v1100
        %v1102 = vpop.f32.mrf.mxu0
        %v1103 = vpop.f32.mrf.mxu0
        %v1104 = vpop.f32.mrf.mxu0
        %1105 = vdwg.mxu0
        %v1107 = vsel %vm1058, %v1039, 0
        %v1110 = vsel %vm1062, %v1048, 0
        %1112 = vmatprep.subr.bf16.mxu0 0
        %1113 = vmatpush1.bf16.msra.mxu0 0
        %1114 = vmatprep.subr.bf16.mxu0 0
        %1115 = vmatpush1.bf16.msra.mxu0 0
        %1116 = vmatprep.subr.bf16.mxu0 0
        %1117 = vmatpush1.bf16.msra.mxu0 0
        %1118 = vmatprep.subr.bf16.mxu0 0
        %1119 = vmatpush1.bf16.msra.mxu0 0
        %1120 = vmatprep.subr.bf16.mxu0 0
        %1121 = vmatpush1.bf16.msra.mxu0 0
        %1122 = vmatprep.subr.bf16.mxu0 0
        %1123 = vmatpush1.bf16.msra.mxu0 0
        %1124 = vmatprep.subr.bf16.mxu0 0
        %1125 = vmatpush1.bf16.msra.mxu0 0
        %1126 = vmatprep.subr.bf16.mxu0 0
        %1127 = vmatpush1.bf16.msra.mxu0 %v1110
        %1128 = vmatprep.subr.bf16.mxu0 0
        %1129 = vmatpush2.bf16.msra.mxu0 0
        %1130 = vmatprep.subr.bf16.mxu0 0
        %1131 = vmatpush2.bf16.msra.mxu0 0
        %1132 = vmatprep.subr.bf16.mxu0 0
        %1133 = vmatpush2.bf16.msra.mxu0 0
        %1134 = vmatprep.subr.bf16.mxu0 0
        %1135 = vmatpush2.bf16.msra.mxu0 0
        %1136 = vmatprep.subr.bf16.mxu0 0
        %1137 = vmatpush2.bf16.msra.mxu0 0
        %1138 = vmatprep.subr.bf16.mxu0 0
        %1139 = vmatpush2.bf16.msra.mxu0 0
        %1140 = vmatprep.subr.bf16.mxu0 0
        %1141 = vmatpush2.bf16.msra.mxu0 0
        %1142 = vmatprep.subr.bf16.mxu0 0
        %1143 = vmatpush2.bf16.msra.mxu0 0
        %1144 = vmatprep.mubr.bf16.mxu0 0
        %1145 = vmatmul.mubr.bf16.gmra.mxu0 %v1107
        %v1146 = vpop.f32.mrf.mxu0
        %v1147 = vadd.f32 %v1056, %v1146
        %v1148 = vpop.f32.mrf.mxu0
        %v1149 = vpop.f32.mrf.mxu0
        %v1150 = vpop.f32.mrf.mxu0
        %1151 = vdwg.mxu0
        %v1153 = vsel %vm1058, %v1040, 0
        %v1156 = vsel %vm1062, %v1049, 0
        %1158 = vmatprep.subr.bf16.mxu0 0
        %1159 = vmatpush1.bf16.msra.mxu0 0
        %1160 = vmatprep.subr.bf16.mxu0 0
        %1161 = vmatpush1.bf16.msra.mxu0 0
        %1162 = vmatprep.subr.bf16.mxu0 0
        %1163 = vmatpush1.bf16.msra.mxu0 0
        %1164 = vmatprep.subr.bf16.mxu0 0
        %1165 = vmatpush1.bf16.msra.mxu0 0
        %1166 = vmatprep.subr.bf16.mxu0 0
        %1167 = vmatpush1.bf16.msra.mxu0 0
        %1168 = vmatprep.subr.bf16.mxu0 0
        %1169 = vmatpush1.bf16.msra.mxu0 0
        %1170 = vmatprep.subr.bf16.mxu0 0
        %1171 = vmatpush1.bf16.msra.mxu0 0
        %1172 = vmatprep.subr.bf16.mxu0 0
        %1173 = vmatpush1.bf16.msra.mxu0 %v1156
        %1174 = vmatprep.subr.bf16.mxu0 0
        %1175 = vmatpush2.bf16.msra.mxu0 0
        %1176 = vmatprep.subr.bf16.mxu0 0
        %1177 = vmatpush2.bf16.msra.mxu0 0
        %1178 = vmatprep.subr.bf16.mxu0 0
        %1179 = vmatpush2.bf16.msra.mxu0 0
        %1180 = vmatprep.subr.bf16.mxu0 0
        %1181 = vmatpush2.bf16.msra.mxu0 0
        %1182 = vmatprep.subr.bf16.mxu0 0
        %1183 = vmatpush2.bf16.msra.mxu0 0
        %1184 = vmatprep.subr.bf16.mxu0 0
        %1185 = vmatpush2.bf16.msra.mxu0 0
        %1186 = vmatprep.subr.bf16.mxu0 0
        %1187 = vmatpush2.bf16.msra.mxu0 0
        %1188 = vmatprep.subr.bf16.mxu0 0
        %1189 = vmatpush2.bf16.msra.mxu0 0
        %1190 = vmatprep.mubr.bf16.mxu0 0
        %1191 = vmatmul.mubr.bf16.gmra.mxu0 %v1153
        %v1192 = vpop.f32.mrf.mxu0
        %v1193 = vadd.f32 %v1056, %v1192
        %v1194 = vpop.f32.mrf.mxu0
        %v1195 = vpop.f32.mrf.mxu0
        %v1196 = vpop.f32.mrf.mxu0
        %1197 = vdwg.mxu0
        %v1199 = vsel %vm1058, %v1041, 0
        %v1202 = vsel %vm1062, %v1050, 0
        %1204 = vmatprep.subr.bf16.mxu0 0
        %1205 = vmatpush1.bf16.msra.mxu0 0
        %1206 = vmatprep.subr.bf16.mxu0 0
        %1207 = vmatpush1.bf16.msra.mxu0 0
        %1208 = vmatprep.subr.bf16.mxu0 0
        %1209 = vmatpush1.bf16.msra.mxu0 0
        %1210 = vmatprep.subr.bf16.mxu0 0
        %1211 = vmatpush1.bf16.msra.mxu0 0
        %1212 = vmatprep.subr.bf16.mxu0 0
        %1213 = vmatpush1.bf16.msra.mxu0 0
        %1214 = vmatprep.subr.bf16.mxu0 0
        %1215 = vmatpush1.bf16.msra.mxu0 0
        %1216 = vmatprep.subr.bf16.mxu0 0
        %1217 = vmatpush1.bf16.msra.mxu0 0
        %1218 = vmatprep.subr.bf16.mxu0 0
        %1219 = vmatpush1.bf16.msra.mxu0 %v1202
        %1220 = vmatprep.subr.bf16.mxu0 0
        %1221 = vmatpush2.bf16.msra.mxu0 0
        %1222 = vmatprep.subr.bf16.mxu0 0
        %1223 = vmatpush2.bf16.msra.mxu0 0
        %1224 = vmatprep.subr.bf16.mxu0 0
        %1225 = vmatpush2.bf16.msra.mxu0 0
        %1226 = vmatprep.subr.bf16.mxu0 0
        %1227 = vmatpush2.bf16.msra.mxu0 0
        %1228 = vmatprep.subr.bf16.mxu0 0
        %1229 = vmatpush2.bf16.msra.mxu0 0
        %1230 = vmatprep.subr.bf16.mxu0 0
        %1231 = vmatpush2.bf16.msra.mxu0 0
        %1232 = vmatprep.subr.bf16.mxu0 0
        %1233 = vmatpush2.bf16.msra.mxu0 0
        %1234 = vmatprep.subr.bf16.mxu0 0
        %1235 = vmatpush2.bf16.msra.mxu0 0
        %1236 = vmatprep.mubr.bf16.mxu0 0
        %1237 = vmatmul.mubr.bf16.gmra.mxu0 %v1199
        %v1238 = vpop.f32.mrf.mxu0
        %v1239 = vadd.f32 %v1056, %v1238
        %v1240 = vpop.f32.mrf.mxu0
        %v1241 = vpop.f32.mrf.mxu0
        %v1242 = vpop.f32.mrf.mxu0
        %1243 = vdwg.mxu0
        %v1244 = vld [vmem:[#allocation10] sm:$0xf]
        %v1245 = vld [vmem:[#allocation10 + $0x4] sm:$0xf]
        %v1246 = vld [vmem:[#allocation10 + $0x8] sm:$0xf]
        %v1247 = vld [vmem:[#allocation10 + $0xc] sm:$0xf]
        %v1248 = vld [vmem:[#allocation11] sm:$0x1]
        %v1250 = vlaneseq
        %v1251 = vshrl.u32 %v1250, 7
        %v1252 = vsub.s32 0, %v1251
        %v1253 = vrot.slane %v1248, %v1252
        %v1256 = vsel %vm1062, %v1244, 0
        %1258 = vmatprep.subr.bf16.mxu0 0
        %1259 = vmatpush1.bf16.msra.mxu0 0
        %1260 = vmatprep.subr.bf16.mxu0 0
        %1261 = vmatpush1.bf16.msra.mxu0 0
        %1262 = vmatprep.subr.bf16.mxu0 0
        %1263 = vmatpush1.bf16.msra.mxu0 0
        %1264 = vmatprep.subr.bf16.mxu0 0
        %1265 = vmatpush1.bf16.msra.mxu0 0
        %1266 = vmatprep.subr.bf16.mxu0 0
        %1267 = vmatpush1.bf16.msra.mxu0 0
        %1268 = vmatprep.subr.bf16.mxu0 0
        %1269 = vmatpush1.bf16.msra.mxu0 0
        %1270 = vmatprep.subr.bf16.mxu0 0
        %1271 = vmatpush1.bf16.msra.mxu0 0
        %1272 = vmatprep.subr.bf16.mxu0 0
        %1273 = vmatpush1.bf16.msra.mxu0 %v1256
        %1274 = vmatprep.subr.bf16.mxu0 0
        %1275 = vmatpush2.bf16.msra.mxu0 0
        %1276 = vmatprep.subr.bf16.mxu0 0
        %1277 = vmatpush2.bf16.msra.mxu0 0
        %1278 = vmatprep.subr.bf16.mxu0 0
        %1279 = vmatpush2.bf16.msra.mxu0 0
        %1280 = vmatprep.subr.bf16.mxu0 0
        %1281 = vmatpush2.bf16.msra.mxu0 0
        %1282 = vmatprep.subr.bf16.mxu0 0
        %1283 = vmatpush2.bf16.msra.mxu0 0
        %1284 = vmatprep.subr.bf16.mxu0 0
        %1285 = vmatpush2.bf16.msra.mxu0 0
        %1286 = vmatprep.subr.bf16.mxu0 0
        %1287 = vmatpush2.bf16.msra.mxu0 0
        %1288 = vmatprep.subr.bf16.mxu0 0
        %1289 = vmatpush2.bf16.msra.mxu0 0
        %1290 = vmatprep.mubr.bf16.mxu0 0
        %1291 = vmatmul.mubr.bf16.gmra.mxu0 %v1060
        %v1292 = vpop.f32.mrf.mxu0
        %v1293 = vadd.f32 %v1253, %v1292
        %v1294 = vpop.f32.mrf.mxu0
        %v1295 = vpop.f32.mrf.mxu0
        %v1296 = vpop.f32.mrf.mxu0
        %1297 = vdwg.mxu0
        %v1299 = vsel %vm1062, %v1245, 0
        %1301 = vmatprep.subr.bf16.mxu0 0
        %1302 = vmatpush1.bf16.msra.mxu0 0
        %1303 = vmatprep.subr.bf16.mxu0 0
        %1304 = vmatpush1.bf16.msra.mxu0 0
        %1305 = vmatprep.subr.bf16.mxu0 0
        %1306 = vmatpush1.bf16.msra.mxu0 0
        %1307 = vmatprep.subr.bf16.mxu0 0
        %1308 = vmatpush1.bf16.msra.mxu0 0
        %1309 = vmatprep.subr.bf16.mxu0 0
        %1310 = vmatpush1.bf16.msra.mxu0 0
        %1311 = vmatprep.subr.bf16.mxu0 0
        %1312 = vmatpush1.bf16.msra.mxu0 0
        %1313 = vmatprep.subr.bf16.mxu0 0
        %1314 = vmatpush1.bf16.msra.mxu0 0
        %1315 = vmatprep.subr.bf16.mxu0 0
        %1316 = vmatpush1.bf16.msra.mxu0 %v1299
        %1317 = vmatprep.subr.bf16.mxu0 0
        %1318 = vmatpush2.bf16.msra.mxu0 0
        %1319 = vmatprep.subr.bf16.mxu0 0
        %1320 = vmatpush2.bf16.msra.mxu0 0
        %1321 = vmatprep.subr.bf16.mxu0 0
        %1322 = vmatpush2.bf16.msra.mxu0 0
        %1323 = vmatprep.subr.bf16.mxu0 0
        %1324 = vmatpush2.bf16.msra.mxu0 0
        %1325 = vmatprep.subr.bf16.mxu0 0
        %1326 = vmatpush2.bf16.msra.mxu0 0
        %1327 = vmatprep.subr.bf16.mxu0 0
        %1328 = vmatpush2.bf16.msra.mxu0 0
        %1329 = vmatprep.subr.bf16.mxu0 0
        %1330 = vmatpush2.bf16.msra.mxu0 0
        %1331 = vmatprep.subr.bf16.mxu0 0
        %1332 = vmatpush2.bf16.msra.mxu0 0
        %1333 = vmatprep.mubr.bf16.mxu0 0
        %1334 = vmatmul.mubr.bf16.gmra.mxu0 %v1107
        %v1335 = vpop.f32.mrf.mxu0
        %v1336 = vadd.f32 %v1253, %v1335
        %v1337 = vpop.f32.mrf.mxu0
        %v1338 = vpop.f32.mrf.mxu0
        %v1339 = vpop.f32.mrf.mxu0
        %1340 = vdwg.mxu0
        %v1342 = vsel %vm1062, %v1246, 0
        %1344 = vmatprep.subr.bf16.mxu0 0
        %1345 = vmatpush1.bf16.msra.mxu0 0
        %1346 = vmatprep.subr.bf16.mxu0 0
        %1347 = vmatpush1.bf16.msra.mxu0 0
        %1348 = vmatprep.subr.bf16.mxu0 0
        %1349 = vmatpush1.bf16.msra.mxu0 0
        %1350 = vmatprep.subr.bf16.mxu0 0
        %1351 = vmatpush1.bf16.msra.mxu0 0
        %1352 = vmatprep.subr.bf16.mxu0 0
        %1353 = vmatpush1.bf16.msra.mxu0 0
        %1354 = vmatprep.subr.bf16.mxu0 0
        %1355 = vmatpush1.bf16.msra.mxu0 0
        %1356 = vmatprep.subr.bf16.mxu0 0
        %1357 = vmatpush1.bf16.msra.mxu0 0
        %1358 = vmatprep.subr.bf16.mxu0 0
        %1359 = vmatpush1.bf16.msra.mxu0 %v1342
        %1360 = vmatprep.subr.bf16.mxu0 0
        %1361 = vmatpush2.bf16.msra.mxu0 0
        %1362 = vmatprep.subr.bf16.mxu0 0
        %1363 = vmatpush2.bf16.msra.mxu0 0
        %1364 = vmatprep.subr.bf16.mxu0 0
        %1365 = vmatpush2.bf16.msra.mxu0 0
        %1366 = vmatprep.subr.bf16.mxu0 0
        %1367 = vmatpush2.bf16.msra.mxu0 0
        %1368 = vmatprep.subr.bf16.mxu0 0
        %1369 = vmatpush2.bf16.msra.mxu0 0
        %1370 = vmatprep.subr.bf16.mxu0 0
        %1371 = vmatpush2.bf16.msra.mxu0 0
        %1372 = vmatprep.subr.bf16.mxu0 0
        %1373 = vmatpush2.bf16.msra.mxu0 0
        %1374 = vmatprep.subr.bf16.mxu0 0
        %1375 = vmatpush2.bf16.msra.mxu0 0
        %1376 = vmatprep.mubr.bf16.mxu0 0
        %1377 = vmatmul.mubr.bf16.gmra.mxu0 %v1153
        %v1378 = vpop.f32.mrf.mxu0
        %v1379 = vadd.f32 %v1253, %v1378
        %v1380 = vpop.f32.mrf.mxu0
        %v1381 = vpop.f32.mrf.mxu0
        %v1382 = vpop.f32.mrf.mxu0
        %1383 = vdwg.mxu0
        %v1385 = vsel %vm1062, %v1247, 0
        %1387 = vmatprep.subr.bf16.mxu0 0
        %1388 = vmatpush1.bf16.msra.mxu0 0
        %1389 = vmatprep.subr.bf16.mxu0 0
        %1390 = vmatpush1.bf16.msra.mxu0 0
        %1391 = vmatprep.subr.bf16.mxu0 0
        %1392 = vmatpush1.bf16.msra.mxu0 0
        %1393 = vmatprep.subr.bf16.mxu0 0
        %1394 = vmatpush1.bf16.msra.mxu0 0
        %1395 = vmatprep.subr.bf16.mxu0 0
        %1396 = vmatpush1.bf16.msra.mxu0 0
        %1397 = vmatprep.subr.bf16.mxu0 0
        %1398 = vmatpush1.bf16.msra.mxu0 0
        %1399 = vmatprep.subr.bf16.mxu0 0
        %1400 = vmatpush1.bf16.msra.mxu0 0
        %1401 = vmatprep.subr.bf16.mxu0 0
        %1402 = vmatpush1.bf16.msra.mxu0 %v1385
        %1403 = vmatprep.subr.bf16.mxu0 0
        %1404 = vmatpush2.bf16.msra.mxu0 0
        %1405 = vmatprep.subr.bf16.mxu0 0
        %1406 = vmatpush2.bf16.msra.mxu0 0
        %1407 = vmatprep.subr.bf16.mxu0 0
        %1408 = vmatpush2.bf16.msra.mxu0 0
        %1409 = vmatprep.subr.bf16.mxu0 0
        %1410 = vmatpush2.bf16.msra.mxu0 0
        %1411 = vmatprep.subr.bf16.mxu0 0
        %1412 = vmatpush2.bf16.msra.mxu0 0
        %1413 = vmatprep.subr.bf16.mxu0 0
        %1414 = vmatpush2.bf16.msra.mxu0 0
        %1415 = vmatprep.subr.bf16.mxu0 0
        %1416 = vmatpush2.bf16.msra.mxu0 0
        %1417 = vmatprep.subr.bf16.mxu0 0
        %1418 = vmatpush2.bf16.msra.mxu0 0
        %1419 = vmatprep.mubr.bf16.mxu0 0
        %1420 = vmatmul.mubr.bf16.gmra.mxu0 %v1199
        %v1421 = vpop.f32.mrf.mxu0
        %v1422 = vadd.f32 %v1253, %v1421
        %v1423 = vpop.f32.mrf.mxu0
        %v1424 = vpop.f32.mrf.mxu0
        %v1425 = vpop.f32.mrf.mxu0
        %1426 = vdwg.mxu0
        %v1427 = vld [vmem:[#allocation13] sm:$0xf]
        %v1428 = vld [vmem:[#allocation13 + $0x4] sm:$0xf]
        %v1429 = vld [vmem:[#allocation13 + $0x8] sm:$0xf]
        %v1430 = vld [vmem:[#allocation13 + $0xc] sm:$0xf]
        %v1431 = vld [vmem:[#allocation14] sm:$0x1]
        %v1433 = vlaneseq
        %v1434 = vshrl.u32 %v1433, 7
        %v1435 = vsub.s32 0, %v1434
        %v1436 = vrot.slane %v1431, %v1435
        %v1439 = vsel %vm1058, %v1042, 0
        %v1442 = vsel %vm1062, %v1427, 0
        %1444 = vmatprep.subr.bf16.mxu0 0
        %1445 = vmatpush1.bf16.msra.mxu0 0
        %1446 = vmatprep.subr.bf16.mxu0 0
        %1447 = vmatpush1.bf16.msra.mxu0 0
        %1448 = vmatprep.subr.bf16.mxu0 0
        %1449 = vmatpush1.bf16.msra.mxu0 0
        %1450 = vmatprep.subr.bf16.mxu0 0
        %1451 = vmatpush1.bf16.msra.mxu0 0
        %1452 = vmatprep.subr.bf16.mxu0 0
        %1453 = vmatpush1.bf16.msra.mxu0 0
        %1454 = vmatprep.subr.bf16.mxu0 0
        %1455 = vmatpush1.bf16.msra.mxu0 0
        %1456 = vmatprep.subr.bf16.mxu0 0
        %1457 = vmatpush1.bf16.msra.mxu0 0
        %1458 = vmatprep.subr.bf16.mxu0 0
        %1459 = vmatpush1.bf16.msra.mxu0 %v1442
        %1460 = vmatprep.subr.bf16.mxu0 0
        %1461 = vmatpush2.bf16.msra.mxu0 0
        %1462 = vmatprep.subr.bf16.mxu0 0
        %1463 = vmatpush2.bf16.msra.mxu0 0
        %1464 = vmatprep.subr.bf16.mxu0 0
        %1465 = vmatpush2.bf16.msra.mxu0 0
        %1466 = vmatprep.subr.bf16.mxu0 0
        %1467 = vmatpush2.bf16.msra.mxu0 0
        %1468 = vmatprep.subr.bf16.mxu0 0
        %1469 = vmatpush2.bf16.msra.mxu0 0
        %1470 = vmatprep.subr.bf16.mxu0 0
        %1471 = vmatpush2.bf16.msra.mxu0 0
        %1472 = vmatprep.subr.bf16.mxu0 0
        %1473 = vmatpush2.bf16.msra.mxu0 0
        %1474 = vmatprep.subr.bf16.mxu0 0
        %1475 = vmatpush2.bf16.msra.mxu0 0
        %1476 = vmatprep.mubr.bf16.mxu0 0
        %1477 = vmatmul.mubr.bf16.gmra.mxu0 %v1439
        %v1478 = vpop.f32.mrf.mxu0
        %v1479 = vadd.f32 %v1436, %v1478
        %v1480 = vpop.f32.mrf.mxu0
        %v1481 = vpop.f32.mrf.mxu0
        %v1482 = vpop.f32.mrf.mxu0
        %1483 = vdwg.mxu0
        %v1485 = vsel %vm1058, %v1043, 0
        %v1488 = vsel %vm1062, %v1428, 0
        %1490 = vmatprep.subr.bf16.mxu0 0
        %1491 = vmatpush1.bf16.msra.mxu0 0
        %1492 = vmatprep.subr.bf16.mxu0 0
        %1493 = vmatpush1.bf16.msra.mxu0 0
        %1494 = vmatprep.subr.bf16.mxu0 0
        %1495 = vmatpush1.bf16.msra.mxu0 0
        %1496 = vmatprep.subr.bf16.mxu0 0
        %1497 = vmatpush1.bf16.msra.mxu0 0
        %1498 = vmatprep.subr.bf16.mxu0 0
        %1499 = vmatpush1.bf16.msra.mxu0 0
        %1500 = vmatprep.subr.bf16.mxu0 0
        %1501 = vmatpush1.bf16.msra.mxu0 0
        %1502 = vmatprep.subr.bf16.mxu0 0
        %1503 = vmatpush1.bf16.msra.mxu0 0
        %1504 = vmatprep.subr.bf16.mxu0 0
        %1505 = vmatpush1.bf16.msra.mxu0 %v1488
        %1506 = vmatprep.subr.bf16.mxu0 0
        %1507 = vmatpush2.bf16.msra.mxu0 0
        %1508 = vmatprep.subr.bf16.mxu0 0
        %1509 = vmatpush2.bf16.msra.mxu0 0
        %1510 = vmatprep.subr.bf16.mxu0 0
        %1511 = vmatpush2.bf16.msra.mxu0 0
        %1512 = vmatprep.subr.bf16.mxu0 0
        %1513 = vmatpush2.bf16.msra.mxu0 0
        %1514 = vmatprep.subr.bf16.mxu0 0
        %1515 = vmatpush2.bf16.msra.mxu0 0
        %1516 = vmatprep.subr.bf16.mxu0 0
        %1517 = vmatpush2.bf16.msra.mxu0 0
        %1518 = vmatprep.subr.bf16.mxu0 0
        %1519 = vmatpush2.bf16.msra.mxu0 0
        %1520 = vmatprep.subr.bf16.mxu0 0
        %1521 = vmatpush2.bf16.msra.mxu0 0
        %1522 = vmatprep.mubr.bf16.mxu0 0
        %1523 = vmatmul.mubr.bf16.gmra.mxu0 %v1485
        %v1524 = vpop.f32.mrf.mxu0
        %v1525 = vadd.f32 %v1436, %v1524
        %v1526 = vpop.f32.mrf.mxu0
        %v1527 = vpop.f32.mrf.mxu0
        %v1528 = vpop.f32.mrf.mxu0
        %1529 = vdwg.mxu0
        %v1531 = vsel %vm1058, %v1044, 0
        %v1534 = vsel %vm1062, %v1429, 0
        %1536 = vmatprep.subr.bf16.mxu0 0
        %1537 = vmatpush1.bf16.msra.mxu0 0
        %1538 = vmatprep.subr.bf16.mxu0 0
        %1539 = vmatpush1.bf16.msra.mxu0 0
        %1540 = vmatprep.subr.bf16.mxu0 0
        %1541 = vmatpush1.bf16.msra.mxu0 0
        %1542 = vmatprep.subr.bf16.mxu0 0
        %1543 = vmatpush1.bf16.msra.mxu0 0
        %1544 = vmatprep.subr.bf16.mxu0 0
        %1545 = vmatpush1.bf16.msra.mxu0 0
        %1546 = vmatprep.subr.bf16.mxu0 0
        %1547 = vmatpush1.bf16.msra.mxu0 0
        %1548 = vmatprep.subr.bf16.mxu0 0
        %1549 = vmatpush1.bf16.msra.mxu0 0
        %1550 = vmatprep.subr.bf16.mxu0 0
        %1551 = vmatpush1.bf16.msra.mxu0 %v1534
        %1552 = vmatprep.subr.bf16.mxu0 0
        %1553 = vmatpush2.bf16.msra.mxu0 0
        %1554 = vmatprep.subr.bf16.mxu0 0
        %1555 = vmatpush2.bf16.msra.mxu0 0
        %1556 = vmatprep.subr.bf16.mxu0 0
        %1557 = vmatpush2.bf16.msra.mxu0 0
        %1558 = vmatprep.subr.bf16.mxu0 0
        %1559 = vmatpush2.bf16.msra.mxu0 0
        %1560 = vmatprep.subr.bf16.mxu0 0
        %1561 = vmatpush2.bf16.msra.mxu0 0
        %1562 = vmatprep.subr.bf16.mxu0 0
        %1563 = vmatpush2.bf16.msra.mxu0 0
        %1564 = vmatprep.subr.bf16.mxu0 0
        %1565 = vmatpush2.bf16.msra.mxu0 0
        %1566 = vmatprep.subr.bf16.mxu0 0
        %1567 = vmatpush2.bf16.msra.mxu0 0
        %1568 = vmatprep.mubr.bf16.mxu0 0
        %1569 = vmatmul.mubr.bf16.gmra.mxu0 %v1531
        %v1570 = vpop.f32.mrf.mxu0
        %v1571 = vadd.f32 %v1436, %v1570
        %v1572 = vpop.f32.mrf.mxu0
        %v1573 = vpop.f32.mrf.mxu0
        %v1574 = vpop.f32.mrf.mxu0
        %1575 = vdwg.mxu0
        %v1577 = vsel %vm1058, %v1045, 0
        %v1580 = vsel %vm1062, %v1430, 0
        %1582 = vmatprep.subr.bf16.mxu0 0
        %1583 = vmatpush1.bf16.msra.mxu0 0
        %1584 = vmatprep.subr.bf16.mxu0 0
        %1585 = vmatpush1.bf16.msra.mxu0 0
        %1586 = vmatprep.subr.bf16.mxu0 0
        %1587 = vmatpush1.bf16.msra.mxu0 0
        %1588 = vmatprep.subr.bf16.mxu0 0
        %1589 = vmatpush1.bf16.msra.mxu0 0
        %1590 = vmatprep.subr.bf16.mxu0 0
        %1591 = vmatpush1.bf16.msra.mxu0 0
        %1592 = vmatprep.subr.bf16.mxu0 0
        %1593 = vmatpush1.bf16.msra.mxu0 0
        %1594 = vmatprep.subr.bf16.mxu0 0
        %1595 = vmatpush1.bf16.msra.mxu0 0
        %1596 = vmatprep.subr.bf16.mxu0 0
        %1597 = vmatpush1.bf16.msra.mxu0 %v1580
        %1598 = vmatprep.subr.bf16.mxu0 0
        %1599 = vmatpush2.bf16.msra.mxu0 0
        %1600 = vmatprep.subr.bf16.mxu0 0
        %1601 = vmatpush2.bf16.msra.mxu0 0
        %1602 = vmatprep.subr.bf16.mxu0 0
        %1603 = vmatpush2.bf16.msra.mxu0 0
        %1604 = vmatprep.subr.bf16.mxu0 0
        %1605 = vmatpush2.bf16.msra.mxu0 0
        %1606 = vmatprep.subr.bf16.mxu0 0
        %1607 = vmatpush2.bf16.msra.mxu0 0
        %1608 = vmatprep.subr.bf16.mxu0 0
        %1609 = vmatpush2.bf16.msra.mxu0 0
        %1610 = vmatprep.subr.bf16.mxu0 0
        %1611 = vmatpush2.bf16.msra.mxu0 0
        %1612 = vmatprep.subr.bf16.mxu0 0
        %1613 = vmatpush2.bf16.msra.mxu0 0
        %1614 = vmatprep.mubr.bf16.mxu0 0
        %1615 = vmatmul.mubr.bf16.gmra.mxu0 %v1577
        %v1616 = vpop.f32.mrf.mxu0
        %v1617 = vadd.f32 %v1436, %v1616
        %v1618 = vpop.f32.mrf.mxu0
        %v1619 = vpop.f32.mrf.mxu0
        %v1620 = vpop.f32.mrf.mxu0
        %1621 = vdwg.mxu0
        %v1622 = vpack.c.bf16 %v1101, %v1101
        %v1623 = vpack.c.bf16 %v1147, %v1147
        %v1624 = vpack.c.bf16 %v1193, %v1193
        %v1625 = vpack.c.bf16 %v1239, %v1239
        %v1626 = vpack.c.bf16 %v1293, %v1293
        %v1627 = vpack.c.bf16 %v1336, %v1336
        %v1628 = vpack.c.bf16 %v1379, %v1379
        %v1629 = vpack.c.bf16 %v1422, %v1422
        %v1631 = vsel %vm1058, %v1622, 0
        %v1634 = vsel %vm1058, %v1626, 0
        %1636 = vmatprep.subr.bf16.mxu0 0
        %1637 = vmatpush1.bf16.xpose.msra.mxu0 0
        %1638 = vmatprep.subr.bf16.mxu0 0
        %1639 = vmatpush1.bf16.xpose.msra.mxu0 0
        %1640 = vmatprep.subr.bf16.mxu0 0
        %1641 = vmatpush1.bf16.xpose.msra.mxu0 0
        %1642 = vmatprep.subr.bf16.mxu0 0
        %1643 = vmatpush1.bf16.xpose.msra.mxu0 0
        %1644 = vmatprep.subr.bf16.mxu0 0
        %1645 = vmatpush1.bf16.xpose.msra.mxu0 0
        %1646 = vmatprep.subr.bf16.mxu0 0
        %1647 = vmatpush1.bf16.xpose.msra.mxu0 0
        %1648 = vmatprep.subr.bf16.mxu0 0
        %1649 = vmatpush1.bf16.xpose.msra.mxu0 0
        %1650 = vmatprep.subr.bf16.mxu0 0
        %1651 = vmatpush1.bf16.xpose.msra.mxu0 %v1634
        %1652 = vmatprep.subr.bf16.mxu0 0
        %1653 = vmatpush2.bf16.xpose.msra.mxu0 0
        %1654 = vmatprep.subr.bf16.mxu0 0
        %1655 = vmatpush2.bf16.xpose.msra.mxu0 0
        %1656 = vmatprep.subr.bf16.mxu0 0
        %1657 = vmatpush2.bf16.xpose.msra.mxu0 0
        %1658 = vmatprep.subr.bf16.mxu0 0
        %1659 = vmatpush2.bf16.xpose.msra.mxu0 0
        %1660 = vmatprep.subr.bf16.mxu0 0
        %1661 = vmatpush2.bf16.xpose.msra.mxu0 0
        %1662 = vmatprep.subr.bf16.mxu0 0
        %1663 = vmatpush2.bf16.xpose.msra.mxu0 0
        %1664 = vmatprep.subr.bf16.mxu0 0
        %1665 = vmatpush2.bf16.xpose.msra.mxu0 0
        %1666 = vmatprep.subr.bf16.mxu0 0
        %1667 = vmatpush2.bf16.xpose.msra.mxu0 0
        %1668 = vmatprep.mubr.bf16.mxu0 0
        %1669 = vmatmul.mubr.bf16.gmra.mxu0 %v1631
        %v1670 = vpop.f32.mrf.mxu0
        %v1671 = vadd.f32 0.0, %v1670
        %v1672 = vpop.f32.mrf.mxu0
        %v1673 = vpop.f32.mrf.mxu0
        %v1674 = vpop.f32.mrf.mxu0
        %1675 = vdwg.mxu0
        %v1677 = vsel %vm1058, %v1623, 0
        %v1680 = vsel %vm1058, %v1627, 0
        %1682 = vmatprep.subr.bf16.mxu0 0
        %1683 = vmatpush1.bf16.xpose.msra.mxu0 0
        %1684 = vmatprep.subr.bf16.mxu0 0
        %1685 = vmatpush1.bf16.xpose.msra.mxu0 0
        %1686 = vmatprep.subr.bf16.mxu0 0
        %1687 = vmatpush1.bf16.xpose.msra.mxu0 0
        %1688 = vmatprep.subr.bf16.mxu0 0
        %1689 = vmatpush1.bf16.xpose.msra.mxu0 0
        %1690 = vmatprep.subr.bf16.mxu0 0
        %1691 = vmatpush1.bf16.xpose.msra.mxu0 0
        %1692 = vmatprep.subr.bf16.mxu0 0
        %1693 = vmatpush1.bf16.xpose.msra.mxu0 0
        %1694 = vmatprep.subr.bf16.mxu0 0
        %1695 = vmatpush1.bf16.xpose.msra.mxu0 0
        %1696 = vmatprep.subr.bf16.mxu0 0
        %1697 = vmatpush1.bf16.xpose.msra.mxu0 %v1680
        %1698 = vmatprep.subr.bf16.mxu0 0
        %1699 = vmatpush2.bf16.xpose.msra.mxu0 0
        %1700 = vmatprep.subr.bf16.mxu0 0
        %1701 = vmatpush2.bf16.xpose.msra.mxu0 0
        %1702 = vmatprep.subr.bf16.mxu0 0
        %1703 = vmatpush2.bf16.xpose.msra.mxu0 0
        %1704 = vmatprep.subr.bf16.mxu0 0
        %1705 = vmatpush2.bf16.xpose.msra.mxu0 0
        %1706 = vmatprep.subr.bf16.mxu0 0
        %1707 = vmatpush2.bf16.xpose.msra.mxu0 0
        %1708 = vmatprep.subr.bf16.mxu0 0
        %1709 = vmatpush2.bf16.xpose.msra.mxu0 0
        %1710 = vmatprep.subr.bf16.mxu0 0
        %1711 = vmatpush2.bf16.xpose.msra.mxu0 0
        %1712 = vmatprep.subr.bf16.mxu0 0
        %1713 = vmatpush2.bf16.xpose.msra.mxu0 0
        %1714 = vmatprep.mubr.bf16.mxu0 0
        %1715 = vmatmul.mubr.bf16.gmra.mxu0 %v1677
        %v1716 = vpop.f32.mrf.mxu0
        %v1717 = vadd.f32 0.0, %v1716
        %v1718 = vpop.f32.mrf.mxu0
        %v1719 = vpop.f32.mrf.mxu0
        %v1720 = vpop.f32.mrf.mxu0
        %1721 = vdwg.mxu0
        %v1723 = vsel %vm1058, %v1624, 0
        %v1726 = vsel %vm1058, %v1628, 0
        %1728 = vmatprep.subr.bf16.mxu0 0
        %1729 = vmatpush1.bf16.xpose.msra.mxu0 0
        %1730 = vmatprep.subr.bf16.mxu0 0
        %1731 = vmatpush1.bf16.xpose.msra.mxu0 0
        %1732 = vmatprep.subr.bf16.mxu0 0
        %1733 = vmatpush1.bf16.xpose.msra.mxu0 0
        %1734 = vmatprep.subr.bf16.mxu0 0
        %1735 = vmatpush1.bf16.xpose.msra.mxu0 0
        %1736 = vmatprep.subr.bf16.mxu0 0
        %1737 = vmatpush1.bf16.xpose.msra.mxu0 0
        %1738 = vmatprep.subr.bf16.mxu0 0
        %1739 = vmatpush1.bf16.xpose.msra.mxu0 0
        %1740 = vmatprep.subr.bf16.mxu0 0
        %1741 = vmatpush1.bf16.xpose.msra.mxu0 0
        %1742 = vmatprep.subr.bf16.mxu0 0
        %1743 = vmatpush1.bf16.xpose.msra.mxu0 %v1726
        %1744 = vmatprep.subr.bf16.mxu0 0
        %1745 = vmatpush2.bf16.xpose.msra.mxu0 0
        %1746 = vmatprep.subr.bf16.mxu0 0
        %1747 = vmatpush2.bf16.xpose.msra.mxu0 0
        %1748 = vmatprep.subr.bf16.mxu0 0
        %1749 = vmatpush2.bf16.xpose.msra.mxu0 0
        %1750 = vmatprep.subr.bf16.mxu0 0
        %1751 = vmatpush2.bf16.xpose.msra.mxu0 0
        %1752 = vmatprep.subr.bf16.mxu0 0
        %1753 = vmatpush2.bf16.xpose.msra.mxu0 0
        %1754 = vmatprep.subr.bf16.mxu0 0
        %1755 = vmatpush2.bf16.xpose.msra.mxu0 0
        %1756 = vmatprep.subr.bf16.mxu0 0
        %1757 = vmatpush2.bf16.xpose.msra.mxu0 0
        %1758 = vmatprep.subr.bf16.mxu0 0
        %1759 = vmatpush2.bf16.xpose.msra.mxu0 0
        %1760 = vmatprep.mubr.bf16.mxu0 0
        %1761 = vmatmul.mubr.bf16.gmra.mxu0 %v1723
        %v1762 = vpop.f32.mrf.mxu0
        %v1763 = vadd.f32 0.0, %v1762
        %v1764 = vpop.f32.mrf.mxu0
        %v1765 = vpop.f32.mrf.mxu0
        %v1766 = vpop.f32.mrf.mxu0
        %1767 = vdwg.mxu0
        %v1769 = vsel %vm1058, %v1625, 0
        %v1772 = vsel %vm1058, %v1629, 0
        %1774 = vmatprep.subr.bf16.mxu0 0
        %1775 = vmatpush1.bf16.xpose.msra.mxu0 0
        %1776 = vmatprep.subr.bf16.mxu0 0
        %1777 = vmatpush1.bf16.xpose.msra.mxu0 0
        %1778 = vmatprep.subr.bf16.mxu0 0
        %1779 = vmatpush1.bf16.xpose.msra.mxu0 0
        %1780 = vmatprep.subr.bf16.mxu0 0
        %1781 = vmatpush1.bf16.xpose.msra.mxu0 0
        %1782 = vmatprep.subr.bf16.mxu0 0
        %1783 = vmatpush1.bf16.xpose.msra.mxu0 0
        %1784 = vmatprep.subr.bf16.mxu0 0
        %1785 = vmatpush1.bf16.xpose.msra.mxu0 0
        %1786 = vmatprep.subr.bf16.mxu0 0
        %1787 = vmatpush1.bf16.xpose.msra.mxu0 0
        %1788 = vmatprep.subr.bf16.mxu0 0
        %1789 = vmatpush1.bf16.xpose.msra.mxu0 %v1772
        %1790 = vmatprep.subr.bf16.mxu0 0
        %1791 = vmatpush2.bf16.xpose.msra.mxu0 0
        %1792 = vmatprep.subr.bf16.mxu0 0
        %1793 = vmatpush2.bf16.xpose.msra.mxu0 0
        %1794 = vmatprep.subr.bf16.mxu0 0
        %1795 = vmatpush2.bf16.xpose.msra.mxu0 0
        %1796 = vmatprep.subr.bf16.mxu0 0
        %1797 = vmatpush2.bf16.xpose.msra.mxu0 0
        %1798 = vmatprep.subr.bf16.mxu0 0
        %1799 = vmatpush2.bf16.xpose.msra.mxu0 0
        %1800 = vmatprep.subr.bf16.mxu0 0
        %1801 = vmatpush2.bf16.xpose.msra.mxu0 0
        %1802 = vmatprep.subr.bf16.mxu0 0
        %1803 = vmatpush2.bf16.xpose.msra.mxu0 0
        %1804 = vmatprep.subr.bf16.mxu0 0
        %1805 = vmatpush2.bf16.xpose.msra.mxu0 0
        %1806 = vmatprep.mubr.bf16.mxu0 0
        %1807 = vmatmul.mubr.bf16.gmra.mxu0 %v1769
        %v1808 = vpop.f32.mrf.mxu0
        %v1809 = vadd.f32 0.0, %v1808
        %v1810 = vpop.f32.mrf.mxu0
        %v1811 = vpop.f32.mrf.mxu0
        %v1812 = vpop.f32.mrf.mxu0
        %1813 = vdwg.mxu0
        %v1814 = vmul.f32 %v1671, 0.35355338
        %v1815 = vmul.f32 %v1717, 0.35355338
        %v1816 = vmul.f32 %v1763, 0.35355338
        %v1817 = vmul.f32 %v1809, 0.35355338
        %v1818 = vsel %vm1058, %v1814, -inf
        %1819 = vmax.xlane.f32.xlu0 %v1818
        %v1820 = vpop.xlane.xlu0 %1819
        %v1821 = vsel %vm1058, %v1815, -inf
        %1822 = vmax.xlane.f32.xlu0 %v1821
        %v1823 = vpop.xlane.xlu0 %1822
        %v1824 = vsel %vm1058, %v1816, -inf
        %1825 = vmax.xlane.f32.xlu0 %v1824
        %v1826 = vpop.xlane.xlu0 %1825
        %v1827 = vsel %vm1058, %v1817, -inf
        %1828 = vmax.xlane.f32.xlu0 %v1827
        %v1829 = vpop.xlane.xlu0 %1828
        %v1830 = vsub.f32 %v1814, %v1820
        %v1831 = vsub.f32 %v1815, %v1823
        %v1832 = vsub.f32 %v1816, %v1826
        %v1833 = vsub.f32 %v1817, %v1829
        %v1834 = vmul.f32 %v1830, 1.442695
        %v1835 = vpow.pop %v1834
        %v1836 = vmul.f32 %v1831, 1.442695
        %v1837 = vpow.pop %v1836
        %v1838 = vmul.f32 %v1832, 1.442695
        %v1839 = vpow.pop %v1838
        %v1840 = vmul.f32 %v1833, 1.442695
        %v1841 = vpow.pop %v1840
        %v1842 = vsel %vm1058, %v1835, 0.0
        %1843 = vadd.xlane.f32.xlu0 %v1842
        %v1844 = vpop.xlane.xlu0 %1843
        %v1845 = vsel %vm1058, %v1837, 0.0
        %1846 = vadd.xlane.f32.xlu0 %v1845
        %v1847 = vpop.xlane.xlu0 %1846
        %v1848 = vsel %vm1058, %v1839, 0.0
        %1849 = vadd.xlane.f32.xlu0 %v1848
        %v1850 = vpop.xlane.xlu0 %1849
        %v1851 = vsel %vm1058, %v1841, 0.0
        %1852 = vadd.xlane.f32.xlu0 %v1851
        %v1853 = vpop.xlane.xlu0 %1852
        %v1854 = vrcp.pop %v1844
        %v1855 = vrcp.pop %v1847
        %v1856 = vrcp.pop %v1850
        %v1857 = vrcp.pop %v1853
        %v1858 = vmul.f32 %v1835, %v1854
        %v1859 = vmul.f32 %v1837, %v1855
        %v1860 = vmul.f32 %v1839, %v1856
        %v1861 = vmul.f32 %v1841, %v1857
        %v1862 = vpack.c.bf16 %v1858, %v1858
        %v1863 = vpack.c.bf16 %v1859, %v1859
        %v1864 = vpack.c.bf16 %v1860, %v1860
        %v1865 = vpack.c.bf16 %v1861, %v1861
        %v1866 = vpack.c.bf16 %v1479, %v1479
        %v1867 = vpack.c.bf16 %v1525, %v1525
        %v1868 = vpack.c.bf16 %v1571, %v1571
        %v1869 = vpack.c.bf16 %v1617, %v1617
        %v1871 = vsel %vm1058, %v1862, 0
        %v1874 = vsel %vm1062, %v1866, 0
        %1876 = vmatprep.subr.bf16.mxu0 0
        %1877 = vmatpush1.bf16.msra.mxu0 0
        %1878 = vmatprep.subr.bf16.mxu0 0
        %1879 = vmatpush1.bf16.msra.mxu0 0
        %1880 = vmatprep.subr.bf16.mxu0 0
        %1881 = vmatpush1.bf16.msra.mxu0 0
        %1882 = vmatprep.subr.bf16.mxu0 0
        %1883 = vmatpush1.bf16.msra.mxu0 0
        %1884 = vmatprep.subr.bf16.mxu0 0
        %1885 = vmatpush1.bf16.msra.mxu0 0
        %1886 = vmatprep.subr.bf16.mxu0 0
        %1887 = vmatpush1.bf16.msra.mxu0 0
        %1888 = vmatprep.subr.bf16.mxu0 0
        %1889 = vmatpush1.bf16.msra.mxu0 0
        %1890 = vmatprep.subr.bf16.mxu0 0
        %1891 = vmatpush1.bf16.msra.mxu0 %v1874
        %1892 = vmatprep.subr.bf16.mxu0 0
        %1893 = vmatpush2.bf16.msra.mxu0 0
        %1894 = vmatprep.subr.bf16.mxu0 0
        %1895 = vmatpush2.bf16.msra.mxu0 0
        %1896 = vmatprep.subr.bf16.mxu0 0
        %1897 = vmatpush2.bf16.msra.mxu0 0
        %1898 = vmatprep.subr.bf16.mxu0 0
        %1899 = vmatpush2.bf16.msra.mxu0 0
        %1900 = vmatprep.subr.bf16.mxu0 0
        %1901 = vmatpush2.bf16.msra.mxu0 0
        %1902 = vmatprep.subr.bf16.mxu0 0
        %1903 = vmatpush2.bf16.msra.mxu0 0
        %1904 = vmatprep.subr.bf16.mxu0 0
        %1905 = vmatpush2.bf16.msra.mxu0 0
        %1906 = vmatprep.subr.bf16.mxu0 0
        %1907 = vmatpush2.bf16.msra.mxu0 0
        %1908 = vmatprep.mubr.bf16.mxu0 0
        %1909 = vmatmul.mubr.bf16.gmra.mxu0 %v1871
        %v1910 = vpop.f32.mrf.mxu0
        %v1911 = vadd.f32 0.0, %v1910
        %v1912 = vpop.f32.mrf.mxu0
        %v1913 = vpop.f32.mrf.mxu0
        %v1914 = vpop.f32.mrf.mxu0
        %1915 = vdwg.mxu0
        %v1917 = vsel %vm1058, %v1863, 0
        %v1920 = vsel %vm1062, %v1867, 0
        %1922 = vmatprep.subr.bf16.mxu0 0
        %1923 = vmatpush1.bf16.msra.mxu0 0
        %1924 = vmatprep.subr.bf16.mxu0 0
        %1925 = vmatpush1.bf16.msra.mxu0 0
        %1926 = vmatprep.subr.bf16.mxu0 0
        %1927 = vmatpush1.bf16.msra.mxu0 0
        %1928 = vmatprep.subr.bf16.mxu0 0
        %1929 = vmatpush1.bf16.msra.mxu0 0
        %1930 = vmatprep.subr.bf16.mxu0 0
        %1931 = vmatpush1.bf16.msra.mxu0 0
        %1932 = vmatprep.subr.bf16.mxu0 0
        %1933 = vmatpush1.bf16.msra.mxu0 0
        %1934 = vmatprep.subr.bf16.mxu0 0
        %1935 = vmatpush1.bf16.msra.mxu0 0
        %1936 = vmatprep.subr.bf16.mxu0 0
        %1937 = vmatpush1.bf16.msra.mxu0 %v1920
        %1938 = vmatprep.subr.bf16.mxu0 0
        %1939 = vmatpush2.bf16.msra.mxu0 0
        %1940 = vmatprep.subr.bf16.mxu0 0
        %1941 = vmatpush2.bf16.msra.mxu0 0
        %1942 = vmatprep.subr.bf16.mxu0 0
        %1943 = vmatpush2.bf16.msra.mxu0 0
        %1944 = vmatprep.subr.bf16.mxu0 0
        %1945 = vmatpush2.bf16.msra.mxu0 0
        %1946 = vmatprep.subr.bf16.mxu0 0
        %1947 = vmatpush2.bf16.msra.mxu0 0
        %1948 = vmatprep.subr.bf16.mxu0 0
        %1949 = vmatpush2.bf16.msra.mxu0 0
        %1950 = vmatprep.subr.bf16.mxu0 0
        %1951 = vmatpush2.bf16.msra.mxu0 0
        %1952 = vmatprep.subr.bf16.mxu0 0
        %1953 = vmatpush2.bf16.msra.mxu0 0
        %1954 = vmatprep.mubr.bf16.mxu0 0
        %1955 = vmatmul.mubr.bf16.gmra.mxu0 %v1917
        %v1956 = vpop.f32.mrf.mxu0
        %v1957 = vadd.f32 0.0, %v1956
        %v1958 = vpop.f32.mrf.mxu0
        %v1959 = vpop.f32.mrf.mxu0
        %v1960 = vpop.f32.mrf.mxu0
        %1961 = vdwg.mxu0
        %v1963 = vsel %vm1058, %v1864, 0
        %v1966 = vsel %vm1062, %v1868, 0
        %1968 = vmatprep.subr.bf16.mxu0 0
        %1969 = vmatpush1.bf16.msra.mxu0 0
        %1970 = vmatprep.subr.bf16.mxu0 0
        %1971 = vmatpush1.bf16.msra.mxu0 0
        %1972 = vmatprep.subr.bf16.mxu0 0
        %1973 = vmatpush1.bf16.msra.mxu0 0
        %1974 = vmatprep.subr.bf16.mxu0 0
        %1975 = vmatpush1.bf16.msra.mxu0 0
        %1976 = vmatprep.subr.bf16.mxu0 0
        %1977 = vmatpush1.bf16.msra.mxu0 0
        %1978 = vmatprep.subr.bf16.mxu0 0
        %1979 = vmatpush1.bf16.msra.mxu0 0
        %1980 = vmatprep.subr.bf16.mxu0 0
        %1981 = vmatpush1.bf16.msra.mxu0 0
        %1982 = vmatprep.subr.bf16.mxu0 0
        %1983 = vmatpush1.bf16.msra.mxu0 %v1966
        %1984 = vmatprep.subr.bf16.mxu0 0
        %1985 = vmatpush2.bf16.msra.mxu0 0
        %1986 = vmatprep.subr.bf16.mxu0 0
        %1987 = vmatpush2.bf16.msra.mxu0 0
        %1988 = vmatprep.subr.bf16.mxu0 0
        %1989 = vmatpush2.bf16.msra.mxu0 0
        %1990 = vmatprep.subr.bf16.mxu0 0
        %1991 = vmatpush2.bf16.msra.mxu0 0
        %1992 = vmatprep.subr.bf16.mxu0 0
        %1993 = vmatpush2.bf16.msra.mxu0 0
        %1994 = vmatprep.subr.bf16.mxu0 0
        %1995 = vmatpush2.bf16.msra.mxu0 0
        %1996 = vmatprep.subr.bf16.mxu0 0
        %1997 = vmatpush2.bf16.msra.mxu0 0
        %1998 = vmatprep.subr.bf16.mxu0 0
        %1999 = vmatpush2.bf16.msra.mxu0 0
        %2000 = vmatprep.mubr.bf16.mxu0 0
        %2001 = vmatmul.mubr.bf16.gmra.mxu0 %v1963
        %v2002 = vpop.f32.mrf.mxu0
        %v2003 = vadd.f32 0.0, %v2002
        %v2004 = vpop.f32.mrf.mxu0
        %v2005 = vpop.f32.mrf.mxu0
        %v2006 = vpop.f32.mrf.mxu0
        %2007 = vdwg.mxu0
        %v2009 = vsel %vm1058, %v1865, 0
        %v2012 = vsel %vm1062, %v1869, 0
        %2014 = vmatprep.subr.bf16.mxu0 0
        %2015 = vmatpush1.bf16.msra.mxu0 0
        %2016 = vmatprep.subr.bf16.mxu0 0
        %2017 = vmatpush1.bf16.msra.mxu0 0
        %2018 = vmatprep.subr.bf16.mxu0 0
        %2019 = vmatpush1.bf16.msra.mxu0 0
        %2020 = vmatprep.subr.bf16.mxu0 0
        %2021 = vmatpush1.bf16.msra.mxu0 0
        %2022 = vmatprep.subr.bf16.mxu0 0
        %2023 = vmatpush1.bf16.msra.mxu0 0
        %2024 = vmatprep.subr.bf16.mxu0 0
        %2025 = vmatpush1.bf16.msra.mxu0 0
        %2026 = vmatprep.subr.bf16.mxu0 0
        %2027 = vmatpush1.bf16.msra.mxu0 0
        %2028 = vmatprep.subr.bf16.mxu0 0
        %2029 = vmatpush1.bf16.msra.mxu0 %v2012
        %2030 = vmatprep.subr.bf16.mxu0 0
        %2031 = vmatpush2.bf16.msra.mxu0 0
        %2032 = vmatprep.subr.bf16.mxu0 0
        %2033 = vmatpush2.bf16.msra.mxu0 0
        %2034 = vmatprep.subr.bf16.mxu0 0
        %2035 = vmatpush2.bf16.msra.mxu0 0
        %2036 = vmatprep.subr.bf16.mxu0 0
        %2037 = vmatpush2.bf16.msra.mxu0 0
        %2038 = vmatprep.subr.bf16.mxu0 0
        %2039 = vmatpush2.bf16.msra.mxu0 0
        %2040 = vmatprep.subr.bf16.mxu0 0
        %2041 = vmatpush2.bf16.msra.mxu0 0
        %2042 = vmatprep.subr.bf16.mxu0 0
        %2043 = vmatpush2.bf16.msra.mxu0 0
        %2044 = vmatprep.subr.bf16.mxu0 0
        %2045 = vmatpush2.bf16.msra.mxu0 0
        %2046 = vmatprep.mubr.bf16.mxu0 0
        %2047 = vmatmul.mubr.bf16.gmra.mxu0 %v2009
        %v2048 = vpop.f32.mrf.mxu0
        %v2049 = vadd.f32 0.0, %v2048
        %v2050 = vpop.f32.mrf.mxu0
        %v2051 = vpop.f32.mrf.mxu0
        %v2052 = vpop.f32.mrf.mxu0
        %2053 = vdwg.mxu0
        %v2054 = vpack.c.bf16 %v1911, %v1911
        %v2055 = vpack.c.bf16 %v1957, %v1957
        %v2056 = vpack.c.bf16 %v2003, %v2003
        %v2057 = vpack.c.bf16 %v2049, %v2049
        %v2058 = vld [vmem:[#allocation16] sm:$0xf]
        %v2059 = vld [vmem:[#allocation16 + $0x4] sm:$0xf]
        %v2060 = vld [vmem:[#allocation16 + $0x8] sm:$0xf]
        %v2061 = vld [vmem:[#allocation16 + $0xc] sm:$0xf]
        %v2063 = vsel %vm1058, %v2054, 0
        %v2066 = vsel %vm1062, %v2058, 0
        %2068 = vmatprep.subr.bf16.mxu0 0
        %2069 = vmatpush1.bf16.msra.mxu0 0
        %2070 = vmatprep.subr.bf16.mxu0 0
        %2071 = vmatpush1.bf16.msra.mxu0 0
        %2072 = vmatprep.subr.bf16.mxu0 0
        %2073 = vmatpush1.bf16.msra.mxu0 0
        %2074 = vmatprep.subr.bf16.mxu0 0
        %2075 = vmatpush1.bf16.msra.mxu0 0
        %2076 = vmatprep.subr.bf16.mxu0 0
        %2077 = vmatpush1.bf16.msra.mxu0 0
        %2078 = vmatprep.subr.bf16.mxu0 0
        %2079 = vmatpush1.bf16.msra.mxu0 0
        %2080 = vmatprep.subr.bf16.mxu0 0
        %2081 = vmatpush1.bf16.msra.mxu0 0
        %2082 = vmatprep.subr.bf16.mxu0 0
        %2083 = vmatpush1.bf16.msra.mxu0 %v2066
        %2084 = vmatprep.subr.bf16.mxu0 0
        %2085 = vmatpush2.bf16.msra.mxu0 0
        %2086 = vmatprep.subr.bf16.mxu0 0
        %2087 = vmatpush2.bf16.msra.mxu0 0
        %2088 = vmatprep.subr.bf16.mxu0 0
        %2089 = vmatpush2.bf16.msra.mxu0 0
        %2090 = vmatprep.subr.bf16.mxu0 0
        %2091 = vmatpush2.bf16.msra.mxu0 0
        %2092 = vmatprep.subr.bf16.mxu0 0
        %2093 = vmatpush2.bf16.msra.mxu0 0
        %2094 = vmatprep.subr.bf16.mxu0 0
        %2095 = vmatpush2.bf16.msra.mxu0 0
        %2096 = vmatprep.subr.bf16.mxu0 0
        %2097 = vmatpush2.bf16.msra.mxu0 0
        %2098 = vmatprep.subr.bf16.mxu0 0
        %2099 = vmatpush2.bf16.msra.mxu0 0
        %2100 = vmatprep.mubr.bf16.mxu0 0
        %2101 = vmatmul.mubr.bf16.gmra.mxu0 %v2063
        %v2102 = vpop.f32.mrf.mxu0
        %v2103 = vadd.f32 0.0, %v2102
        %v2104 = vpop.f32.mrf.mxu0
        %v2105 = vpop.f32.mrf.mxu0
        %v2106 = vpop.f32.mrf.mxu0
        %2107 = vdwg.mxu0
        %v2109 = vsel %vm1058, %v2055, 0
        %v2112 = vsel %vm1062, %v2059, 0
        %2114 = vmatprep.subr.bf16.mxu0 0
        %2115 = vmatpush1.bf16.msra.mxu0 0
        %2116 = vmatprep.subr.bf16.mxu0 0
        %2117 = vmatpush1.bf16.msra.mxu0 0
        %2118 = vmatprep.subr.bf16.mxu0 0
        %2119 = vmatpush1.bf16.msra.mxu0 0
        %2120 = vmatprep.subr.bf16.mxu0 0
        %2121 = vmatpush1.bf16.msra.mxu0 0
        %2122 = vmatprep.subr.bf16.mxu0 0
        %2123 = vmatpush1.bf16.msra.mxu0 0
        %2124 = vmatprep.subr.bf16.mxu0 0
        %2125 = vmatpush1.bf16.msra.mxu0 0
        %2126 = vmatprep.subr.bf16.mxu0 0
        %2127 = vmatpush1.bf16.msra.mxu0 0
        %2128 = vmatprep.subr.bf16.mxu0 0
        %2129 = vmatpush1.bf16.msra.mxu0 %v2112
        %2130 = vmatprep.subr.bf16.mxu0 0
        %2131 = vmatpush2.bf16.msra.mxu0 0
        %2132 = vmatprep.subr.bf16.mxu0 0
        %2133 = vmatpush2.bf16.msra.mxu0 0
        %2134 = vmatprep.subr.bf16.mxu0 0
        %2135 = vmatpush2.bf16.msra.mxu0 0
        %2136 = vmatprep.subr.bf16.mxu0 0
        %2137 = vmatpush2.bf16.msra.mxu0 0
        %2138 = vmatprep.subr.bf16.mxu0 0
        %2139 = vmatpush2.bf16.msra.mxu0 0
        %2140 = vmatprep.subr.bf16.mxu0 0
        %2141 = vmatpush2.bf16.msra.mxu0 0
        %2142 = vmatprep.subr.bf16.mxu0 0
        %2143 = vmatpush2.bf16.msra.mxu0 0
        %2144 = vmatprep.subr.bf16.mxu0 0
        %2145 = vmatpush2.bf16.msra.mxu0 0
        %2146 = vmatprep.mubr.bf16.mxu0 0
        %2147 = vmatmul.mubr.bf16.gmra.mxu0 %v2109
        %v2148 = vpop.f32.mrf.mxu0
        %v2149 = vadd.f32 0.0, %v2148
        %v2150 = vpop.f32.mrf.mxu0
        %v2151 = vpop.f32.mrf.mxu0
        %v2152 = vpop.f32.mrf.mxu0
        %2153 = vdwg.mxu0
        %v2155 = vsel %vm1058, %v2056, 0
        %v2158 = vsel %vm1062, %v2060, 0
        %2160 = vmatprep.subr.bf16.mxu0 0
        %2161 = vmatpush1.bf16.msra.mxu0 0
        %2162 = vmatprep.subr.bf16.mxu0 0
        %2163 = vmatpush1.bf16.msra.mxu0 0
        %2164 = vmatprep.subr.bf16.mxu0 0
        %2165 = vmatpush1.bf16.msra.mxu0 0
        %2166 = vmatprep.subr.bf16.mxu0 0
        %2167 = vmatpush1.bf16.msra.mxu0 0
        %2168 = vmatprep.subr.bf16.mxu0 0
        %2169 = vmatpush1.bf16.msra.mxu0 0
        %2170 = vmatprep.subr.bf16.mxu0 0
        %2171 = vmatpush1.bf16.msra.mxu0 0
        %2172 = vmatprep.subr.bf16.mxu0 0
        %2173 = vmatpush1.bf16.msra.mxu0 0
        %2174 = vmatprep.subr.bf16.mxu0 0
        %2175 = vmatpush1.bf16.msra.mxu0 %v2158
        %2176 = vmatprep.subr.bf16.mxu0 0
        %2177 = vmatpush2.bf16.msra.mxu0 0
        %2178 = vmatprep.subr.bf16.mxu0 0
        %2179 = vmatpush2.bf16.msra.mxu0 0
        %2180 = vmatprep.subr.bf16.mxu0 0
        %2181 = vmatpush2.bf16.msra.mxu0 0
        %2182 = vmatprep.subr.bf16.mxu0 0
        %2183 = vmatpush2.bf16.msra.mxu0 0
        %2184 = vmatprep.subr.bf16.mxu0 0
        %2185 = vmatpush2.bf16.msra.mxu0 0
        %2186 = vmatprep.subr.bf16.mxu0 0
        %2187 = vmatpush2.bf16.msra.mxu0 0
        %2188 = vmatprep.subr.bf16.mxu0 0
        %2189 = vmatpush2.bf16.msra.mxu0 0
        %2190 = vmatprep.subr.bf16.mxu0 0
        %2191 = vmatpush2.bf16.msra.mxu0 0
        %2192 = vmatprep.mubr.bf16.mxu0 0
        %2193 = vmatmul.mubr.bf16.gmra.mxu0 %v2155
        %v2194 = vpop.f32.mrf.mxu0
        %v2195 = vadd.f32 0.0, %v2194
        %v2196 = vpop.f32.mrf.mxu0
        %v2197 = vpop.f32.mrf.mxu0
        %v2198 = vpop.f32.mrf.mxu0
        %2199 = vdwg.mxu0
        %v2201 = vsel %vm1058, %v2057, 0
        %v2204 = vsel %vm1062, %v2061, 0
        %2206 = vmatprep.subr.bf16.mxu0 0
        %2207 = vmatpush1.bf16.msra.mxu0 0
        %2208 = vmatprep.subr.bf16.mxu0 0
        %2209 = vmatpush1.bf16.msra.mxu0 0
        %2210 = vmatprep.subr.bf16.mxu0 0
        %2211 = vmatpush1.bf16.msra.mxu0 0
        %2212 = vmatprep.subr.bf16.mxu0 0
        %2213 = vmatpush1.bf16.msra.mxu0 0
        %2214 = vmatprep.subr.bf16.mxu0 0
        %2215 = vmatpush1.bf16.msra.mxu0 0
        %2216 = vmatprep.subr.bf16.mxu0 0
        %2217 = vmatpush1.bf16.msra.mxu0 0
        %2218 = vmatprep.subr.bf16.mxu0 0
        %2219 = vmatpush1.bf16.msra.mxu0 0
        %2220 = vmatprep.subr.bf16.mxu0 0
        %2221 = vmatpush1.bf16.msra.mxu0 %v2204
        %2222 = vmatprep.subr.bf16.mxu0 0
        %2223 = vmatpush2.bf16.msra.mxu0 0
        %2224 = vmatprep.subr.bf16.mxu0 0
        %2225 = vmatpush2.bf16.msra.mxu0 0
        %2226 = vmatprep.subr.bf16.mxu0 0
        %2227 = vmatpush2.bf16.msra.mxu0 0
        %2228 = vmatprep.subr.bf16.mxu0 0
        %2229 = vmatpush2.bf16.msra.mxu0 0
        %2230 = vmatprep.subr.bf16.mxu0 0
        %2231 = vmatpush2.bf16.msra.mxu0 0
        %2232 = vmatprep.subr.bf16.mxu0 0
        %2233 = vmatpush2.bf16.msra.mxu0 0
        %2234 = vmatprep.subr.bf16.mxu0 0
        %2235 = vmatpush2.bf16.msra.mxu0 0
        %2236 = vmatprep.subr.bf16.mxu0 0
        %2237 = vmatpush2.bf16.msra.mxu0 0
        %2238 = vmatprep.mubr.bf16.mxu0 0
        %2239 = vmatmul.mubr.bf16.gmra.mxu0 %v2201
        %v2240 = vpop.f32.mrf.mxu0
        %v2241 = vadd.f32 0.0, %v2240
        %v2242 = vpop.f32.mrf.mxu0
        %v2243 = vpop.f32.mrf.mxu0
        %v2244 = vpop.f32.mrf.mxu0
        %2245 = vdwg.mxu0
        %vm2246 = vcmask 261120
        %v2247 = vsel %vm2246, %v2103, 0.0
        %v2248 = vsel %vm2246, %v2149, 0.0
        %v2249 = vadd.f32 %v2247, %v2248
        %v2250 = vsel %vm2246, %v2195, 0.0
        %v2251 = vadd.f32 %v2249, %v2250
        %v2252 = vsel %vm2246, %v2241, 0.0
        %v2253 = vadd.f32 %v2251, %v2252
        %v2254 = vld [vmem:[#allocation17] sm:$0x1]
        %v2256 = vlaneseq
        %v2257 = vshrl.u32 %v2256, 7
        %v2258 = vsub.s32 0, %v2257
        %v2259 = vrot.slane %v2254, %v2258
        %v2261 = vadd.f32 %v2253, %v2259
        %v2262 = vadd.f32 %v2261, %v1046
        %v2263 = vld [vmem:[#allocation19] sm:$0x1]
        %v2264 = vld [vmem:[#allocation20] sm:$0x1]
        %v2265 = vsel %vm2246, %v2262, 0.0
        %2266 = vadd.xlane.f32.xlu0 %v2265
        %v2267 = vpop.xlane.xlu0 %2266
        %v2268 = vrcp.pop 32.0
        %v2269 = vmul.f32 %v2267, %v2268
        %v2270 = vsub.f32 %v2262, %v2269
        %v2271 = vmul.f32 %v2270, %v2270
        %v2272 = vsel %vm2246, %v2271, 0.0
        %2273 = vadd.xlane.f32.xlu0 %v2272
        %v2274 = vpop.xlane.xlu0 %2273
        %v2275 = vmul.f32 %v2274, %v2268
        %v2276 = vadd.f32 %v2275, 1e-05
        %v2277 = vrsqrt.pop %v2276
        %v2278 = vmul.f32 %v2270, %v2277
        %v2280 = vlaneseq
        %v2281 = vshrl.u32 %v2280, 7
        %v2282 = vsub.s32 0, %v2281
        %v2283 = vrot.slane %v2263, %v2282
        %v2285 = vmul.f32 %v2278, %v2283
        %v2287 = vlaneseq
        %v2288 = vshrl.u32 %v2287, 7
        %v2289 = vsub.s32 0, %v2288
        %v2290 = vrot.slane %v2264, %v2289
        %v2292 = vadd.f32 %v2285, %v2290
        %v2293 = vpack.c.bf16 %v2292, %v2292
        %v2294 = vld [vmem:[#allocation22] sm:$0xf]
        %v2295 = vld [vmem:[#allocation22 + $0x4] sm:$0xf]
        %v2296 = vld [vmem:[#allocation22 + $0x8] sm:$0xf]
        %v2297 = vld [vmem:[#allocation22 + $0xc] sm:$0xf]
        %v2298 = vld [vmem:[#allocation23] sm:$0x1]
        %v2300 = vlaneseq
        %v2301 = vshrl.u32 %v2300, 7
        %v2302 = vsub.s32 0, %v2301
        %v2303 = vrot.slane %v2298, %v2302
        %v2309 = vunpack.c.l.b16 %v2294
        %v2310 = vunpack.c.l.b16 %v2295
        %v2311 = vunpack.c.l.b16 %v2296
        %v2312 = vunpack.c.l.b16 %v2297
        %v2313 = vpack.c.b16 %v2310, %v2309
        %v2314 = vpack.c.b16 %v2312, %v2311
        %v2318 = vsel %vm2246, %v2293, 0
        %2320 = vmatprep.subr.bf16.mxu0 0
        %2321 = vmatpush1.bf16.msra.mxu0 0
        %2322 = vmatprep.subr.bf16.mxu0 0
        %2323 = vmatpush1.bf16.msra.mxu0 0
        %2324 = vmatprep.subr.bf16.mxu0 0
        %2325 = vmatpush1.bf16.msra.mxu0 0
        %2326 = vmatprep.subr.bf16.mxu0 0
        %2327 = vmatpush1.bf16.msra.mxu0 0
        %2328 = vmatprep.subr.bf16.mxu0 0
        %2329 = vmatpush1.bf16.msra.mxu0 0
        %2330 = vmatprep.subr.bf16.mxu0 0
        %2331 = vmatpush1.bf16.msra.mxu0 0
        %2332 = vmatprep.subr.bf16.mxu0 0
        %2333 = vmatpush1.bf16.msra.mxu0 %v2314
        %2334 = vmatprep.subr.bf16.mxu0 0
        %2335 = vmatpush1.bf16.msra.mxu0 %v2313
        %2336 = vmatprep.subr.bf16.mxu0 0
        %2337 = vmatpush2.bf16.msra.mxu0 0
        %2338 = vmatprep.subr.bf16.mxu0 0
        %2339 = vmatpush2.bf16.msra.mxu0 0
        %2340 = vmatprep.subr.bf16.mxu0 0
        %2341 = vmatpush2.bf16.msra.mxu0 0
        %2342 = vmatprep.subr.bf16.mxu0 0
        %2343 = vmatpush2.bf16.msra.mxu0 0
        %2344 = vmatprep.subr.bf16.mxu0 0
        %2345 = vmatpush2.bf16.msra.mxu0 0
        %2346 = vmatprep.subr.bf16.mxu0 0
        %2347 = vmatpush2.bf16.msra.mxu0 0
        %2348 = vmatprep.subr.bf16.mxu0 0
        %2349 = vmatpush2.bf16.msra.mxu0 0
        %2350 = vmatprep.subr.bf16.mxu0 0
        %2351 = vmatpush2.bf16.msra.mxu0 0
        %2352 = vmatprep.mubr.bf16.mxu0 0
        %2353 = vmatmul.mubr.bf16.gmra.mxu0 %v2318
        %v2354 = vpop.f32.mrf.mxu0
        %v2355 = vadd.f32 %v2303, %v2354
        %v2356 = vpop.f32.mrf.mxu0
        %v2357 = vpop.f32.mrf.mxu0
        %v2358 = vpop.f32.mrf.mxu0
        %2359 = vdwg.mxu0
        %v2360 = vld [vmem:[#allocation25] sm:$0x1]
        %v2361 = vld [vmem:[#allocation26] sm:$0x1]
        %vm2362 = vcmask 523264
        %v2363 = vsel %vm2362, %v2355, 0.0
        %2364 = vadd.xlane.f32.xlu0 %v2363
        %v2365 = vpop.xlane.xlu0 %2364
        %v2366 = vrcp.pop 64.0
        %v2367 = vmul.f32 %v2365, %v2366
        %v2368 = vsub.f32 %v2355, %v2367
        %v2369 = vmul.f32 %v2368, %v2368
        %v2370 = vsel %vm2362, %v2369, 0.0
        %2371 = vadd.xlane.f32.xlu0 %v2370
        %v2372 = vpop.xlane.xlu0 %2371
        %v2373 = vmul.f32 %v2372, %v2366
        %v2374 = vadd.f32 %v2373, 1e-05
        %v2375 = vrsqrt.pop %v2374
        %v2376 = vmul.f32 %v2368, %v2375
        %v2378 = vlaneseq
        %v2379 = vshrl.u32 %v2378, 7
        %v2380 = vsub.s32 0, %v2379
        %v2381 = vrot.slane %v2360, %v2380
        %v2383 = vmul.f32 %v2376, %v2381
        %v2385 = vlaneseq
        %v2386 = vshrl.u32 %v2385, 7
        %v2387 = vsub.s32 0, %v2386
        %v2388 = vrot.slane %v2361, %v2387
        %v2390 = vadd.f32 %v2383, %v2388
        %v2391 = vmax.f32 %v2390, 0.0
        %v2392 = vpack.c.bf16 %v2391, %v2391
        %v2393 = vld [vmem:[%s17] sm:$0xf]
        %v2394 = vld [vmem:[%s17 + $0x4] sm:$0xf]
        %v2395 = vld [vmem:[%s17 + $0x8] sm:$0xf]
        %v2396 = vld [vmem:[%s17 + $0xc] sm:$0xf]
        %v2397 = vld [vmem:[%s17 + $0x10] sm:$0xf]
        %v2398 = vld [vmem:[%s17 + $0x14] sm:$0xf]
        %v2399 = vld [vmem:[%s17 + $0x18] sm:$0xf]
        %v2400 = vld [vmem:[%s17 + $0x1c] sm:$0xf]
        %v2401 = vld [vmem:[#allocation28] sm:$0x1]
        %v2403 = vlaneseq
        %v2404 = vshrl.u32 %v2403, 7
        %v2405 = vsub.s32 0, %v2404
        %v2406 = vrot.slane %v2401, %v2405
        %v2416 = vunpack.c.l.b16 %v2393
        %v2417 = vunpack.c.l.b16 %v2394
        %v2418 = vunpack.c.l.b16 %v2395
        %v2419 = vunpack.c.l.b16 %v2396
        %v2420 = vunpack.c.l.b16 %v2397
        %v2421 = vunpack.c.l.b16 %v2398
        %v2422 = vunpack.c.l.b16 %v2399
        %v2423 = vunpack.c.l.b16 %v2400
        %v2424 = vpack.c.b16 %v2417, %v2416
        %v2425 = vpack.c.b16 %v2419, %v2418
        %v2426 = vpack.c.b16 %v2421, %v2420
        %v2427 = vpack.c.b16 %v2423, %v2422
        %v2433 = vsel %vm2362, %v2392, 0
        %2435 = vmatprep.subr.bf16.mxu0 0
        %2436 = vmatpush1.bf16.msra.mxu0 0
        %2437 = vmatprep.subr.bf16.mxu0 0
        %2438 = vmatpush1.bf16.msra.mxu0 0
        %2439 = vmatprep.subr.bf16.mxu0 0
        %2440 = vmatpush1.bf16.msra.mxu0 0
        %2441 = vmatprep.subr.bf16.mxu0 0
        %2442 = vmatpush1.bf16.msra.mxu0 0
        %2443 = vmatprep.subr.bf16.mxu0 0
        %2444 = vmatpush1.bf16.msra.mxu0 %v2427
        %2445 = vmatprep.subr.bf16.mxu0 0
        %2446 = vmatpush1.bf16.msra.mxu0 %v2426
        %2447 = vmatprep.subr.bf16.mxu0 0
        %2448 = vmatpush1.bf16.msra.mxu0 %v2425
        %2449 = vmatprep.subr.bf16.mxu0 0
        %2450 = vmatpush1.bf16.msra.mxu0 %v2424
        %2451 = vmatprep.subr.bf16.mxu0 0
        %2452 = vmatpush2.bf16.msra.mxu0 0
        %2453 = vmatprep.subr.bf16.mxu0 0
        %2454 = vmatpush2.bf16.msra.mxu0 0
        %2455 = vmatprep.subr.bf16.mxu0 0
        %2456 = vmatpush2.bf16.msra.mxu0 0
        %2457 = vmatprep.subr.bf16.mxu0 0
        %2458 = vmatpush2.bf16.msra.mxu0 0
        %2459 = vmatprep.subr.bf16.mxu0 0
        %2460 = vmatpush2.bf16.msra.mxu0 0
        %2461 = vmatprep.subr.bf16.mxu0 0
        %2462 = vmatpush2.bf16.msra.mxu0 0
        %2463 = vmatprep.subr.bf16.mxu0 0
        %2464 = vmatpush2.bf16.msra.mxu0 0
        %2465 = vmatprep.subr.bf16.mxu0 0
        %2466 = vmatpush2.bf16.msra.mxu0 0
        %2467 = vmatprep.mubr.bf16.mxu0 0
        %2468 = vmatmul.mubr.bf16.gmra.mxu0 %v2433
        %v2469 = vpop.f32.mrf.mxu0
        %v2470 = vadd.f32 %v2406, %v2469
        %v2471 = vpop.f32.mrf.mxu0
        %v2472 = vpop.f32.mrf.mxu0
        %v2473 = vpop.f32.mrf.mxu0
        %2474 = vdwg.mxu0
        %v2475 = vld [vmem:[%s19] sm:$0x1]
        %v2476 = vld [vmem:[%s20] sm:$0x1]
        %v2477 = vsel %vm2362, %v2470, 0.0
        %2478 = vadd.xlane.f32.xlu0 %v2477
        %v2479 = vpop.xlane.xlu0 %2478
        %v2480 = vmul.f32 %v2479, %v2366
        %v2481 = vsub.f32 %v2470, %v2480
        %v2482 = vmul.f32 %v2481, %v2481
        %v2483 = vsel %vm2362, %v2482, 0.0
        %2484 = vadd.xlane.f32.xlu0 %v2483
        %v2485 = vpop.xlane.xlu0 %2484
        %v2486 = vmul.f32 %v2485, %v2366
        %v2487 = vadd.f32 %v2486, 1e-05
        %v2488 = vrsqrt.pop %v2487
        %v2489 = vmul.f32 %v2481, %v2488
        %v2491 = vlaneseq
        %v2492 = vshrl.u32 %v2491, 7
        %v2493 = vsub.s32 0, %v2492
        %v2494 = vrot.slane %v2475, %v2493
        %v2496 = vmul.f32 %v2489, %v2494
        %v2498 = vlaneseq
        %v2499 = vshrl.u32 %v2498, 7
        %v2500 = vsub.s32 0, %v2499
        %v2501 = vrot.slane %v2476, %v2500
        %v2503 = vadd.f32 %v2496, %v2501
        %v2504 = vmax.f32 %v2503, 0.0
        %v2505 = vpack.c.bf16 %v2504, %v2504
        %v2506 = vld [vmem:[%s21] sm:$0xf]
        %v2507 = vld [vmem:[%s21 + $0x4] sm:$0xf]
        %v2508 = vld [vmem:[%s21 + $0x8] sm:$0xf]
        %v2509 = vld [vmem:[%s21 + $0xc] sm:$0xf]
        %v2510 = vld [vmem:[%s21 + $0x10] sm:$0xf]
        %v2511 = vld [vmem:[%s21 + $0x14] sm:$0xf]
        %v2512 = vld [vmem:[%s21 + $0x18] sm:$0xf]
        %v2513 = vld [vmem:[%s21 + $0x1c] sm:$0xf]
        %v2514 = vld [vmem:[%s22] sm:$0x1]
        %v2516 = vlaneseq
        %v2517 = vshrl.u32 %v2516, 7
        %v2518 = vsub.s32 0, %v2517
        %v2519 = vrot.slane %v2514, %v2518
        %v2529 = vunpack.c.l.b16 %v2506
        %v2530 = vunpack.c.l.b16 %v2507
        %v2531 = vunpack.c.l.b16 %v2508
        %v2532 = vunpack.c.l.b16 %v2509
        %v2533 = vunpack.c.l.b16 %v2510
        %v2534 = vunpack.c.l.b16 %v2511
        %v2535 = vunpack.c.l.b16 %v2512
        %v2536 = vunpack.c.l.b16 %v2513
        %v2537 = vpack.c.b16 %v2530, %v2529
        %v2538 = vpack.c.b16 %v2532, %v2531
        %v2539 = vpack.c.b16 %v2534, %v2533
        %v2540 = vpack.c.b16 %v2536, %v2535
        %v2546 = vsel %vm2362, %v2505, 0
        %2548 = vmatprep.subr.bf16.mxu0 0
        %2549 = vmatpush1.bf16.msra.mxu0 0
        %2550 = vmatprep.subr.bf16.mxu0 0
        %2551 = vmatpush1.bf16.msra.mxu0 0
        %2552 = vmatprep.subr.bf16.mxu0 0
        %2553 = vmatpush1.bf16.msra.mxu0 0
        %2554 = vmatprep.subr.bf16.mxu0 0
        %2555 = vmatpush1.bf16.msra.mxu0 0
        %2556 = vmatprep.subr.bf16.mxu0 0
        %2557 = vmatpush1.bf16.msra.mxu0 %v2540
        %2558 = vmatprep.subr.bf16.mxu0 0
        %2559 = vmatpush1.bf16.msra.mxu0 %v2539
        %2560 = vmatprep.subr.bf16.mxu0 0
        %2561 = vmatpush1.bf16.msra.mxu0 %v2538
        %2562 = vmatprep.subr.bf16.mxu0 0
        %2563 = vmatpush1.bf16.msra.mxu0 %v2537
        %2564 = vmatprep.subr.bf16.mxu0 0
        %2565 = vmatpush2.bf16.msra.mxu0 0
        %2566 = vmatprep.subr.bf16.mxu0 0
        %2567 = vmatpush2.bf16.msra.mxu0 0
        %2568 = vmatprep.subr.bf16.mxu0 0
        %2569 = vmatpush2.bf16.msra.mxu0 0
        %2570 = vmatprep.subr.bf16.mxu0 0
        %2571 = vmatpush2.bf16.msra.mxu0 0
        %2572 = vmatprep.subr.bf16.mxu0 0
        %2573 = vmatpush2.bf16.msra.mxu0 0
        %2574 = vmatprep.subr.bf16.mxu0 0
        %2575 = vmatpush2.bf16.msra.mxu0 0
        %2576 = vmatprep.subr.bf16.mxu0 0
        %2577 = vmatpush2.bf16.msra.mxu0 0
        %2578 = vmatprep.subr.bf16.mxu0 0
        %2579 = vmatpush2.bf16.msra.mxu0 0
        %2580 = vmatprep.mubr.bf16.mxu0 0
        %2581 = vmatmul.mubr.bf16.gmra.mxu0 %v2546
        %v2582 = vpop.f32.mrf.mxu0
        %v2583 = vadd.f32 %v2519, %v2582
        %v2584 = vpop.f32.mrf.mxu0
        %v2585 = vpop.f32.mrf.mxu0
        %v2586 = vpop.f32.mrf.mxu0
        %2587 = vdwg.mxu0
        %v2588 = vadd.f32 %v2583, %v2292
        %v2589 = vld [vmem:[%s23] sm:$0x1]
        %v2590 = vld [vmem:[%s24] sm:$0x1]
        %v2591 = vsel %vm2246, %v2588, 0.0
        %2592 = vadd.xlane.f32.xlu0 %v2591
        %v2593 = vpop.xlane.xlu0 %2592
        %v2594 = vmul.f32 %v2593, %v2268
        %v2595 = vsub.f32 %v2588, %v2594
        %v2596 = vmul.f32 %v2595, %v2595
        %v2597 = vsel %vm2246, %v2596, 0.0
        %2598 = vadd.xlane.f32.xlu0 %v2597
        %v2599 = vpop.xlane.xlu0 %2598
        %v2600 = vmul.f32 %v2599, %v2268
        %v2601 = vadd.f32 %v2600, 1e-05
        %v2602 = vrsqrt.pop %v2601
        %v2603 = vmul.f32 %v2595, %v2602
        %v2605 = vlaneseq
        %v2606 = vshrl.u32 %v2605, 7
        %v2607 = vsub.s32 0, %v2606
        %v2608 = vrot.slane %v2589, %v2607
        %v2610 = vmul.f32 %v2603, %v2608
        %v2612 = vlaneseq
        %v2613 = vshrl.u32 %v2612, 7
        %v2614 = vsub.s32 0, %v2613
        %v2615 = vrot.slane %v2590, %v2614
        %v2617 = vadd.f32 %v2610, %v2615
        %2618 = vst.msk [vmem:[%s1031] sm:$0xff] %vm2246, %v2617
        %s2619 = sand.u32 %s600, 1
        %s2620 = scalar_lea.sflag [#allocation4], %s2619
        %s2621 = sand.u32 %s600, 1
        %s2622 = smul.addr %s2621, 8
        %s2623 = scalar_lea.vmem [#allocation29], %s2622
        // Predicated region
        $region189: #{tpu_custom_call.1} parent=119 // pred_check
          %p2624 = pneg %p610
        $region190: #{tpu_custom_call.1} parent=119 // pred_check_branch
          %2626 = sbr.rel (%p2624) target = $region192
        $region191: #{tpu_custom_call.1} parent=119 // pred_region
          %s2628 = ssub.s32 128, 128
          %2629 = vsyncadd %s2620, %s2628
          %s2630 = smul.addr %s52, 128
          %s2631 = scalar_lea.hbm %s25, %s2630
          %s2633 = sshll.u32 %s2623, 4
          %s2634 = int_to_ptr.vmem [resolvable:$true] %s2633
          %2636 = dma.vmem_to_hbm [thread:$0]  %s2634, 128, %s2631, %s2620
        $region192: #{tpu_custom_call.1} parent=119 // pred_fallthru
          _
      $region120: #{tpu_custom_call.1} parent=5 // pred_fallthru
        _
      %p2637 = scmp.le.s32.totalorder 2, %s47
      // Predicated region
      $region193: #{tpu_custom_call.1} parent=5 // pred_check
        %p2638 = pneg %p2637
      $region194: #{tpu_custom_call.1} parent=5 // pred_check_branch
        %2640 = sbr.rel (%p2638) target = $region196
      $region195: #{tpu_custom_call.1} parent=5 // pred_region
        %s2641 = ssub.s32 %s47, 2
        // Predicated region
        $region197: #{tpu_custom_call.1} parent=195 // pred_check
          %p2642 = pneg %p616
        $region198: #{tpu_custom_call.1} parent=195 // pred_check_branch
          %2644 = sbr.rel (%p2642) target = $region200
        $region199: #{tpu_custom_call.1} parent=195 // pred_region
          %s2645 = sand.u32 %s601, 1
          %s2646 = scalar_lea.sflag [#allocation4], %s2645
          %s2647 = sand.u32 %s601, 1
          %s2648 = smul.addr %s2647, 8
          %s2649 = scalar_lea.vmem [#allocation29], %s2648
          %2650 = dma.done %s2646, 128
        $region200: #{tpu_custom_call.1} parent=195 // pred_fallthru
          _
      $region196: #{tpu_custom_call.1} parent=5 // pred_fallthru
        _
    $region6: #{tpu_custom_call.1} parent=1 // loop_footer
      %s51 = sadd.s32 1, %s47
    $region7: #{tpu_custom_call.1} parent=1 // loop_footer_branch
      %46 = sbr.rel target = $region3
    $region8: #{tpu_custom_call.1} parent=1 // loop_exit
      _
    %2651 = vsyncpa [#allocation3], 1
    %s2652 = scalar_lea.sflag [#allocation3], 1
    %2653 = vsyncpa %s2652, 1
    %2654 = vsyncpa [#allocation6], 1
    %s2655 = scalar_lea.sflag [#allocation6], 1
    %2656 = vsyncpa %s2655, 1
    %2657 = vsyncpa [#allocation9], 1
    %2658 = vsyncpa [#allocation12], 1
    %2659 = vsyncpa [#allocation15], 1
    %2660 = vsyncpa [#allocation18], 1
    %2661 = vsyncpa [#allocation21], 1
    %2662 = vsyncpa [#allocation24], 1
    %2663 = vsyncpa [#allocation27], 1
    %2664 = vsyncpa [#allocation4], 1
    %s2665 = scalar_lea.sflag [#allocation4], 1
    %2666 = vsyncpa %s2665, 1

</llo_original>
